<compile_context>
chip_gen: v7x
topology: tpu7x:2x2x1
jax: 0.10.0
libtpu: 0.0.40
codegen_flags: <defaults>
</compile_context>

<pallas_src>
import jax
import jax.numpy as jnp
from jax.experimental import pallas as pl
from jax.experimental.pallas import tpu as pltpu

HIDDEN = 64   # hidden width of enc: Linear(1, 64)
LANES = 128   # TPU lane width; last dim of every block


def _mlp_kernel(x_ref, w1_ref, b1_ref, w2_ref, b2_ref, o_ref):
    # x tile: (tile_r, 128) f32, lane-dense.  Params are SMEM scalars.
    x = x_ref[...]
    acc = jnp.zeros_like(x) + b2_ref[0]          # start from output bias

    def body(j, acc):
        h = x * w1_ref[j] + b1_ref[j]            # VPU FMA, scalar from SMEM
        # ELU(alpha=1): h if h > 0 else exp(h) - 1.  min() keeps exp's arg
        # <= 0 (no transient inf); exp runs on the EUP slot.
        e = jnp.exp(jnp.minimum(h, 0.0)) - 1.0
        h = jnp.where(h > 0, h, e)
        return acc + w2_ref[j] * h

    acc = jax.lax.fori_loop(0, HIDDEN, body, acc, unroll=True)
    o_ref[...] = acc.astype(o_ref.dtype)


def example_network2(x, w1, b1, w2, b2, *, tile_r=64):
    """x: [N, 1] f32.  w1, b1, w2: [64] f32.  b2: [1] f32.  Returns [N, 1]."""
    n = x.shape[0]

    # Lane-dense view: flatten batch, pad, reshape to [rows_padded, 128].
    rows = -(-n // LANES)                        # ceil(n / 128)
    if rows <= tile_r:
        tile_r = rows                            # block == full sublane extent
    else:
        tile_r = max(8, (tile_r // 8) * 8)       # keep sublane (8) alignment
    rows_padded = -(-rows // tile_r) * tile_r
    n_padded = rows_padded * LANES

    x_flat = jnp.reshape(x, (-1,))
    if n_padded != n:
        x_flat = jnp.pad(x_flat, (0, n_padded - n))
    x2d = jnp.reshape(x_flat, (rows_padded, LANES))

    grid = (rows_padded // tile_r,)

    out2d = pl.pallas_call(
        _mlp_kernel,
        out_shape=jax.ShapeDtypeStruct((rows_padded, LANES), x.dtype),
        grid=grid,
        in_specs=[
            pl.BlockSpec((tile_r, LANES), lambda i: (i, 0)),    # x tile (VMEM)
            pl.BlockSpec(memory_space=pltpu.MemorySpace.SMEM),  # w1 (64,)
            pl.BlockSpec(memory_space=pltpu.MemorySpace.SMEM),  # b1 (64,)
            pl.BlockSpec(memory_space=pltpu.MemorySpace.SMEM),  # w2 (64,)
            pl.BlockSpec(memory_space=pltpu.MemorySpace.SMEM),  # b2 (1,)
        ],
        out_specs=pl.BlockSpec((tile_r, LANES), lambda i: (i, 0)),
        compiler_params=pltpu.CompilerParams(
            dimension_semantics=("parallel",),
        ),
    )(x2d, w1, b1, w2, b2)

    return jnp.reshape(out2d, (-1,))[:n].reshape(n, 1)


def init_params(key):
    """Deterministic init mirroring PyTorch nn.Linear defaults U(-1/sqrt(fan_in), +)."""
    k1, k2, k3, k4 = jax.random.split(key, 4)
    bound1 = 1.0                        # fan_in = 1  (enc Linear(1, 64))
    bound2 = 1.0 / jnp.sqrt(64.0)       # fan_in = 64 (reg Linear(64, 1))
    w1 = jax.random.uniform(k1, (HIDDEN,), jnp.float32, -bound1, bound1)
    b1 = jax.random.uniform(k2, (HIDDEN,), jnp.float32, -bound1, bound1)
    w2 = jax.random.uniform(k3, (HIDDEN,), jnp.float32, -bound2, bound2)
    b2 = jax.random.uniform(k4, (1,), jnp.float32, -bound2, bound2)
    return w1, b1, w2, b2


def reference(x, w1, b1, w2, b2):
    h = x * w1[None, :] + b1[None, :]            # (N, 64)
    h = jnp.where(h > 0, h, jnp.expm1(h))        # ELU(alpha=1)
    return h @ w2[:, None] + b2[None, :]         # (N, 1)


if __name__ == "__main__":
    key = jax.random.PRNGKey(0)
    kx, kp = jax.random.split(key)

    # Ragged on purpose (not a multiple of 128) to exercise the padded path;
    # tile_r=8 -> rows_padded=16, grid=(2,) so >=2 parallel steps (v7x 2 TCs).
    N = 2000
    x = jax.random.normal(kx, (N, 1), jnp.float32)
    w1, b1, w2, b2 = init_params(kp)

    y = example_network2(x, w1, b1, w2, b2, tile_r=8)
    y = jax.block_until_ready(y)

    y_ref = reference(x, w1, b1, w2, b2)
    assert y.shape == (N, 1)
    assert jnp.allclose(y, y_ref, atol=1e-5, rtol=1e-5), "mismatch vs reference"

    print("KERNEL_OK")
</pallas_src>

<mosaic_0001>
module attributes {stable_mosaic.version = 11 : i64} {
  func.func @_mlp_kernel(%arg0: i32, %arg1: memref<8x128xf32, #tpu.memory_space<vmem>>, %arg2: memref<64xf32, #tpu.memory_space<smem>>, %arg3: memref<64xf32, #tpu.memory_space<smem>>, %arg4: memref<64xf32, #tpu.memory_space<smem>>, %arg5: memref<1xf32, #tpu.memory_space<smem>>, %arg6: memref<8x128xf32, #tpu.memory_space<vmem>>) attributes {dimension_semantics = [#tpu.dimension_semantics<parallel>], iteration_bounds = array<i64: 2>, scalar_prefetch = 0 : i64, scratch_operands = 0 : i64, tpu.core_type = #tpu.core_type<tc>, window_params = [{transform_indices = @transform_0, window_bounds = array<i64: 8, 128>}, {transform_indices = @transform_1, window_bounds = array<i64: 64>}, {transform_indices = @transform_2, window_bounds = array<i64: 64>}, {transform_indices = @transform_3, window_bounds = array<i64: 64>}, {transform_indices = @transform_4, window_bounds = array<i64: 1>}, {transform_indices = @transform_5, window_bounds = array<i64: 8, 128>}]} {
    %c0 = arith.constant 0 : index
    %c0_0 = arith.constant 0 : index
    %0 = vector.load %arg1[%c0, %c0_0] : memref<8x128xf32, #tpu.memory_space<vmem>>, vector<8x128xf32>
    %cst = arith.constant 0.000000e+00 : f32
    %1 = vector.broadcast %cst : f32 to vector<8x128xf32>
    %c0_1 = arith.constant 0 : index
    %2 = memref.load %arg5[%c0_1] : memref<1xf32, #tpu.memory_space<smem>>
    %3 = vector.broadcast %2 : f32 to vector<8x128xf32>
    %4 = arith.addf %1, %3 : vector<8x128xf32>
    %c0_i32 = arith.constant 0 : i32
    %5 = arith.index_cast %c0_i32 : i32 to index
    %6 = memref.load %arg2[%5] : memref<64xf32, #tpu.memory_space<smem>>
    %7 = vector.broadcast %6 : f32 to vector<8x128xf32>
    %8 = arith.mulf %0, %7 : vector<8x128xf32>
    %9 = arith.index_cast %c0_i32 : i32 to index
    %10 = memref.load %arg3[%9] : memref<64xf32, #tpu.memory_space<smem>>
    %11 = vector.broadcast %10 : f32 to vector<8x128xf32>
    %12 = arith.addf %8, %11 : vector<8x128xf32>
    %cst_2 = arith.constant 0.000000e+00 : f32
    %13 = vector.broadcast %cst_2 : f32 to vector<8x128xf32>
    %14 = arith.minimumf %12, %13 : vector<8x128xf32>
    %15 = math.exp %14 : vector<8x128xf32>
    %cst_3 = arith.constant 1.000000e+00 : f32
    %16 = vector.broadcast %cst_3 : f32 to vector<8x128xf32>
    %17 = arith.subf %15, %16 : vector<8x128xf32>
    %cst_4 = arith.constant 0.000000e+00 : f32
    %18 = vector.broadcast %cst_4 : f32 to vector<8x128xf32>
    %19 = arith.cmpf ogt, %12, %18 : vector<8x128xf32>
    %20 = arith.select %19, %12, %17 : vector<8x128xi1>, vector<8x128xf32>
    %21 = arith.index_cast %c0_i32 : i32 to index
    %22 = memref.load %arg4[%21] : memref<64xf32, #tpu.memory_space<smem>>
    %23 = vector.broadcast %22 : f32 to vector<8x128xf32>
    %24 = arith.mulf %23, %20 : vector<8x128xf32>
    %25 = arith.addf %4, %24 : vector<8x128xf32>
    %c1_i32 = arith.constant 1 : i32
    %26 = arith.index_cast %c1_i32 : i32 to index
    %27 = memref.load %arg2[%26] : memref<64xf32, #tpu.memory_space<smem>>
    %28 = vector.broadcast %27 : f32 to vector<8x128xf32>
    %29 = arith.mulf %0, %28 : vector<8x128xf32>
    %30 = arith.index_cast %c1_i32 : i32 to index
    %31 = memref.load %arg3[%30] : memref<64xf32, #tpu.memory_space<smem>>
    %32 = vector.broadcast %31 : f32 to vector<8x128xf32>
    %33 = arith.addf %29, %32 : vector<8x128xf32>
    %cst_5 = arith.constant 0.000000e+00 : f32
    %34 = vector.broadcast %cst_5 : f32 to vector<8x128xf32>
    %35 = arith.minimumf %33, %34 : vector<8x128xf32>
    %36 = math.exp %35 : vector<8x128xf32>
    %cst_6 = arith.constant 1.000000e+00 : f32
    %37 = vector.broadcast %cst_6 : f32 to vector<8x128xf32>
    %38 = arith.subf %36, %37 : vector<8x128xf32>
    %cst_7 = arith.constant 0.000000e+00 : f32
    %39 = vector.broadcast %cst_7 : f32 to vector<8x128xf32>
    %40 = arith.cmpf ogt, %33, %39 : vector<8x128xf32>
    %41 = arith.select %40, %33, %38 : vector<8x128xi1>, vector<8x128xf32>
    %42 = arith.index_cast %c1_i32 : i32 to index
    %43 = memref.load %arg4[%42] : memref<64xf32, #tpu.memory_space<smem>>
    %44 = vector.broadcast %43 : f32 to vector<8x128xf32>
    %45 = arith.mulf %44, %41 : vector<8x128xf32>
    %46 = arith.addf %25, %45 : vector<8x128xf32>
    %c2_i32 = arith.constant 2 : i32
    %47 = arith.index_cast %c2_i32 : i32 to index
    %48 = memref.load %arg2[%47] : memref<64xf32, #tpu.memory_space<smem>>
    %49 = vector.broadcast %48 : f32 to vector<8x128xf32>
    %50 = arith.mulf %0, %49 : vector<8x128xf32>
    %51 = arith.index_cast %c2_i32 : i32 to index
    %52 = memref.load %arg3[%51] : memref<64xf32, #tpu.memory_space<smem>>
    %53 = vector.broadcast %52 : f32 to vector<8x128xf32>
    %54 = arith.addf %50, %53 : vector<8x128xf32>
    %cst_8 = arith.constant 0.000000e+00 : f32
    %55 = vector.broadcast %cst_8 : f32 to vector<8x128xf32>
    %56 = arith.minimumf %54, %55 : vector<8x128xf32>
    %57 = math.exp %56 : vector<8x128xf32>
    %cst_9 = arith.constant 1.000000e+00 : f32
    %58 = vector.broadcast %cst_9 : f32 to vector<8x128xf32>
    %59 = arith.subf %57, %58 : vector<8x128xf32>
    %cst_10 = arith.constant 0.000000e+00 : f32
    %60 = vector.broadcast %cst_10 : f32 to vector<8x128xf32>
    %61 = arith.cmpf ogt, %54, %60 : vector<8x128xf32>
    %62 = arith.select %61, %54, %59 : vector<8x128xi1>, vector<8x128xf32>
    %63 = arith.index_cast %c2_i32 : i32 to index
    %64 = memref.load %arg4[%63] : memref<64xf32, #tpu.memory_space<smem>>
    %65 = vector.broadcast %64 : f32 to vector<8x128xf32>
    %66 = arith.mulf %65, %62 : vector<8x128xf32>
    %67 = arith.addf %46, %66 : vector<8x128xf32>
    %c3_i32 = arith.constant 3 : i32
    %68 = arith.index_cast %c3_i32 : i32 to index
    %69 = memref.load %arg2[%68] : memref<64xf32, #tpu.memory_space<smem>>
    %70 = vector.broadcast %69 : f32 to vector<8x128xf32>
    %71 = arith.mulf %0, %70 : vector<8x128xf32>
    %72 = arith.index_cast %c3_i32 : i32 to index
    %73 = memref.load %arg3[%72] : memref<64xf32, #tpu.memory_space<smem>>
    %74 = vector.broadcast %73 : f32 to vector<8x128xf32>
    %75 = arith.addf %71, %74 : vector<8x128xf32>
    %cst_11 = arith.constant 0.000000e+00 : f32
    %76 = vector.broadcast %cst_11 : f32 to vector<8x128xf32>
    %77 = arith.minimumf %75, %76 : vector<8x128xf32>
    %78 = math.exp %77 : vector<8x128xf32>
    %cst_12 = arith.constant 1.000000e+00 : f32
    %79 = vector.broadcast %cst_12 : f32 to vector<8x128xf32>
    %80 = arith.subf %78, %79 : vector<8x128xf32>
    %cst_13 = arith.constant 0.000000e+00 : f32
    %81 = vector.broadcast %cst_13 : f32 to vector<8x128xf32>
    %82 = arith.cmpf ogt, %75, %81 : vector<8x128xf32>
    %83 = arith.select %82, %75, %80 : vector<8x128xi1>, vector<8x128xf32>
    %84 = arith.index_cast %c3_i32 : i32 to index
    %85 = memref.load %arg4[%84] : memref<64xf32, #tpu.memory_space<smem>>
    %86 = vector.broadcast %85 : f32 to vector<8x128xf32>
    %87 = arith.mulf %86, %83 : vector<8x128xf32>
    %88 = arith.addf %67, %87 : vector<8x128xf32>
    %c4_i32 = arith.constant 4 : i32
    %89 = arith.index_cast %c4_i32 : i32 to index
    %90 = memref.load %arg2[%89] : memref<64xf32, #tpu.memory_space<smem>>
    %91 = vector.broadcast %90 : f32 to vector<8x128xf32>
    %92 = arith.mulf %0, %91 : vector<8x128xf32>
    %93 = arith.index_cast %c4_i32 : i32 to index
    %94 = memref.load %arg3[%93] : memref<64xf32, #tpu.memory_space<smem>>
    %95 = vector.broadcast %94 : f32 to vector<8x128xf32>
    %96 = arith.addf %92, %95 : vector<8x128xf32>
    %cst_14 = arith.constant 0.000000e+00 : f32
    %97 = vector.broadcast %cst_14 : f32 to vector<8x128xf32>
    %98 = arith.minimumf %96, %97 : vector<8x128xf32>
    %99 = math.exp %98 : vector<8x128xf32>
    %cst_15 = arith.constant 1.000000e+00 : f32
    %100 = vector.broadcast %cst_15 : f32 to vector<8x128xf32>
    %101 = arith.subf %99, %100 : vector<8x128xf32>
    %cst_16 = arith.constant 0.000000e+00 : f32
    %102 = vector.broadcast %cst_16 : f32 to vector<8x128xf32>
    %103 = arith.cmpf ogt, %96, %102 : vector<8x128xf32>
    %104 = arith.select %103, %96, %101 : vector<8x128xi1>, vector<8x128xf32>
    %105 = arith.index_cast %c4_i32 : i32 to index
    %106 = memref.load %arg4[%105] : memref<64xf32, #tpu.memory_space<smem>>
    %107 = vector.broadcast %106 : f32 to vector<8x128xf32>
    %108 = arith.mulf %107, %104 : vector<8x128xf32>
    %109 = arith.addf %88, %108 : vector<8x128xf32>
    %c5_i32 = arith.constant 5 : i32
    %110 = arith.index_cast %c5_i32 : i32 to index
    %111 = memref.load %arg2[%110] : memref<64xf32, #tpu.memory_space<smem>>
    %112 = vector.broadcast %111 : f32 to vector<8x128xf32>
    %113 = arith.mulf %0, %112 : vector<8x128xf32>
    %114 = arith.index_cast %c5_i32 : i32 to index
    %115 = memref.load %arg3[%114] : memref<64xf32, #tpu.memory_space<smem>>
    %116 = vector.broadcast %115 : f32 to vector<8x128xf32>
    %117 = arith.addf %113, %116 : vector<8x128xf32>
    %cst_17 = arith.constant 0.000000e+00 : f32
    %118 = vector.broadcast %cst_17 : f32 to vector<8x128xf32>
    %119 = arith.minimumf %117, %118 : vector<8x128xf32>
    %120 = math.exp %119 : vector<8x128xf32>
    %cst_18 = arith.constant 1.000000e+00 : f32
    %121 = vector.broadcast %cst_18 : f32 to vector<8x128xf32>
    %122 = arith.subf %120, %121 : vector<8x128xf32>
    %cst_19 = arith.constant 0.000000e+00 : f32
    %123 = vector.broadcast %cst_19 : f32 to vector<8x128xf32>
    %124 = arith.cmpf ogt, %117, %123 : vector<8x128xf32>
    %125 = arith.select %124, %117, %122 : vector<8x128xi1>, vector<8x128xf32>
    %126 = arith.index_cast %c5_i32 : i32 to index
    %127 = memref.load %arg4[%126] : memref<64xf32, #tpu.memory_space<smem>>
    %128 = vector.broadcast %127 : f32 to vector<8x128xf32>
    %129 = arith.mulf %128, %125 : vector<8x128xf32>
    %130 = arith.addf %109, %129 : vector<8x128xf32>
    %c6_i32 = arith.constant 6 : i32
    %131 = arith.index_cast %c6_i32 : i32 to index
    %132 = memref.load %arg2[%131] : memref<64xf32, #tpu.memory_space<smem>>
    %133 = vector.broadcast %132 : f32 to vector<8x128xf32>
    %134 = arith.mulf %0, %133 : vector<8x128xf32>
    %135 = arith.index_cast %c6_i32 : i32 to index
    %136 = memref.load %arg3[%135] : memref<64xf32, #tpu.memory_space<smem>>
    %137 = vector.broadcast %136 : f32 to vector<8x128xf32>
    %138 = arith.addf %134, %137 : vector<8x128xf32>
    %cst_20 = arith.constant 0.000000e+00 : f32
    %139 = vector.broadcast %cst_20 : f32 to vector<8x128xf32>
    %140 = arith.minimumf %138, %139 : vector<8x128xf32>
    %141 = math.exp %140 : vector<8x128xf32>
    %cst_21 = arith.constant 1.000000e+00 : f32
    %142 = vector.broadcast %cst_21 : f32 to vector<8x128xf32>
    %143 = arith.subf %141, %142 : vector<8x128xf32>
    %cst_22 = arith.constant 0.000000e+00 : f32
    %144 = vector.broadcast %cst_22 : f32 to vector<8x128xf32>
    %145 = arith.cmpf ogt, %138, %144 : vector<8x128xf32>
    %146 = arith.select %145, %138, %143 : vector<8x128xi1>, vector<8x128xf32>
    %147 = arith.index_cast %c6_i32 : i32 to index
    %148 = memref.load %arg4[%147] : memref<64xf32, #tpu.memory_space<smem>>
    %149 = vector.broadcast %148 : f32 to vector<8x128xf32>
    %150 = arith.mulf %149, %146 : vector<8x128xf32>
    %151 = arith.addf %130, %150 : vector<8x128xf32>
    %c7_i32 = arith.constant 7 : i32
    %152 = arith.index_cast %c7_i32 : i32 to index
    %153 = memref.load %arg2[%152] : memref<64xf32, #tpu.memory_space<smem>>
    %154 = vector.broadcast %153 : f32 to vector<8x128xf32>
    %155 = arith.mulf %0, %154 : vector<8x128xf32>
    %156 = arith.index_cast %c7_i32 : i32 to index
    %157 = memref.load %arg3[%156] : memref<64xf32, #tpu.memory_space<smem>>
    %158 = vector.broadcast %157 : f32 to vector<8x128xf32>
    %159 = arith.addf %155, %158 : vector<8x128xf32>
    %cst_23 = arith.constant 0.000000e+00 : f32
    %160 = vector.broadcast %cst_23 : f32 to vector<8x128xf32>
    %161 = arith.minimumf %159, %160 : vector<8x128xf32>
    %162 = math.exp %161 : vector<8x128xf32>
    %cst_24 = arith.constant 1.000000e+00 : f32
    %163 = vector.broadcast %cst_24 : f32 to vector<8x128xf32>
    %164 = arith.subf %162, %163 : vector<8x128xf32>
    %cst_25 = arith.constant 0.000000e+00 : f32
    %165 = vector.broadcast %cst_25 : f32 to vector<8x128xf32>
    %166 = arith.cmpf ogt, %159, %165 : vector<8x128xf32>
    %167 = arith.select %166, %159, %164 : vector<8x128xi1>, vector<8x128xf32>
    %168 = arith.index_cast %c7_i32 : i32 to index
    %169 = memref.load %arg4[%168] : memref<64xf32, #tpu.memory_space<smem>>
    %170 = vector.broadcast %169 : f32 to vector<8x128xf32>
    %171 = arith.mulf %170, %167 : vector<8x128xf32>
    %172 = arith.addf %151, %171 : vector<8x128xf32>
    %c8_i32 = arith.constant 8 : i32
    %173 = arith.index_cast %c8_i32 : i32 to index
    %174 = memref.load %arg2[%173] : memref<64xf32, #tpu.memory_space<smem>>
    %175 = vector.broadcast %174 : f32 to vector<8x128xf32>
    %176 = arith.mulf %0, %175 : vector<8x128xf32>
    %177 = arith.index_cast %c8_i32 : i32 to index
    %178 = memref.load %arg3[%177] : memref<64xf32, #tpu.memory_space<smem>>
    %179 = vector.broadcast %178 : f32 to vector<8x128xf32>
    %180 = arith.addf %176, %179 : vector<8x128xf32>
    %cst_26 = arith.constant 0.000000e+00 : f32
    %181 = vector.broadcast %cst_26 : f32 to vector<8x128xf32>
    %182 = arith.minimumf %180, %181 : vector<8x128xf32>
    %183 = math.exp %182 : vector<8x128xf32>
    %cst_27 = arith.constant 1.000000e+00 : f32
    %184 = vector.broadcast %cst_27 : f32 to vector<8x128xf32>
    %185 = arith.subf %183, %184 : vector<8x128xf32>
    %cst_28 = arith.constant 0.000000e+00 : f32
    %186 = vector.broadcast %cst_28 : f32 to vector<8x128xf32>
    %187 = arith.cmpf ogt, %180, %186 : vector<8x128xf32>
    %188 = arith.select %187, %180, %185 : vector<8x128xi1>, vector<8x128xf32>
    %189 = arith.index_cast %c8_i32 : i32 to index
    %190 = memref.load %arg4[%189] : memref<64xf32, #tpu.memory_space<smem>>
    %191 = vector.broadcast %190 : f32 to vector<8x128xf32>
    %192 = arith.mulf %191, %188 : vector<8x128xf32>
    %193 = arith.addf %172, %192 : vector<8x128xf32>
    %c9_i32 = arith.constant 9 : i32
    %194 = arith.index_cast %c9_i32 : i32 to index
    %195 = memref.load %arg2[%194] : memref<64xf32, #tpu.memory_space<smem>>
    %196 = vector.broadcast %195 : f32 to vector<8x128xf32>
    %197 = arith.mulf %0, %196 : vector<8x128xf32>
    %198 = arith.index_cast %c9_i32 : i32 to index
    %199 = memref.load %arg3[%198] : memref<64xf32, #tpu.memory_space<smem>>
    %200 = vector.broadcast %199 : f32 to vector<8x128xf32>
    %201 = arith.addf %197, %200 : vector<8x128xf32>
    %cst_29 = arith.constant 0.000000e+00 : f32
    %202 = vector.broadcast %cst_29 : f32 to vector<8x128xf32>
    %203 = arith.minimumf %201, %202 : vector<8x128xf32>
    %204 = math.exp %203 : vector<8x128xf32>
    %cst_30 = arith.constant 1.000000e+00 : f32
    %205 = vector.broadcast %cst_30 : f32 to vector<8x128xf32>
    %206 = arith.subf %204, %205 : vector<8x128xf32>
    %cst_31 = arith.constant 0.000000e+00 : f32
    %207 = vector.broadcast %cst_31 : f32 to vector<8x128xf32>
    %208 = arith.cmpf ogt, %201, %207 : vector<8x128xf32>
    %209 = arith.select %208, %201, %206 : vector<8x128xi1>, vector<8x128xf32>
    %210 = arith.index_cast %c9_i32 : i32 to index
    %211 = memref.load %arg4[%210] : memref<64xf32, #tpu.memory_space<smem>>
    %212 = vector.broadcast %211 : f32 to vector<8x128xf32>
    %213 = arith.mulf %212, %209 : vector<8x128xf32>
    %214 = arith.addf %193, %213 : vector<8x128xf32>
    %c10_i32 = arith.constant 10 : i32
    %215 = arith.index_cast %c10_i32 : i32 to index
    %216 = memref.load %arg2[%215] : memref<64xf32, #tpu.memory_space<smem>>
    %217 = vector.broadcast %216 : f32 to vector<8x128xf32>
    %218 = arith.mulf %0, %217 : vector<8x128xf32>
    %219 = arith.index_cast %c10_i32 : i32 to index
    %220 = memref.load %arg3[%219] : memref<64xf32, #tpu.memory_space<smem>>
    %221 = vector.broadcast %220 : f32 to vector<8x128xf32>
    %222 = arith.addf %218, %221 : vector<8x128xf32>
    %cst_32 = arith.constant 0.000000e+00 : f32
    %223 = vector.broadcast %cst_32 : f32 to vector<8x128xf32>
    %224 = arith.minimumf %222, %223 : vector<8x128xf32>
    %225 = math.exp %224 : vector<8x128xf32>
    %cst_33 = arith.constant 1.000000e+00 : f32
    %226 = vector.broadcast %cst_33 : f32 to vector<8x128xf32>
    %227 = arith.subf %225, %226 : vector<8x128xf32>
    %cst_34 = arith.constant 0.000000e+00 : f32
    %228 = vector.broadcast %cst_34 : f32 to vector<8x128xf32>
    %229 = arith.cmpf ogt, %222, %228 : vector<8x128xf32>
    %230 = arith.select %229, %222, %227 : vector<8x128xi1>, vector<8x128xf32>
    %231 = arith.index_cast %c10_i32 : i32 to index
    %232 = memref.load %arg4[%231] : memref<64xf32, #tpu.memory_space<smem>>
    %233 = vector.broadcast %232 : f32 to vector<8x128xf32>
    %234 = arith.mulf %233, %230 : vector<8x128xf32>
    %235 = arith.addf %214, %234 : vector<8x128xf32>
    %c11_i32 = arith.constant 11 : i32
    %236 = arith.index_cast %c11_i32 : i32 to index
    %237 = memref.load %arg2[%236] : memref<64xf32, #tpu.memory_space<smem>>
    %238 = vector.broadcast %237 : f32 to vector<8x128xf32>
    %239 = arith.mulf %0, %238 : vector<8x128xf32>
    %240 = arith.index_cast %c11_i32 : i32 to index
    %241 = memref.load %arg3[%240] : memref<64xf32, #tpu.memory_space<smem>>
    %242 = vector.broadcast %241 : f32 to vector<8x128xf32>
    %243 = arith.addf %239, %242 : vector<8x128xf32>
    %cst_35 = arith.constant 0.000000e+00 : f32
    %244 = vector.broadcast %cst_35 : f32 to vector<8x128xf32>
    %245 = arith.minimumf %243, %244 : vector<8x128xf32>
    %246 = math.exp %245 : vector<8x128xf32>
    %cst_36 = arith.constant 1.000000e+00 : f32
    %247 = vector.broadcast %cst_36 : f32 to vector<8x128xf32>
    %248 = arith.subf %246, %247 : vector<8x128xf32>
    %cst_37 = arith.constant 0.000000e+00 : f32
    %249 = vector.broadcast %cst_37 : f32 to vector<8x128xf32>
    %250 = arith.cmpf ogt, %243, %249 : vector<8x128xf32>
    %251 = arith.select %250, %243, %248 : vector<8x128xi1>, vector<8x128xf32>
    %252 = arith.index_cast %c11_i32 : i32 to index
    %253 = memref.load %arg4[%252] : memref<64xf32, #tpu.memory_space<smem>>
    %254 = vector.broadcast %253 : f32 to vector<8x128xf32>
    %255 = arith.mulf %254, %251 : vector<8x128xf32>
    %256 = arith.addf %235, %255 : vector<8x128xf32>
    %c12_i32 = arith.constant 12 : i32
    %257 = arith.index_cast %c12_i32 : i32 to index
    %258 = memref.load %arg2[%257] : memref<64xf32, #tpu.memory_space<smem>>
    %259 = vector.broadcast %258 : f32 to vector<8x128xf32>
    %260 = arith.mulf %0, %259 : vector<8x128xf32>
    %261 = arith.index_cast %c12_i32 : i32 to index
    %262 = memref.load %arg3[%261] : memref<64xf32, #tpu.memory_space<smem>>
    %263 = vector.broadcast %262 : f32 to vector<8x128xf32>
    %264 = arith.addf %260, %263 : vector<8x128xf32>
    %cst_38 = arith.constant 0.000000e+00 : f32
    %265 = vector.broadcast %cst_38 : f32 to vector<8x128xf32>
    %266 = arith.minimumf %264, %265 : vector<8x128xf32>
    %267 = math.exp %266 : vector<8x128xf32>
    %cst_39 = arith.constant 1.000000e+00 : f32
    %268 = vector.broadcast %cst_39 : f32 to vector<8x128xf32>
    %269 = arith.subf %267, %268 : vector<8x128xf32>
    %cst_40 = arith.constant 0.000000e+00 : f32
    %270 = vector.broadcast %cst_40 : f32 to vector<8x128xf32>
    %271 = arith.cmpf ogt, %264, %270 : vector<8x128xf32>
    %272 = arith.select %271, %264, %269 : vector<8x128xi1>, vector<8x128xf32>
    %273 = arith.index_cast %c12_i32 : i32 to index
    %274 = memref.load %arg4[%273] : memref<64xf32, #tpu.memory_space<smem>>
    %275 = vector.broadcast %274 : f32 to vector<8x128xf32>
    %276 = arith.mulf %275, %272 : vector<8x128xf32>
    %277 = arith.addf %256, %276 : vector<8x128xf32>
    %c13_i32 = arith.constant 13 : i32
    %278 = arith.index_cast %c13_i32 : i32 to index
    %279 = memref.load %arg2[%278] : memref<64xf32, #tpu.memory_space<smem>>
    %280 = vector.broadcast %279 : f32 to vector<8x128xf32>
    %281 = arith.mulf %0, %280 : vector<8x128xf32>
    %282 = arith.index_cast %c13_i32 : i32 to index
    %283 = memref.load %arg3[%282] : memref<64xf32, #tpu.memory_space<smem>>
    %284 = vector.broadcast %283 : f32 to vector<8x128xf32>
    %285 = arith.addf %281, %284 : vector<8x128xf32>
    %cst_41 = arith.constant 0.000000e+00 : f32
    %286 = vector.broadcast %cst_41 : f32 to vector<8x128xf32>
    %287 = arith.minimumf %285, %286 : vector<8x128xf32>
    %288 = math.exp %287 : vector<8x128xf32>
    %cst_42 = arith.constant 1.000000e+00 : f32
    %289 = vector.broadcast %cst_42 : f32 to vector<8x128xf32>
    %290 = arith.subf %288, %289 : vector<8x128xf32>
    %cst_43 = arith.constant 0.000000e+00 : f32
    %291 = vector.broadcast %cst_43 : f32 to vector<8x128xf32>
    %292 = arith.cmpf ogt, %285, %291 : vector<8x128xf32>
    %293 = arith.select %292, %285, %290 : vector<8x128xi1>, vector<8x128xf32>
    %294 = arith.index_cast %c13_i32 : i32 to index
    %295 = memref.load %arg4[%294] : memref<64xf32, #tpu.memory_space<smem>>
    %296 = vector.broadcast %295 : f32 to vector<8x128xf32>
    %297 = arith.mulf %296, %293 : vector<8x128xf32>
    %298 = arith.addf %277, %297 : vector<8x128xf32>
    %c14_i32 = arith.constant 14 : i32
    %299 = arith.index_cast %c14_i32 : i32 to index
    %300 = memref.load %arg2[%299] : memref<64xf32, #tpu.memory_space<smem>>
    %301 = vector.broadcast %300 : f32 to vector<8x128xf32>
    %302 = arith.mulf %0, %301 : vector<8x128xf32>
    %303 = arith.index_cast %c14_i32 : i32 to index
    %304 = memref.load %arg3[%303] : memref<64xf32, #tpu.memory_space<smem>>
    %305 = vector.broadcast %304 : f32 to vector<8x128xf32>
    %306 = arith.addf %302, %305 : vector<8x128xf32>
    %cst_44 = arith.constant 0.000000e+00 : f32
    %307 = vector.broadcast %cst_44 : f32 to vector<8x128xf32>
    %308 = arith.minimumf %306, %307 : vector<8x128xf32>
    %309 = math.exp %308 : vector<8x128xf32>
    %cst_45 = arith.constant 1.000000e+00 : f32
    %310 = vector.broadcast %cst_45 : f32 to vector<8x128xf32>
    %311 = arith.subf %309, %310 : vector<8x128xf32>
    %cst_46 = arith.constant 0.000000e+00 : f32
    %312 = vector.broadcast %cst_46 : f32 to vector<8x128xf32>
    %313 = arith.cmpf ogt, %306, %312 : vector<8x128xf32>
    %314 = arith.select %313, %306, %311 : vector<8x128xi1>, vector<8x128xf32>
    %315 = arith.index_cast %c14_i32 : i32 to index
    %316 = memref.load %arg4[%315] : memref<64xf32, #tpu.memory_space<smem>>
    %317 = vector.broadcast %316 : f32 to vector<8x128xf32>
    %318 = arith.mulf %317, %314 : vector<8x128xf32>
    %319 = arith.addf %298, %318 : vector<8x128xf32>
    %c15_i32 = arith.constant 15 : i32
    %320 = arith.index_cast %c15_i32 : i32 to index
    %321 = memref.load %arg2[%320] : memref<64xf32, #tpu.memory_space<smem>>
    %322 = vector.broadcast %321 : f32 to vector<8x128xf32>
    %323 = arith.mulf %0, %322 : vector<8x128xf32>
    %324 = arith.index_cast %c15_i32 : i32 to index
    %325 = memref.load %arg3[%324] : memref<64xf32, #tpu.memory_space<smem>>
    %326 = vector.broadcast %325 : f32 to vector<8x128xf32>
    %327 = arith.addf %323, %326 : vector<8x128xf32>
    %cst_47 = arith.constant 0.000000e+00 : f32
    %328 = vector.broadcast %cst_47 : f32 to vector<8x128xf32>
    %329 = arith.minimumf %327, %328 : vector<8x128xf32>
    %330 = math.exp %329 : vector<8x128xf32>
    %cst_48 = arith.constant 1.000000e+00 : f32
    %331 = vector.broadcast %cst_48 : f32 to vector<8x128xf32>
    %332 = arith.subf %330, %331 : vector<8x128xf32>
    %cst_49 = arith.constant 0.000000e+00 : f32
    %333 = vector.broadcast %cst_49 : f32 to vector<8x128xf32>
    %334 = arith.cmpf ogt, %327, %333 : vector<8x128xf32>
    %335 = arith.select %334, %327, %332 : vector<8x128xi1>, vector<8x128xf32>
    %336 = arith.index_cast %c15_i32 : i32 to index
    %337 = memref.load %arg4[%336] : memref<64xf32, #tpu.memory_space<smem>>
    %338 = vector.broadcast %337 : f32 to vector<8x128xf32>
    %339 = arith.mulf %338, %335 : vector<8x128xf32>
    %340 = arith.addf %319, %339 : vector<8x128xf32>
    %c16_i32 = arith.constant 16 : i32
    %341 = arith.index_cast %c16_i32 : i32 to index
    %342 = memref.load %arg2[%341] : memref<64xf32, #tpu.memory_space<smem>>
    %343 = vector.broadcast %342 : f32 to vector<8x128xf32>
    %344 = arith.mulf %0, %343 : vector<8x128xf32>
    %345 = arith.index_cast %c16_i32 : i32 to index
    %346 = memref.load %arg3[%345] : memref<64xf32, #tpu.memory_space<smem>>
    %347 = vector.broadcast %346 : f32 to vector<8x128xf32>
    %348 = arith.addf %344, %347 : vector<8x128xf32>
    %cst_50 = arith.constant 0.000000e+00 : f32
    %349 = vector.broadcast %cst_50 : f32 to vector<8x128xf32>
    %350 = arith.minimumf %348, %349 : vector<8x128xf32>
    %351 = math.exp %350 : vector<8x128xf32>
    %cst_51 = arith.constant 1.000000e+00 : f32
    %352 = vector.broadcast %cst_51 : f32 to vector<8x128xf32>
    %353 = arith.subf %351, %352 : vector<8x128xf32>
    %cst_52 = arith.constant 0.000000e+00 : f32
    %354 = vector.broadcast %cst_52 : f32 to vector<8x128xf32>
    %355 = arith.cmpf ogt, %348, %354 : vector<8x128xf32>
    %356 = arith.select %355, %348, %353 : vector<8x128xi1>, vector<8x128xf32>
    %357 = arith.index_cast %c16_i32 : i32 to index
    %358 = memref.load %arg4[%357] : memref<64xf32, #tpu.memory_space<smem>>
    %359 = vector.broadcast %358 : f32 to vector<8x128xf32>
    %360 = arith.mulf %359, %356 : vector<8x128xf32>
    %361 = arith.addf %340, %360 : vector<8x128xf32>
    %c17_i32 = arith.constant 17 : i32
    %362 = arith.index_cast %c17_i32 : i32 to index
    %363 = memref.load %arg2[%362] : memref<64xf32, #tpu.memory_space<smem>>
    %364 = vector.broadcast %363 : f32 to vector<8x128xf32>
    %365 = arith.mulf %0, %364 : vector<8x128xf32>
    %366 = arith.index_cast %c17_i32 : i32 to index
    %367 = memref.load %arg3[%366] : memref<64xf32, #tpu.memory_space<smem>>
    %368 = vector.broadcast %367 : f32 to vector<8x128xf32>
    %369 = arith.addf %365, %368 : vector<8x128xf32>
    %cst_53 = arith.constant 0.000000e+00 : f32
    %370 = vector.broadcast %cst_53 : f32 to vector<8x128xf32>
    %371 = arith.minimumf %369, %370 : vector<8x128xf32>
    %372 = math.exp %371 : vector<8x128xf32>
    %cst_54 = arith.constant 1.000000e+00 : f32
    %373 = vector.broadcast %cst_54 : f32 to vector<8x128xf32>
    %374 = arith.subf %372, %373 : vector<8x128xf32>
    %cst_55 = arith.constant 0.000000e+00 : f32
    %375 = vector.broadcast %cst_55 : f32 to vector<8x128xf32>
    %376 = arith.cmpf ogt, %369, %375 : vector<8x128xf32>
    %377 = arith.select %376, %369, %374 : vector<8x128xi1>, vector<8x128xf32>
    %378 = arith.index_cast %c17_i32 : i32 to index
    %379 = memref.load %arg4[%378] : memref<64xf32, #tpu.memory_space<smem>>
    %380 = vector.broadcast %379 : f32 to vector<8x128xf32>
    %381 = arith.mulf %380, %377 : vector<8x128xf32>
    %382 = arith.addf %361, %381 : vector<8x128xf32>
    %c18_i32 = arith.constant 18 : i32
    %383 = arith.index_cast %c18_i32 : i32 to index
    %384 = memref.load %arg2[%383] : memref<64xf32, #tpu.memory_space<smem>>
    %385 = vector.broadcast %384 : f32 to vector<8x128xf32>
    %386 = arith.mulf %0, %385 : vector<8x128xf32>
    %387 = arith.index_cast %c18_i32 : i32 to index
    %388 = memref.load %arg3[%387] : memref<64xf32, #tpu.memory_space<smem>>
    %389 = vector.broadcast %388 : f32 to vector<8x128xf32>
    %390 = arith.addf %386, %389 : vector<8x128xf32>
    %cst_56 = arith.constant 0.000000e+00 : f32
    %391 = vector.broadcast %cst_56 : f32 to vector<8x128xf32>
    %392 = arith.minimumf %390, %391 : vector<8x128xf32>
    %393 = math.exp %392 : vector<8x128xf32>
    %cst_57 = arith.constant 1.000000e+00 : f32
    %394 = vector.broadcast %cst_57 : f32 to vector<8x128xf32>
    %395 = arith.subf %393, %394 : vector<8x128xf32>
    %cst_58 = arith.constant 0.000000e+00 : f32
    %396 = vector.broadcast %cst_58 : f32 to vector<8x128xf32>
    %397 = arith.cmpf ogt, %390, %396 : vector<8x128xf32>
    %398 = arith.select %397, %390, %395 : vector<8x128xi1>, vector<8x128xf32>
    %399 = arith.index_cast %c18_i32 : i32 to index
    %400 = memref.load %arg4[%399] : memref<64xf32, #tpu.memory_space<smem>>
    %401 = vector.broadcast %400 : f32 to vector<8x128xf32>
    %402 = arith.mulf %401, %398 : vector<8x128xf32>
    %403 = arith.addf %382, %402 : vector<8x128xf32>
    %c19_i32 = arith.constant 19 : i32
    %404 = arith.index_cast %c19_i32 : i32 to index
    %405 = memref.load %arg2[%404] : memref<64xf32, #tpu.memory_space<smem>>
    %406 = vector.broadcast %405 : f32 to vector<8x128xf32>
    %407 = arith.mulf %0, %406 : vector<8x128xf32>
    %408 = arith.index_cast %c19_i32 : i32 to index
    %409 = memref.load %arg3[%408] : memref<64xf32, #tpu.memory_space<smem>>
    %410 = vector.broadcast %409 : f32 to vector<8x128xf32>
    %411 = arith.addf %407, %410 : vector<8x128xf32>
    %cst_59 = arith.constant 0.000000e+00 : f32
    %412 = vector.broadcast %cst_59 : f32 to vector<8x128xf32>
    %413 = arith.minimumf %411, %412 : vector<8x128xf32>
    %414 = math.exp %413 : vector<8x128xf32>
    %cst_60 = arith.constant 1.000000e+00 : f32
    %415 = vector.broadcast %cst_60 : f32 to vector<8x128xf32>
    %416 = arith.subf %414, %415 : vector<8x128xf32>
    %cst_61 = arith.constant 0.000000e+00 : f32
    %417 = vector.broadcast %cst_61 : f32 to vector<8x128xf32>
    %418 = arith.cmpf ogt, %411, %417 : vector<8x128xf32>
    %419 = arith.select %418, %411, %416 : vector<8x128xi1>, vector<8x128xf32>
    %420 = arith.index_cast %c19_i32 : i32 to index
    %421 = memref.load %arg4[%420] : memref<64xf32, #tpu.memory_space<smem>>
    %422 = vector.broadcast %421 : f32 to vector<8x128xf32>
    %423 = arith.mulf %422, %419 : vector<8x128xf32>
    %424 = arith.addf %403, %423 : vector<8x128xf32>
    %c20_i32 = arith.constant 20 : i32
    %425 = arith.index_cast %c20_i32 : i32 to index
    %426 = memref.load %arg2[%425] : memref<64xf32, #tpu.memory_space<smem>>
    %427 = vector.broadcast %426 : f32 to vector<8x128xf32>
    %428 = arith.mulf %0, %427 : vector<8x128xf32>
    %429 = arith.index_cast %c20_i32 : i32 to index
    %430 = memref.load %arg3[%429] : memref<64xf32, #tpu.memory_space<smem>>
    %431 = vector.broadcast %430 : f32 to vector<8x128xf32>
    %432 = arith.addf %428, %431 : vector<8x128xf32>
    %cst_62 = arith.constant 0.000000e+00 : f32
    %433 = vector.broadcast %cst_62 : f32 to vector<8x128xf32>
    %434 = arith.minimumf %432, %433 : vector<8x128xf32>
    %435 = math.exp %434 : vector<8x128xf32>
    %cst_63 = arith.constant 1.000000e+00 : f32
    %436 = vector.broadcast %cst_63 : f32 to vector<8x128xf32>
    %437 = arith.subf %435, %436 : vector<8x128xf32>
    %cst_64 = arith.constant 0.000000e+00 : f32
    %438 = vector.broadcast %cst_64 : f32 to vector<8x128xf32>
    %439 = arith.cmpf ogt, %432, %438 : vector<8x128xf32>
    %440 = arith.select %439, %432, %437 : vector<8x128xi1>, vector<8x128xf32>
    %441 = arith.index_cast %c20_i32 : i32 to index
    %442 = memref.load %arg4[%441] : memref<64xf32, #tpu.memory_space<smem>>
    %443 = vector.broadcast %442 : f32 to vector<8x128xf32>
    %444 = arith.mulf %443, %440 : vector<8x128xf32>
    %445 = arith.addf %424, %444 : vector<8x128xf32>
    %c21_i32 = arith.constant 21 : i32
    %446 = arith.index_cast %c21_i32 : i32 to index
    %447 = memref.load %arg2[%446] : memref<64xf32, #tpu.memory_space<smem>>
    %448 = vector.broadcast %447 : f32 to vector<8x128xf32>
    %449 = arith.mulf %0, %448 : vector<8x128xf32>
    %450 = arith.index_cast %c21_i32 : i32 to index
    %451 = memref.load %arg3[%450] : memref<64xf32, #tpu.memory_space<smem>>
    %452 = vector.broadcast %451 : f32 to vector<8x128xf32>
    %453 = arith.addf %449, %452 : vector<8x128xf32>
    %cst_65 = arith.constant 0.000000e+00 : f32
    %454 = vector.broadcast %cst_65 : f32 to vector<8x128xf32>
    %455 = arith.minimumf %453, %454 : vector<8x128xf32>
    %456 = math.exp %455 : vector<8x128xf32>
    %cst_66 = arith.constant 1.000000e+00 : f32
    %457 = vector.broadcast %cst_66 : f32 to vector<8x128xf32>
    %458 = arith.subf %456, %457 : vector<8x128xf32>
    %cst_67 = arith.constant 0.000000e+00 : f32
    %459 = vector.broadcast %cst_67 : f32 to vector<8x128xf32>
    %460 = arith.cmpf ogt, %453, %459 : vector<8x128xf32>
    %461 = arith.select %460, %453, %458 : vector<8x128xi1>, vector<8x128xf32>
    %462 = arith.index_cast %c21_i32 : i32 to index
    %463 = memref.load %arg4[%462] : memref<64xf32, #tpu.memory_space<smem>>
    %464 = vector.broadcast %463 : f32 to vector<8x128xf32>
    %465 = arith.mulf %464, %461 : vector<8x128xf32>
    %466 = arith.addf %445, %465 : vector<8x128xf32>
    %c22_i32 = arith.constant 22 : i32
    %467 = arith.index_cast %c22_i32 : i32 to index
    %468 = memref.load %arg2[%467] : memref<64xf32, #tpu.memory_space<smem>>
    %469 = vector.broadcast %468 : f32 to vector<8x128xf32>
    %470 = arith.mulf %0, %469 : vector<8x128xf32>
    %471 = arith.index_cast %c22_i32 : i32 to index
    %472 = memref.load %arg3[%471] : memref<64xf32, #tpu.memory_space<smem>>
    %473 = vector.broadcast %472 : f32 to vector<8x128xf32>
    %474 = arith.addf %470, %473 : vector<8x128xf32>
    %cst_68 = arith.constant 0.000000e+00 : f32
    %475 = vector.broadcast %cst_68 : f32 to vector<8x128xf32>
    %476 = arith.minimumf %474, %475 : vector<8x128xf32>
    %477 = math.exp %476 : vector<8x128xf32>
    %cst_69 = arith.constant 1.000000e+00 : f32
    %478 = vector.broadcast %cst_69 : f32 to vector<8x128xf32>
    %479 = arith.subf %477, %478 : vector<8x128xf32>
    %cst_70 = arith.constant 0.000000e+00 : f32
    %480 = vector.broadcast %cst_70 : f32 to vector<8x128xf32>
    %481 = arith.cmpf ogt, %474, %480 : vector<8x128xf32>
    %482 = arith.select %481, %474, %479 : vector<8x128xi1>, vector<8x128xf32>
    %483 = arith.index_cast %c22_i32 : i32 to index
    %484 = memref.load %arg4[%483] : memref<64xf32, #tpu.memory_space<smem>>
    %485 = vector.broadcast %484 : f32 to vector<8x128xf32>
    %486 = arith.mulf %485, %482 : vector<8x128xf32>
    %487 = arith.addf %466, %486 : vector<8x128xf32>
    %c23_i32 = arith.constant 23 : i32
    %488 = arith.index_cast %c23_i32 : i32 to index
    %489 = memref.load %arg2[%488] : memref<64xf32, #tpu.memory_space<smem>>
    %490 = vector.broadcast %489 : f32 to vector<8x128xf32>
    %491 = arith.mulf %0, %490 : vector<8x128xf32>
    %492 = arith.index_cast %c23_i32 : i32 to index
    %493 = memref.load %arg3[%492] : memref<64xf32, #tpu.memory_space<smem>>
    %494 = vector.broadcast %493 : f32 to vector<8x128xf32>
    %495 = arith.addf %491, %494 : vector<8x128xf32>
    %cst_71 = arith.constant 0.000000e+00 : f32
    %496 = vector.broadcast %cst_71 : f32 to vector<8x128xf32>
    %497 = arith.minimumf %495, %496 : vector<8x128xf32>
    %498 = math.exp %497 : vector<8x128xf32>
    %cst_72 = arith.constant 1.000000e+00 : f32
    %499 = vector.broadcast %cst_72 : f32 to vector<8x128xf32>
    %500 = arith.subf %498, %499 : vector<8x128xf32>
    %cst_73 = arith.constant 0.000000e+00 : f32
    %501 = vector.broadcast %cst_73 : f32 to vector<8x128xf32>
    %502 = arith.cmpf ogt, %495, %501 : vector<8x128xf32>
    %503 = arith.select %502, %495, %500 : vector<8x128xi1>, vector<8x128xf32>
    %504 = arith.index_cast %c23_i32 : i32 to index
    %505 = memref.load %arg4[%504] : memref<64xf32, #tpu.memory_space<smem>>
    %506 = vector.broadcast %505 : f32 to vector<8x128xf32>
    %507 = arith.mulf %506, %503 : vector<8x128xf32>
    %508 = arith.addf %487, %507 : vector<8x128xf32>
    %c24_i32 = arith.constant 24 : i32
    %509 = arith.index_cast %c24_i32 : i32 to index
    %510 = memref.load %arg2[%509] : memref<64xf32, #tpu.memory_space<smem>>
    %511 = vector.broadcast %510 : f32 to vector<8x128xf32>
    %512 = arith.mulf %0, %511 : vector<8x128xf32>
    %513 = arith.index_cast %c24_i32 : i32 to index
    %514 = memref.load %arg3[%513] : memref<64xf32, #tpu.memory_space<smem>>
    %515 = vector.broadcast %514 : f32 to vector<8x128xf32>
    %516 = arith.addf %512, %515 : vector<8x128xf32>
    %cst_74 = arith.constant 0.000000e+00 : f32
    %517 = vector.broadcast %cst_74 : f32 to vector<8x128xf32>
    %518 = arith.minimumf %516, %517 : vector<8x128xf32>
    %519 = math.exp %518 : vector<8x128xf32>
    %cst_75 = arith.constant 1.000000e+00 : f32
    %520 = vector.broadcast %cst_75 : f32 to vector<8x128xf32>
    %521 = arith.subf %519, %520 : vector<8x128xf32>
    %cst_76 = arith.constant 0.000000e+00 : f32
    %522 = vector.broadcast %cst_76 : f32 to vector<8x128xf32>
    %523 = arith.cmpf ogt, %516, %522 : vector<8x128xf32>
    %524 = arith.select %523, %516, %521 : vector<8x128xi1>, vector<8x128xf32>
    %525 = arith.index_cast %c24_i32 : i32 to index
    %526 = memref.load %arg4[%525] : memref<64xf32, #tpu.memory_space<smem>>
    %527 = vector.broadcast %526 : f32 to vector<8x128xf32>
    %528 = arith.mulf %527, %524 : vector<8x128xf32>
    %529 = arith.addf %508, %528 : vector<8x128xf32>
    %c25_i32 = arith.constant 25 : i32
    %530 = arith.index_cast %c25_i32 : i32 to index
    %531 = memref.load %arg2[%530] : memref<64xf32, #tpu.memory_space<smem>>
    %532 = vector.broadcast %531 : f32 to vector<8x128xf32>
    %533 = arith.mulf %0, %532 : vector<8x128xf32>
    %534 = arith.index_cast %c25_i32 : i32 to index
    %535 = memref.load %arg3[%534] : memref<64xf32, #tpu.memory_space<smem>>
    %536 = vector.broadcast %535 : f32 to vector<8x128xf32>
    %537 = arith.addf %533, %536 : vector<8x128xf32>
    %cst_77 = arith.constant 0.000000e+00 : f32
    %538 = vector.broadcast %cst_77 : f32 to vector<8x128xf32>
    %539 = arith.minimumf %537, %538 : vector<8x128xf32>
    %540 = math.exp %539 : vector<8x128xf32>
    %cst_78 = arith.constant 1.000000e+00 : f32
    %541 = vector.broadcast %cst_78 : f32 to vector<8x128xf32>
    %542 = arith.subf %540, %541 : vector<8x128xf32>
    %cst_79 = arith.constant 0.000000e+00 : f32
    %543 = vector.broadcast %cst_79 : f32 to vector<8x128xf32>
    %544 = arith.cmpf ogt, %537, %543 : vector<8x128xf32>
    %545 = arith.select %544, %537, %542 : vector<8x128xi1>, vector<8x128xf32>
    %546 = arith.index_cast %c25_i32 : i32 to index
    %547 = memref.load %arg4[%546] : memref<64xf32, #tpu.memory_space<smem>>
    %548 = vector.broadcast %547 : f32 to vector<8x128xf32>
    %549 = arith.mulf %548, %545 : vector<8x128xf32>
    %550 = arith.addf %529, %549 : vector<8x128xf32>
    %c26_i32 = arith.constant 26 : i32
    %551 = arith.index_cast %c26_i32 : i32 to index
    %552 = memref.load %arg2[%551] : memref<64xf32, #tpu.memory_space<smem>>
    %553 = vector.broadcast %552 : f32 to vector<8x128xf32>
    %554 = arith.mulf %0, %553 : vector<8x128xf32>
    %555 = arith.index_cast %c26_i32 : i32 to index
    %556 = memref.load %arg3[%555] : memref<64xf32, #tpu.memory_space<smem>>
    %557 = vector.broadcast %556 : f32 to vector<8x128xf32>
    %558 = arith.addf %554, %557 : vector<8x128xf32>
    %cst_80 = arith.constant 0.000000e+00 : f32
    %559 = vector.broadcast %cst_80 : f32 to vector<8x128xf32>
    %560 = arith.minimumf %558, %559 : vector<8x128xf32>
    %561 = math.exp %560 : vector<8x128xf32>
    %cst_81 = arith.constant 1.000000e+00 : f32
    %562 = vector.broadcast %cst_81 : f32 to vector<8x128xf32>
    %563 = arith.subf %561, %562 : vector<8x128xf32>
    %cst_82 = arith.constant 0.000000e+00 : f32
    %564 = vector.broadcast %cst_82 : f32 to vector<8x128xf32>
    %565 = arith.cmpf ogt, %558, %564 : vector<8x128xf32>
    %566 = arith.select %565, %558, %563 : vector<8x128xi1>, vector<8x128xf32>
    %567 = arith.index_cast %c26_i32 : i32 to index
    %568 = memref.load %arg4[%567] : memref<64xf32, #tpu.memory_space<smem>>
    %569 = vector.broadcast %568 : f32 to vector<8x128xf32>
    %570 = arith.mulf %569, %566 : vector<8x128xf32>
    %571 = arith.addf %550, %570 : vector<8x128xf32>
    %c27_i32 = arith.constant 27 : i32
    %572 = arith.index_cast %c27_i32 : i32 to index
    %573 = memref.load %arg2[%572] : memref<64xf32, #tpu.memory_space<smem>>
    %574 = vector.broadcast %573 : f32 to vector<8x128xf32>
    %575 = arith.mulf %0, %574 : vector<8x128xf32>
    %576 = arith.index_cast %c27_i32 : i32 to index
    %577 = memref.load %arg3[%576] : memref<64xf32, #tpu.memory_space<smem>>
    %578 = vector.broadcast %577 : f32 to vector<8x128xf32>
    %579 = arith.addf %575, %578 : vector<8x128xf32>
    %cst_83 = arith.constant 0.000000e+00 : f32
    %580 = vector.broadcast %cst_83 : f32 to vector<8x128xf32>
    %581 = arith.minimumf %579, %580 : vector<8x128xf32>
    %582 = math.exp %581 : vector<8x128xf32>
    %cst_84 = arith.constant 1.000000e+00 : f32
    %583 = vector.broadcast %cst_84 : f32 to vector<8x128xf32>
    %584 = arith.subf %582, %583 : vector<8x128xf32>
    %cst_85 = arith.constant 0.000000e+00 : f32
    %585 = vector.broadcast %cst_85 : f32 to vector<8x128xf32>
    %586 = arith.cmpf ogt, %579, %585 : vector<8x128xf32>
    %587 = arith.select %586, %579, %584 : vector<8x128xi1>, vector<8x128xf32>
    %588 = arith.index_cast %c27_i32 : i32 to index
    %589 = memref.load %arg4[%588] : memref<64xf32, #tpu.memory_space<smem>>
    %590 = vector.broadcast %589 : f32 to vector<8x128xf32>
    %591 = arith.mulf %590, %587 : vector<8x128xf32>
    %592 = arith.addf %571, %591 : vector<8x128xf32>
    %c28_i32 = arith.constant 28 : i32
    %593 = arith.index_cast %c28_i32 : i32 to index
    %594 = memref.load %arg2[%593] : memref<64xf32, #tpu.memory_space<smem>>
    %595 = vector.broadcast %594 : f32 to vector<8x128xf32>
    %596 = arith.mulf %0, %595 : vector<8x128xf32>
    %597 = arith.index_cast %c28_i32 : i32 to index
    %598 = memref.load %arg3[%597] : memref<64xf32, #tpu.memory_space<smem>>
    %599 = vector.broadcast %598 : f32 to vector<8x128xf32>
    %600 = arith.addf %596, %599 : vector<8x128xf32>
    %cst_86 = arith.constant 0.000000e+00 : f32
    %601 = vector.broadcast %cst_86 : f32 to vector<8x128xf32>
    %602 = arith.minimumf %600, %601 : vector<8x128xf32>
    %603 = math.exp %602 : vector<8x128xf32>
    %cst_87 = arith.constant 1.000000e+00 : f32
    %604 = vector.broadcast %cst_87 : f32 to vector<8x128xf32>
    %605 = arith.subf %603, %604 : vector<8x128xf32>
    %cst_88 = arith.constant 0.000000e+00 : f32
    %606 = vector.broadcast %cst_88 : f32 to vector<8x128xf32>
    %607 = arith.cmpf ogt, %600, %606 : vector<8x128xf32>
    %608 = arith.select %607, %600, %605 : vector<8x128xi1>, vector<8x128xf32>
    %609 = arith.index_cast %c28_i32 : i32 to index
    %610 = memref.load %arg4[%609] : memref<64xf32, #tpu.memory_space<smem>>
    %611 = vector.broadcast %610 : f32 to vector<8x128xf32>
    %612 = arith.mulf %611, %608 : vector<8x128xf32>
    %613 = arith.addf %592, %612 : vector<8x128xf32>
    %c29_i32 = arith.constant 29 : i32
    %614 = arith.index_cast %c29_i32 : i32 to index
    %615 = memref.load %arg2[%614] : memref<64xf32, #tpu.memory_space<smem>>
    %616 = vector.broadcast %615 : f32 to vector<8x128xf32>
    %617 = arith.mulf %0, %616 : vector<8x128xf32>
    %618 = arith.index_cast %c29_i32 : i32 to index
    %619 = memref.load %arg3[%618] : memref<64xf32, #tpu.memory_space<smem>>
    %620 = vector.broadcast %619 : f32 to vector<8x128xf32>
    %621 = arith.addf %617, %620 : vector<8x128xf32>
    %cst_89 = arith.constant 0.000000e+00 : f32
    %622 = vector.broadcast %cst_89 : f32 to vector<8x128xf32>
    %623 = arith.minimumf %621, %622 : vector<8x128xf32>
    %624 = math.exp %623 : vector<8x128xf32>
    %cst_90 = arith.constant 1.000000e+00 : f32
    %625 = vector.broadcast %cst_90 : f32 to vector<8x128xf32>
    %626 = arith.subf %624, %625 : vector<8x128xf32>
    %cst_91 = arith.constant 0.000000e+00 : f32
    %627 = vector.broadcast %cst_91 : f32 to vector<8x128xf32>
    %628 = arith.cmpf ogt, %621, %627 : vector<8x128xf32>
    %629 = arith.select %628, %621, %626 : vector<8x128xi1>, vector<8x128xf32>
    %630 = arith.index_cast %c29_i32 : i32 to index
    %631 = memref.load %arg4[%630] : memref<64xf32, #tpu.memory_space<smem>>
    %632 = vector.broadcast %631 : f32 to vector<8x128xf32>
    %633 = arith.mulf %632, %629 : vector<8x128xf32>
    %634 = arith.addf %613, %633 : vector<8x128xf32>
    %c30_i32 = arith.constant 30 : i32
    %635 = arith.index_cast %c30_i32 : i32 to index
    %636 = memref.load %arg2[%635] : memref<64xf32, #tpu.memory_space<smem>>
    %637 = vector.broadcast %636 : f32 to vector<8x128xf32>
    %638 = arith.mulf %0, %637 : vector<8x128xf32>
    %639 = arith.index_cast %c30_i32 : i32 to index
    %640 = memref.load %arg3[%639] : memref<64xf32, #tpu.memory_space<smem>>
    %641 = vector.broadcast %640 : f32 to vector<8x128xf32>
    %642 = arith.addf %638, %641 : vector<8x128xf32>
    %cst_92 = arith.constant 0.000000e+00 : f32
    %643 = vector.broadcast %cst_92 : f32 to vector<8x128xf32>
    %644 = arith.minimumf %642, %643 : vector<8x128xf32>
    %645 = math.exp %644 : vector<8x128xf32>
    %cst_93 = arith.constant 1.000000e+00 : f32
    %646 = vector.broadcast %cst_93 : f32 to vector<8x128xf32>
    %647 = arith.subf %645, %646 : vector<8x128xf32>
    %cst_94 = arith.constant 0.000000e+00 : f32
    %648 = vector.broadcast %cst_94 : f32 to vector<8x128xf32>
    %649 = arith.cmpf ogt, %642, %648 : vector<8x128xf32>
    %650 = arith.select %649, %642, %647 : vector<8x128xi1>, vector<8x128xf32>
    %651 = arith.index_cast %c30_i32 : i32 to index
    %652 = memref.load %arg4[%651] : memref<64xf32, #tpu.memory_space<smem>>
    %653 = vector.broadcast %652 : f32 to vector<8x128xf32>
    %654 = arith.mulf %653, %650 : vector<8x128xf32>
    %655 = arith.addf %634, %654 : vector<8x128xf32>
    %c31_i32 = arith.constant 31 : i32
    %656 = arith.index_cast %c31_i32 : i32 to index
    %657 = memref.load %arg2[%656] : memref<64xf32, #tpu.memory_space<smem>>
    %658 = vector.broadcast %657 : f32 to vector<8x128xf32>
    %659 = arith.mulf %0, %658 : vector<8x128xf32>
    %660 = arith.index_cast %c31_i32 : i32 to index
    %661 = memref.load %arg3[%660] : memref<64xf32, #tpu.memory_space<smem>>
    %662 = vector.broadcast %661 : f32 to vector<8x128xf32>
    %663 = arith.addf %659, %662 : vector<8x128xf32>
    %cst_95 = arith.constant 0.000000e+00 : f32
    %664 = vector.broadcast %cst_95 : f32 to vector<8x128xf32>
    %665 = arith.minimumf %663, %664 : vector<8x128xf32>
    %666 = math.exp %665 : vector<8x128xf32>
    %cst_96 = arith.constant 1.000000e+00 : f32
    %667 = vector.broadcast %cst_96 : f32 to vector<8x128xf32>
    %668 = arith.subf %666, %667 : vector<8x128xf32>
    %cst_97 = arith.constant 0.000000e+00 : f32
    %669 = vector.broadcast %cst_97 : f32 to vector<8x128xf32>
    %670 = arith.cmpf ogt, %663, %669 : vector<8x128xf32>
    %671 = arith.select %670, %663, %668 : vector<8x128xi1>, vector<8x128xf32>
    %672 = arith.index_cast %c31_i32 : i32 to index
    %673 = memref.load %arg4[%672] : memref<64xf32, #tpu.memory_space<smem>>
    %674 = vector.broadcast %673 : f32 to vector<8x128xf32>
    %675 = arith.mulf %674, %671 : vector<8x128xf32>
    %676 = arith.addf %655, %675 : vector<8x128xf32>
    %c32_i32 = arith.constant 32 : i32
    %677 = arith.index_cast %c32_i32 : i32 to index
    %678 = memref.load %arg2[%677] : memref<64xf32, #tpu.memory_space<smem>>
    %679 = vector.broadcast %678 : f32 to vector<8x128xf32>
    %680 = arith.mulf %0, %679 : vector<8x128xf32>
    %681 = arith.index_cast %c32_i32 : i32 to index
    %682 = memref.load %arg3[%681] : memref<64xf32, #tpu.memory_space<smem>>
    %683 = vector.broadcast %682 : f32 to vector<8x128xf32>
    %684 = arith.addf %680, %683 : vector<8x128xf32>
    %cst_98 = arith.constant 0.000000e+00 : f32
    %685 = vector.broadcast %cst_98 : f32 to vector<8x128xf32>
    %686 = arith.minimumf %684, %685 : vector<8x128xf32>
    %687 = math.exp %686 : vector<8x128xf32>
    %cst_99 = arith.constant 1.000000e+00 : f32
    %688 = vector.broadcast %cst_99 : f32 to vector<8x128xf32>
    %689 = arith.subf %687, %688 : vector<8x128xf32>
    %cst_100 = arith.constant 0.000000e+00 : f32
    %690 = vector.broadcast %cst_100 : f32 to vector<8x128xf32>
    %691 = arith.cmpf ogt, %684, %690 : vector<8x128xf32>
    %692 = arith.select %691, %684, %689 : vector<8x128xi1>, vector<8x128xf32>
    %693 = arith.index_cast %c32_i32 : i32 to index
    %694 = memref.load %arg4[%693] : memref<64xf32, #tpu.memory_space<smem>>
    %695 = vector.broadcast %694 : f32 to vector<8x128xf32>
    %696 = arith.mulf %695, %692 : vector<8x128xf32>
    %697 = arith.addf %676, %696 : vector<8x128xf32>
    %c33_i32 = arith.constant 33 : i32
    %698 = arith.index_cast %c33_i32 : i32 to index
    %699 = memref.load %arg2[%698] : memref<64xf32, #tpu.memory_space<smem>>
    %700 = vector.broadcast %699 : f32 to vector<8x128xf32>
    %701 = arith.mulf %0, %700 : vector<8x128xf32>
    %702 = arith.index_cast %c33_i32 : i32 to index
    %703 = memref.load %arg3[%702] : memref<64xf32, #tpu.memory_space<smem>>
    %704 = vector.broadcast %703 : f32 to vector<8x128xf32>
    %705 = arith.addf %701, %704 : vector<8x128xf32>
    %cst_101 = arith.constant 0.000000e+00 : f32
    %706 = vector.broadcast %cst_101 : f32 to vector<8x128xf32>
    %707 = arith.minimumf %705, %706 : vector<8x128xf32>
    %708 = math.exp %707 : vector<8x128xf32>
    %cst_102 = arith.constant 1.000000e+00 : f32
    %709 = vector.broadcast %cst_102 : f32 to vector<8x128xf32>
    %710 = arith.subf %708, %709 : vector<8x128xf32>
    %cst_103 = arith.constant 0.000000e+00 : f32
    %711 = vector.broadcast %cst_103 : f32 to vector<8x128xf32>
    %712 = arith.cmpf ogt, %705, %711 : vector<8x128xf32>
    %713 = arith.select %712, %705, %710 : vector<8x128xi1>, vector<8x128xf32>
    %714 = arith.index_cast %c33_i32 : i32 to index
    %715 = memref.load %arg4[%714] : memref<64xf32, #tpu.memory_space<smem>>
    %716 = vector.broadcast %715 : f32 to vector<8x128xf32>
    %717 = arith.mulf %716, %713 : vector<8x128xf32>
    %718 = arith.addf %697, %717 : vector<8x128xf32>
    %c34_i32 = arith.constant 34 : i32
    %719 = arith.index_cast %c34_i32 : i32 to index
    %720 = memref.load %arg2[%719] : memref<64xf32, #tpu.memory_space<smem>>
    %721 = vector.broadcast %720 : f32 to vector<8x128xf32>
    %722 = arith.mulf %0, %721 : vector<8x128xf32>
    %723 = arith.index_cast %c34_i32 : i32 to index
    %724 = memref.load %arg3[%723] : memref<64xf32, #tpu.memory_space<smem>>
    %725 = vector.broadcast %724 : f32 to vector<8x128xf32>
    %726 = arith.addf %722, %725 : vector<8x128xf32>
    %cst_104 = arith.constant 0.000000e+00 : f32
    %727 = vector.broadcast %cst_104 : f32 to vector<8x128xf32>
    %728 = arith.minimumf %726, %727 : vector<8x128xf32>
    %729 = math.exp %728 : vector<8x128xf32>
    %cst_105 = arith.constant 1.000000e+00 : f32
    %730 = vector.broadcast %cst_105 : f32 to vector<8x128xf32>
    %731 = arith.subf %729, %730 : vector<8x128xf32>
    %cst_106 = arith.constant 0.000000e+00 : f32
    %732 = vector.broadcast %cst_106 : f32 to vector<8x128xf32>
    %733 = arith.cmpf ogt, %726, %732 : vector<8x128xf32>
    %734 = arith.select %733, %726, %731 : vector<8x128xi1>, vector<8x128xf32>
    %735 = arith.index_cast %c34_i32 : i32 to index
    %736 = memref.load %arg4[%735] : memref<64xf32, #tpu.memory_space<smem>>
    %737 = vector.broadcast %736 : f32 to vector<8x128xf32>
    %738 = arith.mulf %737, %734 : vector<8x128xf32>
    %739 = arith.addf %718, %738 : vector<8x128xf32>
    %c35_i32 = arith.constant 35 : i32
    %740 = arith.index_cast %c35_i32 : i32 to index
    %741 = memref.load %arg2[%740] : memref<64xf32, #tpu.memory_space<smem>>
    %742 = vector.broadcast %741 : f32 to vector<8x128xf32>
    %743 = arith.mulf %0, %742 : vector<8x128xf32>
    %744 = arith.index_cast %c35_i32 : i32 to index
    %745 = memref.load %arg3[%744] : memref<64xf32, #tpu.memory_space<smem>>
    %746 = vector.broadcast %745 : f32 to vector<8x128xf32>
    %747 = arith.addf %743, %746 : vector<8x128xf32>
    %cst_107 = arith.constant 0.000000e+00 : f32
    %748 = vector.broadcast %cst_107 : f32 to vector<8x128xf32>
    %749 = arith.minimumf %747, %748 : vector<8x128xf32>
    %750 = math.exp %749 : vector<8x128xf32>
    %cst_108 = arith.constant 1.000000e+00 : f32
    %751 = vector.broadcast %cst_108 : f32 to vector<8x128xf32>
    %752 = arith.subf %750, %751 : vector<8x128xf32>
    %cst_109 = arith.constant 0.000000e+00 : f32
    %753 = vector.broadcast %cst_109 : f32 to vector<8x128xf32>
    %754 = arith.cmpf ogt, %747, %753 : vector<8x128xf32>
    %755 = arith.select %754, %747, %752 : vector<8x128xi1>, vector<8x128xf32>
    %756 = arith.index_cast %c35_i32 : i32 to index
    %757 = memref.load %arg4[%756] : memref<64xf32, #tpu.memory_space<smem>>
    %758 = vector.broadcast %757 : f32 to vector<8x128xf32>
    %759 = arith.mulf %758, %755 : vector<8x128xf32>
    %760 = arith.addf %739, %759 : vector<8x128xf32>
    %c36_i32 = arith.constant 36 : i32
    %761 = arith.index_cast %c36_i32 : i32 to index
    %762 = memref.load %arg2[%761] : memref<64xf32, #tpu.memory_space<smem>>
    %763 = vector.broadcast %762 : f32 to vector<8x128xf32>
    %764 = arith.mulf %0, %763 : vector<8x128xf32>
    %765 = arith.index_cast %c36_i32 : i32 to index
    %766 = memref.load %arg3[%765] : memref<64xf32, #tpu.memory_space<smem>>
    %767 = vector.broadcast %766 : f32 to vector<8x128xf32>
    %768 = arith.addf %764, %767 : vector<8x128xf32>
    %cst_110 = arith.constant 0.000000e+00 : f32
    %769 = vector.broadcast %cst_110 : f32 to vector<8x128xf32>
    %770 = arith.minimumf %768, %769 : vector<8x128xf32>
    %771 = math.exp %770 : vector<8x128xf32>
    %cst_111 = arith.constant 1.000000e+00 : f32
    %772 = vector.broadcast %cst_111 : f32 to vector<8x128xf32>
    %773 = arith.subf %771, %772 : vector<8x128xf32>
    %cst_112 = arith.constant 0.000000e+00 : f32
    %774 = vector.broadcast %cst_112 : f32 to vector<8x128xf32>
    %775 = arith.cmpf ogt, %768, %774 : vector<8x128xf32>
    %776 = arith.select %775, %768, %773 : vector<8x128xi1>, vector<8x128xf32>
    %777 = arith.index_cast %c36_i32 : i32 to index
    %778 = memref.load %arg4[%777] : memref<64xf32, #tpu.memory_space<smem>>
    %779 = vector.broadcast %778 : f32 to vector<8x128xf32>
    %780 = arith.mulf %779, %776 : vector<8x128xf32>
    %781 = arith.addf %760, %780 : vector<8x128xf32>
    %c37_i32 = arith.constant 37 : i32
    %782 = arith.index_cast %c37_i32 : i32 to index
    %783 = memref.load %arg2[%782] : memref<64xf32, #tpu.memory_space<smem>>
    %784 = vector.broadcast %783 : f32 to vector<8x128xf32>
    %785 = arith.mulf %0, %784 : vector<8x128xf32>
    %786 = arith.index_cast %c37_i32 : i32 to index
    %787 = memref.load %arg3[%786] : memref<64xf32, #tpu.memory_space<smem>>
    %788 = vector.broadcast %787 : f32 to vector<8x128xf32>
    %789 = arith.addf %785, %788 : vector<8x128xf32>
    %cst_113 = arith.constant 0.000000e+00 : f32
    %790 = vector.broadcast %cst_113 : f32 to vector<8x128xf32>
    %791 = arith.minimumf %789, %790 : vector<8x128xf32>
    %792 = math.exp %791 : vector<8x128xf32>
    %cst_114 = arith.constant 1.000000e+00 : f32
    %793 = vector.broadcast %cst_114 : f32 to vector<8x128xf32>
    %794 = arith.subf %792, %793 : vector<8x128xf32>
    %cst_115 = arith.constant 0.000000e+00 : f32
    %795 = vector.broadcast %cst_115 : f32 to vector<8x128xf32>
    %796 = arith.cmpf ogt, %789, %795 : vector<8x128xf32>
    %797 = arith.select %796, %789, %794 : vector<8x128xi1>, vector<8x128xf32>
    %798 = arith.index_cast %c37_i32 : i32 to index
    %799 = memref.load %arg4[%798] : memref<64xf32, #tpu.memory_space<smem>>
    %800 = vector.broadcast %799 : f32 to vector<8x128xf32>
    %801 = arith.mulf %800, %797 : vector<8x128xf32>
    %802 = arith.addf %781, %801 : vector<8x128xf32>
    %c38_i32 = arith.constant 38 : i32
    %803 = arith.index_cast %c38_i32 : i32 to index
    %804 = memref.load %arg2[%803] : memref<64xf32, #tpu.memory_space<smem>>
    %805 = vector.broadcast %804 : f32 to vector<8x128xf32>
    %806 = arith.mulf %0, %805 : vector<8x128xf32>
    %807 = arith.index_cast %c38_i32 : i32 to index
    %808 = memref.load %arg3[%807] : memref<64xf32, #tpu.memory_space<smem>>
    %809 = vector.broadcast %808 : f32 to vector<8x128xf32>
    %810 = arith.addf %806, %809 : vector<8x128xf32>
    %cst_116 = arith.constant 0.000000e+00 : f32
    %811 = vector.broadcast %cst_116 : f32 to vector<8x128xf32>
    %812 = arith.minimumf %810, %811 : vector<8x128xf32>
    %813 = math.exp %812 : vector<8x128xf32>
    %cst_117 = arith.constant 1.000000e+00 : f32
    %814 = vector.broadcast %cst_117 : f32 to vector<8x128xf32>
    %815 = arith.subf %813, %814 : vector<8x128xf32>
    %cst_118 = arith.constant 0.000000e+00 : f32
    %816 = vector.broadcast %cst_118 : f32 to vector<8x128xf32>
    %817 = arith.cmpf ogt, %810, %816 : vector<8x128xf32>
    %818 = arith.select %817, %810, %815 : vector<8x128xi1>, vector<8x128xf32>
    %819 = arith.index_cast %c38_i32 : i32 to index
    %820 = memref.load %arg4[%819] : memref<64xf32, #tpu.memory_space<smem>>
    %821 = vector.broadcast %820 : f32 to vector<8x128xf32>
    %822 = arith.mulf %821, %818 : vector<8x128xf32>
    %823 = arith.addf %802, %822 : vector<8x128xf32>
    %c39_i32 = arith.constant 39 : i32
    %824 = arith.index_cast %c39_i32 : i32 to index
    %825 = memref.load %arg2[%824] : memref<64xf32, #tpu.memory_space<smem>>
    %826 = vector.broadcast %825 : f32 to vector<8x128xf32>
    %827 = arith.mulf %0, %826 : vector<8x128xf32>
    %828 = arith.index_cast %c39_i32 : i32 to index
    %829 = memref.load %arg3[%828] : memref<64xf32, #tpu.memory_space<smem>>
    %830 = vector.broadcast %829 : f32 to vector<8x128xf32>
    %831 = arith.addf %827, %830 : vector<8x128xf32>
    %cst_119 = arith.constant 0.000000e+00 : f32
    %832 = vector.broadcast %cst_119 : f32 to vector<8x128xf32>
    %833 = arith.minimumf %831, %832 : vector<8x128xf32>
    %834 = math.exp %833 : vector<8x128xf32>
    %cst_120 = arith.constant 1.000000e+00 : f32
    %835 = vector.broadcast %cst_120 : f32 to vector<8x128xf32>
    %836 = arith.subf %834, %835 : vector<8x128xf32>
    %cst_121 = arith.constant 0.000000e+00 : f32
    %837 = vector.broadcast %cst_121 : f32 to vector<8x128xf32>
    %838 = arith.cmpf ogt, %831, %837 : vector<8x128xf32>
    %839 = arith.select %838, %831, %836 : vector<8x128xi1>, vector<8x128xf32>
    %840 = arith.index_cast %c39_i32 : i32 to index
    %841 = memref.load %arg4[%840] : memref<64xf32, #tpu.memory_space<smem>>
    %842 = vector.broadcast %841 : f32 to vector<8x128xf32>
    %843 = arith.mulf %842, %839 : vector<8x128xf32>
    %844 = arith.addf %823, %843 : vector<8x128xf32>
    %c40_i32 = arith.constant 40 : i32
    %845 = arith.index_cast %c40_i32 : i32 to index
    %846 = memref.load %arg2[%845] : memref<64xf32, #tpu.memory_space<smem>>
    %847 = vector.broadcast %846 : f32 to vector<8x128xf32>
    %848 = arith.mulf %0, %847 : vector<8x128xf32>
    %849 = arith.index_cast %c40_i32 : i32 to index
    %850 = memref.load %arg3[%849] : memref<64xf32, #tpu.memory_space<smem>>
    %851 = vector.broadcast %850 : f32 to vector<8x128xf32>
    %852 = arith.addf %848, %851 : vector<8x128xf32>
    %cst_122 = arith.constant 0.000000e+00 : f32
    %853 = vector.broadcast %cst_122 : f32 to vector<8x128xf32>
    %854 = arith.minimumf %852, %853 : vector<8x128xf32>
    %855 = math.exp %854 : vector<8x128xf32>
    %cst_123 = arith.constant 1.000000e+00 : f32
    %856 = vector.broadcast %cst_123 : f32 to vector<8x128xf32>
    %857 = arith.subf %855, %856 : vector<8x128xf32>
    %cst_124 = arith.constant 0.000000e+00 : f32
    %858 = vector.broadcast %cst_124 : f32 to vector<8x128xf32>
    %859 = arith.cmpf ogt, %852, %858 : vector<8x128xf32>
    %860 = arith.select %859, %852, %857 : vector<8x128xi1>, vector<8x128xf32>
    %861 = arith.index_cast %c40_i32 : i32 to index
    %862 = memref.load %arg4[%861] : memref<64xf32, #tpu.memory_space<smem>>
    %863 = vector.broadcast %862 : f32 to vector<8x128xf32>
    %864 = arith.mulf %863, %860 : vector<8x128xf32>
    %865 = arith.addf %844, %864 : vector<8x128xf32>
    %c41_i32 = arith.constant 41 : i32
    %866 = arith.index_cast %c41_i32 : i32 to index
    %867 = memref.load %arg2[%866] : memref<64xf32, #tpu.memory_space<smem>>
    %868 = vector.broadcast %867 : f32 to vector<8x128xf32>
    %869 = arith.mulf %0, %868 : vector<8x128xf32>
    %870 = arith.index_cast %c41_i32 : i32 to index
    %871 = memref.load %arg3[%870] : memref<64xf32, #tpu.memory_space<smem>>
    %872 = vector.broadcast %871 : f32 to vector<8x128xf32>
    %873 = arith.addf %869, %872 : vector<8x128xf32>
    %cst_125 = arith.constant 0.000000e+00 : f32
    %874 = vector.broadcast %cst_125 : f32 to vector<8x128xf32>
    %875 = arith.minimumf %873, %874 : vector<8x128xf32>
    %876 = math.exp %875 : vector<8x128xf32>
    %cst_126 = arith.constant 1.000000e+00 : f32
    %877 = vector.broadcast %cst_126 : f32 to vector<8x128xf32>
    %878 = arith.subf %876, %877 : vector<8x128xf32>
    %cst_127 = arith.constant 0.000000e+00 : f32
    %879 = vector.broadcast %cst_127 : f32 to vector<8x128xf32>
    %880 = arith.cmpf ogt, %873, %879 : vector<8x128xf32>
    %881 = arith.select %880, %873, %878 : vector<8x128xi1>, vector<8x128xf32>
    %882 = arith.index_cast %c41_i32 : i32 to index
    %883 = memref.load %arg4[%882] : memref<64xf32, #tpu.memory_space<smem>>
    %884 = vector.broadcast %883 : f32 to vector<8x128xf32>
    %885 = arith.mulf %884, %881 : vector<8x128xf32>
    %886 = arith.addf %865, %885 : vector<8x128xf32>
    %c42_i32 = arith.constant 42 : i32
    %887 = arith.index_cast %c42_i32 : i32 to index
    %888 = memref.load %arg2[%887] : memref<64xf32, #tpu.memory_space<smem>>
    %889 = vector.broadcast %888 : f32 to vector<8x128xf32>
    %890 = arith.mulf %0, %889 : vector<8x128xf32>
    %891 = arith.index_cast %c42_i32 : i32 to index
    %892 = memref.load %arg3[%891] : memref<64xf32, #tpu.memory_space<smem>>
    %893 = vector.broadcast %892 : f32 to vector<8x128xf32>
    %894 = arith.addf %890, %893 : vector<8x128xf32>
    %cst_128 = arith.constant 0.000000e+00 : f32
    %895 = vector.broadcast %cst_128 : f32 to vector<8x128xf32>
    %896 = arith.minimumf %894, %895 : vector<8x128xf32>
    %897 = math.exp %896 : vector<8x128xf32>
    %cst_129 = arith.constant 1.000000e+00 : f32
    %898 = vector.broadcast %cst_129 : f32 to vector<8x128xf32>
    %899 = arith.subf %897, %898 : vector<8x128xf32>
    %cst_130 = arith.constant 0.000000e+00 : f32
    %900 = vector.broadcast %cst_130 : f32 to vector<8x128xf32>
    %901 = arith.cmpf ogt, %894, %900 : vector<8x128xf32>
    %902 = arith.select %901, %894, %899 : vector<8x128xi1>, vector<8x128xf32>
    %903 = arith.index_cast %c42_i32 : i32 to index
    %904 = memref.load %arg4[%903] : memref<64xf32, #tpu.memory_space<smem>>
    %905 = vector.broadcast %904 : f32 to vector<8x128xf32>
    %906 = arith.mulf %905, %902 : vector<8x128xf32>
    %907 = arith.addf %886, %906 : vector<8x128xf32>
    %c43_i32 = arith.constant 43 : i32
    %908 = arith.index_cast %c43_i32 : i32 to index
    %909 = memref.load %arg2[%908] : memref<64xf32, #tpu.memory_space<smem>>
    %910 = vector.broadcast %909 : f32 to vector<8x128xf32>
    %911 = arith.mulf %0, %910 : vector<8x128xf32>
    %912 = arith.index_cast %c43_i32 : i32 to index
    %913 = memref.load %arg3[%912] : memref<64xf32, #tpu.memory_space<smem>>
    %914 = vector.broadcast %913 : f32 to vector<8x128xf32>
    %915 = arith.addf %911, %914 : vector<8x128xf32>
    %cst_131 = arith.constant 0.000000e+00 : f32
    %916 = vector.broadcast %cst_131 : f32 to vector<8x128xf32>
    %917 = arith.minimumf %915, %916 : vector<8x128xf32>
    %918 = math.exp %917 : vector<8x128xf32>
    %cst_132 = arith.constant 1.000000e+00 : f32
    %919 = vector.broadcast %cst_132 : f32 to vector<8x128xf32>
    %920 = arith.subf %918, %919 : vector<8x128xf32>
    %cst_133 = arith.constant 0.000000e+00 : f32
    %921 = vector.broadcast %cst_133 : f32 to vector<8x128xf32>
    %922 = arith.cmpf ogt, %915, %921 : vector<8x128xf32>
    %923 = arith.select %922, %915, %920 : vector<8x128xi1>, vector<8x128xf32>
    %924 = arith.index_cast %c43_i32 : i32 to index
    %925 = memref.load %arg4[%924] : memref<64xf32, #tpu.memory_space<smem>>
    %926 = vector.broadcast %925 : f32 to vector<8x128xf32>
    %927 = arith.mulf %926, %923 : vector<8x128xf32>
    %928 = arith.addf %907, %927 : vector<8x128xf32>
    %c44_i32 = arith.constant 44 : i32
    %929 = arith.index_cast %c44_i32 : i32 to index
    %930 = memref.load %arg2[%929] : memref<64xf32, #tpu.memory_space<smem>>
    %931 = vector.broadcast %930 : f32 to vector<8x128xf32>
    %932 = arith.mulf %0, %931 : vector<8x128xf32>
    %933 = arith.index_cast %c44_i32 : i32 to index
    %934 = memref.load %arg3[%933] : memref<64xf32, #tpu.memory_space<smem>>
    %935 = vector.broadcast %934 : f32 to vector<8x128xf32>
    %936 = arith.addf %932, %935 : vector<8x128xf32>
    %cst_134 = arith.constant 0.000000e+00 : f32
    %937 = vector.broadcast %cst_134 : f32 to vector<8x128xf32>
    %938 = arith.minimumf %936, %937 : vector<8x128xf32>
    %939 = math.exp %938 : vector<8x128xf32>
    %cst_135 = arith.constant 1.000000e+00 : f32
    %940 = vector.broadcast %cst_135 : f32 to vector<8x128xf32>
    %941 = arith.subf %939, %940 : vector<8x128xf32>
    %cst_136 = arith.constant 0.000000e+00 : f32
    %942 = vector.broadcast %cst_136 : f32 to vector<8x128xf32>
    %943 = arith.cmpf ogt, %936, %942 : vector<8x128xf32>
    %944 = arith.select %943, %936, %941 : vector<8x128xi1>, vector<8x128xf32>
    %945 = arith.index_cast %c44_i32 : i32 to index
    %946 = memref.load %arg4[%945] : memref<64xf32, #tpu.memory_space<smem>>
    %947 = vector.broadcast %946 : f32 to vector<8x128xf32>
    %948 = arith.mulf %947, %944 : vector<8x128xf32>
    %949 = arith.addf %928, %948 : vector<8x128xf32>
    %c45_i32 = arith.constant 45 : i32
    %950 = arith.index_cast %c45_i32 : i32 to index
    %951 = memref.load %arg2[%950] : memref<64xf32, #tpu.memory_space<smem>>
    %952 = vector.broadcast %951 : f32 to vector<8x128xf32>
    %953 = arith.mulf %0, %952 : vector<8x128xf32>
    %954 = arith.index_cast %c45_i32 : i32 to index
    %955 = memref.load %arg3[%954] : memref<64xf32, #tpu.memory_space<smem>>
    %956 = vector.broadcast %955 : f32 to vector<8x128xf32>
    %957 = arith.addf %953, %956 : vector<8x128xf32>
    %cst_137 = arith.constant 0.000000e+00 : f32
    %958 = vector.broadcast %cst_137 : f32 to vector<8x128xf32>
    %959 = arith.minimumf %957, %958 : vector<8x128xf32>
    %960 = math.exp %959 : vector<8x128xf32>
    %cst_138 = arith.constant 1.000000e+00 : f32
    %961 = vector.broadcast %cst_138 : f32 to vector<8x128xf32>
    %962 = arith.subf %960, %961 : vector<8x128xf32>
    %cst_139 = arith.constant 0.000000e+00 : f32
    %963 = vector.broadcast %cst_139 : f32 to vector<8x128xf32>
    %964 = arith.cmpf ogt, %957, %963 : vector<8x128xf32>
    %965 = arith.select %964, %957, %962 : vector<8x128xi1>, vector<8x128xf32>
    %966 = arith.index_cast %c45_i32 : i32 to index
    %967 = memref.load %arg4[%966] : memref<64xf32, #tpu.memory_space<smem>>
    %968 = vector.broadcast %967 : f32 to vector<8x128xf32>
    %969 = arith.mulf %968, %965 : vector<8x128xf32>
    %970 = arith.addf %949, %969 : vector<8x128xf32>
    %c46_i32 = arith.constant 46 : i32
    %971 = arith.index_cast %c46_i32 : i32 to index
    %972 = memref.load %arg2[%971] : memref<64xf32, #tpu.memory_space<smem>>
    %973 = vector.broadcast %972 : f32 to vector<8x128xf32>
    %974 = arith.mulf %0, %973 : vector<8x128xf32>
    %975 = arith.index_cast %c46_i32 : i32 to index
    %976 = memref.load %arg3[%975] : memref<64xf32, #tpu.memory_space<smem>>
    %977 = vector.broadcast %976 : f32 to vector<8x128xf32>
    %978 = arith.addf %974, %977 : vector<8x128xf32>
    %cst_140 = arith.constant 0.000000e+00 : f32
    %979 = vector.broadcast %cst_140 : f32 to vector<8x128xf32>
    %980 = arith.minimumf %978, %979 : vector<8x128xf32>
    %981 = math.exp %980 : vector<8x128xf32>
    %cst_141 = arith.constant 1.000000e+00 : f32
    %982 = vector.broadcast %cst_141 : f32 to vector<8x128xf32>
    %983 = arith.subf %981, %982 : vector<8x128xf32>
    %cst_142 = arith.constant 0.000000e+00 : f32
    %984 = vector.broadcast %cst_142 : f32 to vector<8x128xf32>
    %985 = arith.cmpf ogt, %978, %984 : vector<8x128xf32>
    %986 = arith.select %985, %978, %983 : vector<8x128xi1>, vector<8x128xf32>
    %987 = arith.index_cast %c46_i32 : i32 to index
    %988 = memref.load %arg4[%987] : memref<64xf32, #tpu.memory_space<smem>>
    %989 = vector.broadcast %988 : f32 to vector<8x128xf32>
    %990 = arith.mulf %989, %986 : vector<8x128xf32>
    %991 = arith.addf %970, %990 : vector<8x128xf32>
    %c47_i32 = arith.constant 47 : i32
    %992 = arith.index_cast %c47_i32 : i32 to index
    %993 = memref.load %arg2[%992] : memref<64xf32, #tpu.memory_space<smem>>
    %994 = vector.broadcast %993 : f32 to vector<8x128xf32>
    %995 = arith.mulf %0, %994 : vector<8x128xf32>
    %996 = arith.index_cast %c47_i32 : i32 to index
    %997 = memref.load %arg3[%996] : memref<64xf32, #tpu.memory_space<smem>>
    %998 = vector.broadcast %997 : f32 to vector<8x128xf32>
    %999 = arith.addf %995, %998 : vector<8x128xf32>
    %cst_143 = arith.constant 0.000000e+00 : f32
    %1000 = vector.broadcast %cst_143 : f32 to vector<8x128xf32>
    %1001 = arith.minimumf %999, %1000 : vector<8x128xf32>
    %1002 = math.exp %1001 : vector<8x128xf32>
    %cst_144 = arith.constant 1.000000e+00 : f32
    %1003 = vector.broadcast %cst_144 : f32 to vector<8x128xf32>
    %1004 = arith.subf %1002, %1003 : vector<8x128xf32>
    %cst_145 = arith.constant 0.000000e+00 : f32
    %1005 = vector.broadcast %cst_145 : f32 to vector<8x128xf32>
    %1006 = arith.cmpf ogt, %999, %1005 : vector<8x128xf32>
    %1007 = arith.select %1006, %999, %1004 : vector<8x128xi1>, vector<8x128xf32>
    %1008 = arith.index_cast %c47_i32 : i32 to index
    %1009 = memref.load %arg4[%1008] : memref<64xf32, #tpu.memory_space<smem>>
    %1010 = vector.broadcast %1009 : f32 to vector<8x128xf32>
    %1011 = arith.mulf %1010, %1007 : vector<8x128xf32>
    %1012 = arith.addf %991, %1011 : vector<8x128xf32>
    %c48_i32 = arith.constant 48 : i32
    %1013 = arith.index_cast %c48_i32 : i32 to index
    %1014 = memref.load %arg2[%1013] : memref<64xf32, #tpu.memory_space<smem>>
    %1015 = vector.broadcast %1014 : f32 to vector<8x128xf32>
    %1016 = arith.mulf %0, %1015 : vector<8x128xf32>
    %1017 = arith.index_cast %c48_i32 : i32 to index
    %1018 = memref.load %arg3[%1017] : memref<64xf32, #tpu.memory_space<smem>>
    %1019 = vector.broadcast %1018 : f32 to vector<8x128xf32>
    %1020 = arith.addf %1016, %1019 : vector<8x128xf32>
    %cst_146 = arith.constant 0.000000e+00 : f32
    %1021 = vector.broadcast %cst_146 : f32 to vector<8x128xf32>
    %1022 = arith.minimumf %1020, %1021 : vector<8x128xf32>
    %1023 = math.exp %1022 : vector<8x128xf32>
    %cst_147 = arith.constant 1.000000e+00 : f32
    %1024 = vector.broadcast %cst_147 : f32 to vector<8x128xf32>
    %1025 = arith.subf %1023, %1024 : vector<8x128xf32>
    %cst_148 = arith.constant 0.000000e+00 : f32
    %1026 = vector.broadcast %cst_148 : f32 to vector<8x128xf32>
    %1027 = arith.cmpf ogt, %1020, %1026 : vector<8x128xf32>
    %1028 = arith.select %1027, %1020, %1025 : vector<8x128xi1>, vector<8x128xf32>
    %1029 = arith.index_cast %c48_i32 : i32 to index
    %1030 = memref.load %arg4[%1029] : memref<64xf32, #tpu.memory_space<smem>>
    %1031 = vector.broadcast %1030 : f32 to vector<8x128xf32>
    %1032 = arith.mulf %1031, %1028 : vector<8x128xf32>
    %1033 = arith.addf %1012, %1032 : vector<8x128xf32>
    %c49_i32 = arith.constant 49 : i32
    %1034 = arith.index_cast %c49_i32 : i32 to index
    %1035 = memref.load %arg2[%1034] : memref<64xf32, #tpu.memory_space<smem>>
    %1036 = vector.broadcast %1035 : f32 to vector<8x128xf32>
    %1037 = arith.mulf %0, %1036 : vector<8x128xf32>
    %1038 = arith.index_cast %c49_i32 : i32 to index
    %1039 = memref.load %arg3[%1038] : memref<64xf32, #tpu.memory_space<smem>>
    %1040 = vector.broadcast %1039 : f32 to vector<8x128xf32>
    %1041 = arith.addf %1037, %1040 : vector<8x128xf32>
    %cst_149 = arith.constant 0.000000e+00 : f32
    %1042 = vector.broadcast %cst_149 : f32 to vector<8x128xf32>
    %1043 = arith.minimumf %1041, %1042 : vector<8x128xf32>
    %1044 = math.exp %1043 : vector<8x128xf32>
    %cst_150 = arith.constant 1.000000e+00 : f32
    %1045 = vector.broadcast %cst_150 : f32 to vector<8x128xf32>
    %1046 = arith.subf %1044, %1045 : vector<8x128xf32>
    %cst_151 = arith.constant 0.000000e+00 : f32
    %1047 = vector.broadcast %cst_151 : f32 to vector<8x128xf32>
    %1048 = arith.cmpf ogt, %1041, %1047 : vector<8x128xf32>
    %1049 = arith.select %1048, %1041, %1046 : vector<8x128xi1>, vector<8x128xf32>
    %1050 = arith.index_cast %c49_i32 : i32 to index
    %1051 = memref.load %arg4[%1050] : memref<64xf32, #tpu.memory_space<smem>>
    %1052 = vector.broadcast %1051 : f32 to vector<8x128xf32>
    %1053 = arith.mulf %1052, %1049 : vector<8x128xf32>
    %1054 = arith.addf %1033, %1053 : vector<8x128xf32>
    %c50_i32 = arith.constant 50 : i32
    %1055 = arith.index_cast %c50_i32 : i32 to index
    %1056 = memref.load %arg2[%1055] : memref<64xf32, #tpu.memory_space<smem>>
    %1057 = vector.broadcast %1056 : f32 to vector<8x128xf32>
    %1058 = arith.mulf %0, %1057 : vector<8x128xf32>
    %1059 = arith.index_cast %c50_i32 : i32 to index
    %1060 = memref.load %arg3[%1059] : memref<64xf32, #tpu.memory_space<smem>>
    %1061 = vector.broadcast %1060 : f32 to vector<8x128xf32>
    %1062 = arith.addf %1058, %1061 : vector<8x128xf32>
    %cst_152 = arith.constant 0.000000e+00 : f32
    %1063 = vector.broadcast %cst_152 : f32 to vector<8x128xf32>
    %1064 = arith.minimumf %1062, %1063 : vector<8x128xf32>
    %1065 = math.exp %1064 : vector<8x128xf32>
    %cst_153 = arith.constant 1.000000e+00 : f32
    %1066 = vector.broadcast %cst_153 : f32 to vector<8x128xf32>
    %1067 = arith.subf %1065, %1066 : vector<8x128xf32>
    %cst_154 = arith.constant 0.000000e+00 : f32
    %1068 = vector.broadcast %cst_154 : f32 to vector<8x128xf32>
    %1069 = arith.cmpf ogt, %1062, %1068 : vector<8x128xf32>
    %1070 = arith.select %1069, %1062, %1067 : vector<8x128xi1>, vector<8x128xf32>
    %1071 = arith.index_cast %c50_i32 : i32 to index
    %1072 = memref.load %arg4[%1071] : memref<64xf32, #tpu.memory_space<smem>>
    %1073 = vector.broadcast %1072 : f32 to vector<8x128xf32>
    %1074 = arith.mulf %1073, %1070 : vector<8x128xf32>
    %1075 = arith.addf %1054, %1074 : vector<8x128xf32>
    %c51_i32 = arith.constant 51 : i32
    %1076 = arith.index_cast %c51_i32 : i32 to index
    %1077 = memref.load %arg2[%1076] : memref<64xf32, #tpu.memory_space<smem>>
    %1078 = vector.broadcast %1077 : f32 to vector<8x128xf32>
    %1079 = arith.mulf %0, %1078 : vector<8x128xf32>
    %1080 = arith.index_cast %c51_i32 : i32 to index
    %1081 = memref.load %arg3[%1080] : memref<64xf32, #tpu.memory_space<smem>>
    %1082 = vector.broadcast %1081 : f32 to vector<8x128xf32>
    %1083 = arith.addf %1079, %1082 : vector<8x128xf32>
    %cst_155 = arith.constant 0.000000e+00 : f32
    %1084 = vector.broadcast %cst_155 : f32 to vector<8x128xf32>
    %1085 = arith.minimumf %1083, %1084 : vector<8x128xf32>
    %1086 = math.exp %1085 : vector<8x128xf32>
    %cst_156 = arith.constant 1.000000e+00 : f32
    %1087 = vector.broadcast %cst_156 : f32 to vector<8x128xf32>
    %1088 = arith.subf %1086, %1087 : vector<8x128xf32>
    %cst_157 = arith.constant 0.000000e+00 : f32
    %1089 = vector.broadcast %cst_157 : f32 to vector<8x128xf32>
    %1090 = arith.cmpf ogt, %1083, %1089 : vector<8x128xf32>
    %1091 = arith.select %1090, %1083, %1088 : vector<8x128xi1>, vector<8x128xf32>
    %1092 = arith.index_cast %c51_i32 : i32 to index
    %1093 = memref.load %arg4[%1092] : memref<64xf32, #tpu.memory_space<smem>>
    %1094 = vector.broadcast %1093 : f32 to vector<8x128xf32>
    %1095 = arith.mulf %1094, %1091 : vector<8x128xf32>
    %1096 = arith.addf %1075, %1095 : vector<8x128xf32>
    %c52_i32 = arith.constant 52 : i32
    %1097 = arith.index_cast %c52_i32 : i32 to index
    %1098 = memref.load %arg2[%1097] : memref<64xf32, #tpu.memory_space<smem>>
    %1099 = vector.broadcast %1098 : f32 to vector<8x128xf32>
    %1100 = arith.mulf %0, %1099 : vector<8x128xf32>
    %1101 = arith.index_cast %c52_i32 : i32 to index
    %1102 = memref.load %arg3[%1101] : memref<64xf32, #tpu.memory_space<smem>>
    %1103 = vector.broadcast %1102 : f32 to vector<8x128xf32>
    %1104 = arith.addf %1100, %1103 : vector<8x128xf32>
    %cst_158 = arith.constant 0.000000e+00 : f32
    %1105 = vector.broadcast %cst_158 : f32 to vector<8x128xf32>
    %1106 = arith.minimumf %1104, %1105 : vector<8x128xf32>
    %1107 = math.exp %1106 : vector<8x128xf32>
    %cst_159 = arith.constant 1.000000e+00 : f32
    %1108 = vector.broadcast %cst_159 : f32 to vector<8x128xf32>
    %1109 = arith.subf %1107, %1108 : vector<8x128xf32>
    %cst_160 = arith.constant 0.000000e+00 : f32
    %1110 = vector.broadcast %cst_160 : f32 to vector<8x128xf32>
    %1111 = arith.cmpf ogt, %1104, %1110 : vector<8x128xf32>
    %1112 = arith.select %1111, %1104, %1109 : vector<8x128xi1>, vector<8x128xf32>
    %1113 = arith.index_cast %c52_i32 : i32 to index
    %1114 = memref.load %arg4[%1113] : memref<64xf32, #tpu.memory_space<smem>>
    %1115 = vector.broadcast %1114 : f32 to vector<8x128xf32>
    %1116 = arith.mulf %1115, %1112 : vector<8x128xf32>
    %1117 = arith.addf %1096, %1116 : vector<8x128xf32>
    %c53_i32 = arith.constant 53 : i32
    %1118 = arith.index_cast %c53_i32 : i32 to index
    %1119 = memref.load %arg2[%1118] : memref<64xf32, #tpu.memory_space<smem>>
    %1120 = vector.broadcast %1119 : f32 to vector<8x128xf32>
    %1121 = arith.mulf %0, %1120 : vector<8x128xf32>
    %1122 = arith.index_cast %c53_i32 : i32 to index
    %1123 = memref.load %arg3[%1122] : memref<64xf32, #tpu.memory_space<smem>>
    %1124 = vector.broadcast %1123 : f32 to vector<8x128xf32>
    %1125 = arith.addf %1121, %1124 : vector<8x128xf32>
    %cst_161 = arith.constant 0.000000e+00 : f32
    %1126 = vector.broadcast %cst_161 : f32 to vector<8x128xf32>
    %1127 = arith.minimumf %1125, %1126 : vector<8x128xf32>
    %1128 = math.exp %1127 : vector<8x128xf32>
    %cst_162 = arith.constant 1.000000e+00 : f32
    %1129 = vector.broadcast %cst_162 : f32 to vector<8x128xf32>
    %1130 = arith.subf %1128, %1129 : vector<8x128xf32>
    %cst_163 = arith.constant 0.000000e+00 : f32
    %1131 = vector.broadcast %cst_163 : f32 to vector<8x128xf32>
    %1132 = arith.cmpf ogt, %1125, %1131 : vector<8x128xf32>
    %1133 = arith.select %1132, %1125, %1130 : vector<8x128xi1>, vector<8x128xf32>
    %1134 = arith.index_cast %c53_i32 : i32 to index
    %1135 = memref.load %arg4[%1134] : memref<64xf32, #tpu.memory_space<smem>>
    %1136 = vector.broadcast %1135 : f32 to vector<8x128xf32>
    %1137 = arith.mulf %1136, %1133 : vector<8x128xf32>
    %1138 = arith.addf %1117, %1137 : vector<8x128xf32>
    %c54_i32 = arith.constant 54 : i32
    %1139 = arith.index_cast %c54_i32 : i32 to index
    %1140 = memref.load %arg2[%1139] : memref<64xf32, #tpu.memory_space<smem>>
    %1141 = vector.broadcast %1140 : f32 to vector<8x128xf32>
    %1142 = arith.mulf %0, %1141 : vector<8x128xf32>
    %1143 = arith.index_cast %c54_i32 : i32 to index
    %1144 = memref.load %arg3[%1143] : memref<64xf32, #tpu.memory_space<smem>>
    %1145 = vector.broadcast %1144 : f32 to vector<8x128xf32>
    %1146 = arith.addf %1142, %1145 : vector<8x128xf32>
    %cst_164 = arith.constant 0.000000e+00 : f32
    %1147 = vector.broadcast %cst_164 : f32 to vector<8x128xf32>
    %1148 = arith.minimumf %1146, %1147 : vector<8x128xf32>
    %1149 = math.exp %1148 : vector<8x128xf32>
    %cst_165 = arith.constant 1.000000e+00 : f32
    %1150 = vector.broadcast %cst_165 : f32 to vector<8x128xf32>
    %1151 = arith.subf %1149, %1150 : vector<8x128xf32>
    %cst_166 = arith.constant 0.000000e+00 : f32
    %1152 = vector.broadcast %cst_166 : f32 to vector<8x128xf32>
    %1153 = arith.cmpf ogt, %1146, %1152 : vector<8x128xf32>
    %1154 = arith.select %1153, %1146, %1151 : vector<8x128xi1>, vector<8x128xf32>
    %1155 = arith.index_cast %c54_i32 : i32 to index
    %1156 = memref.load %arg4[%1155] : memref<64xf32, #tpu.memory_space<smem>>
    %1157 = vector.broadcast %1156 : f32 to vector<8x128xf32>
    %1158 = arith.mulf %1157, %1154 : vector<8x128xf32>
    %1159 = arith.addf %1138, %1158 : vector<8x128xf32>
    %c55_i32 = arith.constant 55 : i32
    %1160 = arith.index_cast %c55_i32 : i32 to index
    %1161 = memref.load %arg2[%1160] : memref<64xf32, #tpu.memory_space<smem>>
    %1162 = vector.broadcast %1161 : f32 to vector<8x128xf32>
    %1163 = arith.mulf %0, %1162 : vector<8x128xf32>
    %1164 = arith.index_cast %c55_i32 : i32 to index
    %1165 = memref.load %arg3[%1164] : memref<64xf32, #tpu.memory_space<smem>>
    %1166 = vector.broadcast %1165 : f32 to vector<8x128xf32>
    %1167 = arith.addf %1163, %1166 : vector<8x128xf32>
    %cst_167 = arith.constant 0.000000e+00 : f32
    %1168 = vector.broadcast %cst_167 : f32 to vector<8x128xf32>
    %1169 = arith.minimumf %1167, %1168 : vector<8x128xf32>
    %1170 = math.exp %1169 : vector<8x128xf32>
    %cst_168 = arith.constant 1.000000e+00 : f32
    %1171 = vector.broadcast %cst_168 : f32 to vector<8x128xf32>
    %1172 = arith.subf %1170, %1171 : vector<8x128xf32>
    %cst_169 = arith.constant 0.000000e+00 : f32
    %1173 = vector.broadcast %cst_169 : f32 to vector<8x128xf32>
    %1174 = arith.cmpf ogt, %1167, %1173 : vector<8x128xf32>
    %1175 = arith.select %1174, %1167, %1172 : vector<8x128xi1>, vector<8x128xf32>
    %1176 = arith.index_cast %c55_i32 : i32 to index
    %1177 = memref.load %arg4[%1176] : memref<64xf32, #tpu.memory_space<smem>>
    %1178 = vector.broadcast %1177 : f32 to vector<8x128xf32>
    %1179 = arith.mulf %1178, %1175 : vector<8x128xf32>
    %1180 = arith.addf %1159, %1179 : vector<8x128xf32>
    %c56_i32 = arith.constant 56 : i32
    %1181 = arith.index_cast %c56_i32 : i32 to index
    %1182 = memref.load %arg2[%1181] : memref<64xf32, #tpu.memory_space<smem>>
    %1183 = vector.broadcast %1182 : f32 to vector<8x128xf32>
    %1184 = arith.mulf %0, %1183 : vector<8x128xf32>
    %1185 = arith.index_cast %c56_i32 : i32 to index
    %1186 = memref.load %arg3[%1185] : memref<64xf32, #tpu.memory_space<smem>>
    %1187 = vector.broadcast %1186 : f32 to vector<8x128xf32>
    %1188 = arith.addf %1184, %1187 : vector<8x128xf32>
    %cst_170 = arith.constant 0.000000e+00 : f32
    %1189 = vector.broadcast %cst_170 : f32 to vector<8x128xf32>
    %1190 = arith.minimumf %1188, %1189 : vector<8x128xf32>
    %1191 = math.exp %1190 : vector<8x128xf32>
    %cst_171 = arith.constant 1.000000e+00 : f32
    %1192 = vector.broadcast %cst_171 : f32 to vector<8x128xf32>
    %1193 = arith.subf %1191, %1192 : vector<8x128xf32>
    %cst_172 = arith.constant 0.000000e+00 : f32
    %1194 = vector.broadcast %cst_172 : f32 to vector<8x128xf32>
    %1195 = arith.cmpf ogt, %1188, %1194 : vector<8x128xf32>
    %1196 = arith.select %1195, %1188, %1193 : vector<8x128xi1>, vector<8x128xf32>
    %1197 = arith.index_cast %c56_i32 : i32 to index
    %1198 = memref.load %arg4[%1197] : memref<64xf32, #tpu.memory_space<smem>>
    %1199 = vector.broadcast %1198 : f32 to vector<8x128xf32>
    %1200 = arith.mulf %1199, %1196 : vector<8x128xf32>
    %1201 = arith.addf %1180, %1200 : vector<8x128xf32>
    %c57_i32 = arith.constant 57 : i32
    %1202 = arith.index_cast %c57_i32 : i32 to index
    %1203 = memref.load %arg2[%1202] : memref<64xf32, #tpu.memory_space<smem>>
    %1204 = vector.broadcast %1203 : f32 to vector<8x128xf32>
    %1205 = arith.mulf %0, %1204 : vector<8x128xf32>
    %1206 = arith.index_cast %c57_i32 : i32 to index
    %1207 = memref.load %arg3[%1206] : memref<64xf32, #tpu.memory_space<smem>>
    %1208 = vector.broadcast %1207 : f32 to vector<8x128xf32>
    %1209 = arith.addf %1205, %1208 : vector<8x128xf32>
    %cst_173 = arith.constant 0.000000e+00 : f32
    %1210 = vector.broadcast %cst_173 : f32 to vector<8x128xf32>
    %1211 = arith.minimumf %1209, %1210 : vector<8x128xf32>
    %1212 = math.exp %1211 : vector<8x128xf32>
    %cst_174 = arith.constant 1.000000e+00 : f32
    %1213 = vector.broadcast %cst_174 : f32 to vector<8x128xf32>
    %1214 = arith.subf %1212, %1213 : vector<8x128xf32>
    %cst_175 = arith.constant 0.000000e+00 : f32
    %1215 = vector.broadcast %cst_175 : f32 to vector<8x128xf32>
    %1216 = arith.cmpf ogt, %1209, %1215 : vector<8x128xf32>
    %1217 = arith.select %1216, %1209, %1214 : vector<8x128xi1>, vector<8x128xf32>
    %1218 = arith.index_cast %c57_i32 : i32 to index
    %1219 = memref.load %arg4[%1218] : memref<64xf32, #tpu.memory_space<smem>>
    %1220 = vector.broadcast %1219 : f32 to vector<8x128xf32>
    %1221 = arith.mulf %1220, %1217 : vector<8x128xf32>
    %1222 = arith.addf %1201, %1221 : vector<8x128xf32>
    %c58_i32 = arith.constant 58 : i32
    %1223 = arith.index_cast %c58_i32 : i32 to index
    %1224 = memref.load %arg2[%1223] : memref<64xf32, #tpu.memory_space<smem>>
    %1225 = vector.broadcast %1224 : f32 to vector<8x128xf32>
    %1226 = arith.mulf %0, %1225 : vector<8x128xf32>
    %1227 = arith.index_cast %c58_i32 : i32 to index
    %1228 = memref.load %arg3[%1227] : memref<64xf32, #tpu.memory_space<smem>>
    %1229 = vector.broadcast %1228 : f32 to vector<8x128xf32>
    %1230 = arith.addf %1226, %1229 : vector<8x128xf32>
    %cst_176 = arith.constant 0.000000e+00 : f32
    %1231 = vector.broadcast %cst_176 : f32 to vector<8x128xf32>
    %1232 = arith.minimumf %1230, %1231 : vector<8x128xf32>
    %1233 = math.exp %1232 : vector<8x128xf32>
    %cst_177 = arith.constant 1.000000e+00 : f32
    %1234 = vector.broadcast %cst_177 : f32 to vector<8x128xf32>
    %1235 = arith.subf %1233, %1234 : vector<8x128xf32>
    %cst_178 = arith.constant 0.000000e+00 : f32
    %1236 = vector.broadcast %cst_178 : f32 to vector<8x128xf32>
    %1237 = arith.cmpf ogt, %1230, %1236 : vector<8x128xf32>
    %1238 = arith.select %1237, %1230, %1235 : vector<8x128xi1>, vector<8x128xf32>
    %1239 = arith.index_cast %c58_i32 : i32 to index
    %1240 = memref.load %arg4[%1239] : memref<64xf32, #tpu.memory_space<smem>>
    %1241 = vector.broadcast %1240 : f32 to vector<8x128xf32>
    %1242 = arith.mulf %1241, %1238 : vector<8x128xf32>
    %1243 = arith.addf %1222, %1242 : vector<8x128xf32>
    %c59_i32 = arith.constant 59 : i32
    %1244 = arith.index_cast %c59_i32 : i32 to index
    %1245 = memref.load %arg2[%1244] : memref<64xf32, #tpu.memory_space<smem>>
    %1246 = vector.broadcast %1245 : f32 to vector<8x128xf32>
    %1247 = arith.mulf %0, %1246 : vector<8x128xf32>
    %1248 = arith.index_cast %c59_i32 : i32 to index
    %1249 = memref.load %arg3[%1248] : memref<64xf32, #tpu.memory_space<smem>>
    %1250 = vector.broadcast %1249 : f32 to vector<8x128xf32>
    %1251 = arith.addf %1247, %1250 : vector<8x128xf32>
    %cst_179 = arith.constant 0.000000e+00 : f32
    %1252 = vector.broadcast %cst_179 : f32 to vector<8x128xf32>
    %1253 = arith.minimumf %1251, %1252 : vector<8x128xf32>
    %1254 = math.exp %1253 : vector<8x128xf32>
    %cst_180 = arith.constant 1.000000e+00 : f32
    %1255 = vector.broadcast %cst_180 : f32 to vector<8x128xf32>
    %1256 = arith.subf %1254, %1255 : vector<8x128xf32>
    %cst_181 = arith.constant 0.000000e+00 : f32
    %1257 = vector.broadcast %cst_181 : f32 to vector<8x128xf32>
    %1258 = arith.cmpf ogt, %1251, %1257 : vector<8x128xf32>
    %1259 = arith.select %1258, %1251, %1256 : vector<8x128xi1>, vector<8x128xf32>
    %1260 = arith.index_cast %c59_i32 : i32 to index
    %1261 = memref.load %arg4[%1260] : memref<64xf32, #tpu.memory_space<smem>>
    %1262 = vector.broadcast %1261 : f32 to vector<8x128xf32>
    %1263 = arith.mulf %1262, %1259 : vector<8x128xf32>
    %1264 = arith.addf %1243, %1263 : vector<8x128xf32>
    %c60_i32 = arith.constant 60 : i32
    %1265 = arith.index_cast %c60_i32 : i32 to index
    %1266 = memref.load %arg2[%1265] : memref<64xf32, #tpu.memory_space<smem>>
    %1267 = vector.broadcast %1266 : f32 to vector<8x128xf32>
    %1268 = arith.mulf %0, %1267 : vector<8x128xf32>
    %1269 = arith.index_cast %c60_i32 : i32 to index
    %1270 = memref.load %arg3[%1269] : memref<64xf32, #tpu.memory_space<smem>>
    %1271 = vector.broadcast %1270 : f32 to vector<8x128xf32>
    %1272 = arith.addf %1268, %1271 : vector<8x128xf32>
    %cst_182 = arith.constant 0.000000e+00 : f32
    %1273 = vector.broadcast %cst_182 : f32 to vector<8x128xf32>
    %1274 = arith.minimumf %1272, %1273 : vector<8x128xf32>
    %1275 = math.exp %1274 : vector<8x128xf32>
    %cst_183 = arith.constant 1.000000e+00 : f32
    %1276 = vector.broadcast %cst_183 : f32 to vector<8x128xf32>
    %1277 = arith.subf %1275, %1276 : vector<8x128xf32>
    %cst_184 = arith.constant 0.000000e+00 : f32
    %1278 = vector.broadcast %cst_184 : f32 to vector<8x128xf32>
    %1279 = arith.cmpf ogt, %1272, %1278 : vector<8x128xf32>
    %1280 = arith.select %1279, %1272, %1277 : vector<8x128xi1>, vector<8x128xf32>
    %1281 = arith.index_cast %c60_i32 : i32 to index
    %1282 = memref.load %arg4[%1281] : memref<64xf32, #tpu.memory_space<smem>>
    %1283 = vector.broadcast %1282 : f32 to vector<8x128xf32>
    %1284 = arith.mulf %1283, %1280 : vector<8x128xf32>
    %1285 = arith.addf %1264, %1284 : vector<8x128xf32>
    %c61_i32 = arith.constant 61 : i32
    %1286 = arith.index_cast %c61_i32 : i32 to index
    %1287 = memref.load %arg2[%1286] : memref<64xf32, #tpu.memory_space<smem>>
    %1288 = vector.broadcast %1287 : f32 to vector<8x128xf32>
    %1289 = arith.mulf %0, %1288 : vector<8x128xf32>
    %1290 = arith.index_cast %c61_i32 : i32 to index
    %1291 = memref.load %arg3[%1290] : memref<64xf32, #tpu.memory_space<smem>>
    %1292 = vector.broadcast %1291 : f32 to vector<8x128xf32>
    %1293 = arith.addf %1289, %1292 : vector<8x128xf32>
    %cst_185 = arith.constant 0.000000e+00 : f32
    %1294 = vector.broadcast %cst_185 : f32 to vector<8x128xf32>
    %1295 = arith.minimumf %1293, %1294 : vector<8x128xf32>
    %1296 = math.exp %1295 : vector<8x128xf32>
    %cst_186 = arith.constant 1.000000e+00 : f32
    %1297 = vector.broadcast %cst_186 : f32 to vector<8x128xf32>
    %1298 = arith.subf %1296, %1297 : vector<8x128xf32>
    %cst_187 = arith.constant 0.000000e+00 : f32
    %1299 = vector.broadcast %cst_187 : f32 to vector<8x128xf32>
    %1300 = arith.cmpf ogt, %1293, %1299 : vector<8x128xf32>
    %1301 = arith.select %1300, %1293, %1298 : vector<8x128xi1>, vector<8x128xf32>
    %1302 = arith.index_cast %c61_i32 : i32 to index
    %1303 = memref.load %arg4[%1302] : memref<64xf32, #tpu.memory_space<smem>>
    %1304 = vector.broadcast %1303 : f32 to vector<8x128xf32>
    %1305 = arith.mulf %1304, %1301 : vector<8x128xf32>
    %1306 = arith.addf %1285, %1305 : vector<8x128xf32>
    %c62_i32 = arith.constant 62 : i32
    %1307 = arith.index_cast %c62_i32 : i32 to index
    %1308 = memref.load %arg2[%1307] : memref<64xf32, #tpu.memory_space<smem>>
    %1309 = vector.broadcast %1308 : f32 to vector<8x128xf32>
    %1310 = arith.mulf %0, %1309 : vector<8x128xf32>
    %1311 = arith.index_cast %c62_i32 : i32 to index
    %1312 = memref.load %arg3[%1311] : memref<64xf32, #tpu.memory_space<smem>>
    %1313 = vector.broadcast %1312 : f32 to vector<8x128xf32>
    %1314 = arith.addf %1310, %1313 : vector<8x128xf32>
    %cst_188 = arith.constant 0.000000e+00 : f32
    %1315 = vector.broadcast %cst_188 : f32 to vector<8x128xf32>
    %1316 = arith.minimumf %1314, %1315 : vector<8x128xf32>
    %1317 = math.exp %1316 : vector<8x128xf32>
    %cst_189 = arith.constant 1.000000e+00 : f32
    %1318 = vector.broadcast %cst_189 : f32 to vector<8x128xf32>
    %1319 = arith.subf %1317, %1318 : vector<8x128xf32>
    %cst_190 = arith.constant 0.000000e+00 : f32
    %1320 = vector.broadcast %cst_190 : f32 to vector<8x128xf32>
    %1321 = arith.cmpf ogt, %1314, %1320 : vector<8x128xf32>
    %1322 = arith.select %1321, %1314, %1319 : vector<8x128xi1>, vector<8x128xf32>
    %1323 = arith.index_cast %c62_i32 : i32 to index
    %1324 = memref.load %arg4[%1323] : memref<64xf32, #tpu.memory_space<smem>>
    %1325 = vector.broadcast %1324 : f32 to vector<8x128xf32>
    %1326 = arith.mulf %1325, %1322 : vector<8x128xf32>
    %1327 = arith.addf %1306, %1326 : vector<8x128xf32>
    %c63_i32 = arith.constant 63 : i32
    %1328 = arith.index_cast %c63_i32 : i32 to index
    %1329 = memref.load %arg2[%1328] : memref<64xf32, #tpu.memory_space<smem>>
    %1330 = vector.broadcast %1329 : f32 to vector<8x128xf32>
    %1331 = arith.mulf %0, %1330 : vector<8x128xf32>
    %1332 = arith.index_cast %c63_i32 : i32 to index
    %1333 = memref.load %arg3[%1332] : memref<64xf32, #tpu.memory_space<smem>>
    %1334 = vector.broadcast %1333 : f32 to vector<8x128xf32>
    %1335 = arith.addf %1331, %1334 : vector<8x128xf32>
    %cst_191 = arith.constant 0.000000e+00 : f32
    %1336 = vector.broadcast %cst_191 : f32 to vector<8x128xf32>
    %1337 = arith.minimumf %1335, %1336 : vector<8x128xf32>
    %1338 = math.exp %1337 : vector<8x128xf32>
    %cst_192 = arith.constant 1.000000e+00 : f32
    %1339 = vector.broadcast %cst_192 : f32 to vector<8x128xf32>
    %1340 = arith.subf %1338, %1339 : vector<8x128xf32>
    %cst_193 = arith.constant 0.000000e+00 : f32
    %1341 = vector.broadcast %cst_193 : f32 to vector<8x128xf32>
    %1342 = arith.cmpf ogt, %1335, %1341 : vector<8x128xf32>
    %1343 = arith.select %1342, %1335, %1340 : vector<8x128xi1>, vector<8x128xf32>
    %1344 = arith.index_cast %c63_i32 : i32 to index
    %1345 = memref.load %arg4[%1344] : memref<64xf32, #tpu.memory_space<smem>>
    %1346 = vector.broadcast %1345 : f32 to vector<8x128xf32>
    %1347 = arith.mulf %1346, %1343 : vector<8x128xf32>
    %1348 = arith.addf %1327, %1347 : vector<8x128xf32>
    %c64_i32 = arith.constant 64 : i32
    %c0_194 = arith.constant 0 : index
    %c0_195 = arith.constant 0 : index
    %1349 = vector.load %arg6[%c0_194, %c0_195] : memref<8x128xf32, #tpu.memory_space<vmem>>, vector<8x128xf32>
    tpu.vector_store %arg6[%c0_194, %c0_195], %1348 {strides = array<i32>} : memref<8x128xf32, #tpu.memory_space<vmem>>, vector<8x128xf32>,
    return
  }
  func.func @transform_0(%arg0: i32) -> (i32, i32) {
    %c0_i32 = arith.constant 0 : i32
    %c0_i32_0 = arith.constant 0 : i32
    return %arg0, %c0_i32 : i32, i32
  }
  func.func @transform_1(%arg0: i32) -> i32 {
    %c0_i32 = arith.constant 0 : i32
    %c0_i32_0 = arith.constant 0 : i32
    return %c0_i32 : i32
  }
  func.func @transform_2(%arg0: i32) -> i32 {
    %c0_i32 = arith.constant 0 : i32
    %c0_i32_0 = arith.constant 0 : i32
    return %c0_i32 : i32
  }
  func.func @transform_3(%arg0: i32) -> i32 {
    %c0_i32 = arith.constant 0 : i32
    %c0_i32_0 = arith.constant 0 : i32
    return %c0_i32 : i32
  }
  func.func @transform_4(%arg0: i32) -> i32 {
    %c0_i32 = arith.constant 0 : i32
    %c0_i32_0 = arith.constant 0 : i32
    return %c0_i32 : i32
  }
  func.func @transform_5(%arg0: i32) -> (i32, i32) {
    %c0_i32 = arith.constant 0 : i32
    %c0_i32_0 = arith.constant 0 : i32
    return %arg0, %c0_i32 : i32, i32
  }
}

</mosaic_0001>

<llo_original>
// kernel: tpu_custom_call.1
$region0: #{tpu_custom_call.1}
  #allocation0 [shape = 'u32[]', space=smem, size = 0x4, offset = 0x4, fixed_abs, tag = 'smem constant byte address 0x4 - core index']
  #allocation1 [shape = 'u32[144,128]{1,0:T(1,128)}', space=vmem, size = 0x12000, scoped, tag = 'internal scratch']
  #allocation2 [shape = 'f32[1]{0:T(128)S(6)}', space=smem, size = 0x200, scoped, tag = 'scoped memory for tpu_custom_call.1']
  %s0 = inlined_call_operand.hbm [shape: f32[16,128], index: 0, kind: input, shape index: {}]
  %s1 = inlined_call_operand.vmem [shape: f32[64], index: 1, kind: input, shape index: {}]
  %s2 = inlined_call_operand.vmem [shape: f32[64], index: 2, kind: input, shape index: {}]
  %s3 = inlined_call_operand.vmem [shape: f32[64], index: 3, kind: input, shape index: {}]
  %s4 = inlined_call_operand.<no memory space> [shape: f32[1], index: 4, kind: input, shape index: {}]
  %s5 = inlined_call_operand.hbm [shape: f32[16,128], index: 5, kind: output, shape index: {}]
  %s6 = sld [smem:[#allocation0]]
  $region69: #{tpu_custom_call.1} parent=0
    _
  %s8 = ssub.s32 1, %s6
  %s9 = scalar_select 0, %s8, %s6
  %10 = sst [smem:[#allocation2]] %s4
  $region1: #{tpu_custom_call.1} parent=0
    #allocation3 [shape = 'u8[8192]{0}', space=vmem, size = 0x2000, scoped, tag = 'input window, operand 0']
    #allocation4 [shape = 's32[2]{0}', space=sflag, size = 0x8, scoped, tag = 'scoped memory for tpu_custom_call.1']
    #allocation5 [shape = 's32[2]{0}', space=sflag, size = 0x8, scoped, tag = 'scoped memory for tpu_custom_call.1']
    #allocation6 [shape = 's32[2]{0}', space=sflag, size = 0x8, scoped, tag = 'scoped memory for tpu_custom_call.1']
    #allocation7 [shape = 'u8[512]{0}', space=smem, size = 0x200, scoped, tag = 'input window, operand 1, single buffered']
    #allocation8 [shape = 'u8[512]{0}', space=smem, size = 0x200, scoped, tag = 'input window, operand 2, single buffered']
    #allocation9 [shape = 's32[1]{0}', space=sflag, size = 0x4, scoped, tag = 'scoped memory for tpu_custom_call.1']
    #allocation10 [shape = 'u8[512]{0}', space=smem, size = 0x200, scoped, tag = 'input window, operand 3, single buffered']
    #allocation11 [shape = 'u8[8192]{0}', space=vmem, size = 0x2000, scoped, tag = 'output window, operand 0']
    %11 = vsyncpa [#allocation4], 0
    %s12 = scalar_lea.sflag [#allocation4], 1
    %13 = vsyncpa %s12, 0
    %14 = vsyncpa [#allocation6], 0
    %15 = vsyncpa [#allocation9], 0
    %16 = vsyncpa [#allocation5], 0
    %s17 = scalar_lea.sflag [#allocation5], 1
    %18 = vsyncpa %s17, 0
    loop: start=0, step=1, limit=4
    $region2: #{tpu_custom_call.1} parent=1 // loop_pre_header
      _
    $region3: #{tpu_custom_call.1} parent=1 // loop_header
      %s20 = sphi 0, %s24
      %p21 = scmp.ge.s32.totalorder %s20, 4
      %s30 = sphi 0, %s32
      %s33 = sphi 0, %s30
      %s34 = sphi 0, %s33
      %s50 = sphi 0, %s34
      %s54 = sphi 0, %s54
      %s56 = sphi 0, %s54
      %s57 = sphi 0, %s56
      %s71 = sphi 0, %s57
      %s75 = sphi 0, %s75
      %s77 = sphi 0, %s75
      %s78 = sphi 0, %s77
      %s92 = sphi 0, %s78
      %s96 = sphi 0, %s96
      %s98 = sphi 0, %s96
      %s99 = sphi 0, %s98
      %s113 = sphi 0, %s99
      %s117 = sphi 0, %s117
      %s119 = sphi 0, %s117
      %s120 = sphi 0, %s119
      %s134 = sphi 0, %s120
      %s140 = sphi 0, %s142
      %s143 = sphi 0, %s140
      %s144 = sphi 0, %s143
      %s160 = sphi 0, %s144
    $region4: #{tpu_custom_call.1} parent=1 // loop_header_branch
      %23 = sbr.rel (%p21) target = $region8
    $region5: #{tpu_custom_call.1} parent=1 // loop_body
      %s25 = ssub.s32 %s20, 1
      %s26 = ssub.s32 %s20, 2
      %s27 = sadd.s32 %s20, 1
      %s28 = ssub.s32 %s20, %s27
      %p29 = scmp.eq.s32.totalorder %s28, 0
      %s31 = sadd.s32 %s30, 1
      %s32 = scalar_select %p29, %s30, %s31
      %p35 = pneg %p29
      %p36 = scmp.eq.s32.totalorder %s20, 1
      %p37 = por %p35, %p36
      %p38 = scmp.ne.s32.totalorder %s30, %s33
      %p39 = scmp.eq.s32.totalorder %s20, 0
      %p40 = por %p38, %p39
      %p41 = scmp.ne.s32.totalorder %s30, %s33
      %p42 = scmp.eq.s32.totalorder %s25, 1
      %p43 = por %p41, %p42
      %p44 = scmp.ne.s32.totalorder %s33, %s34
      %p45 = scmp.eq.s32.totalorder %s25, 0
      %p46 = por %p44, %p45
      %p47 = scmp.ne.s32.totalorder %s33, %s34
      %p48 = scmp.eq.s32.totalorder %s26, 1
      %p49 = por %p47, %p48
      %p51 = scmp.ne.s32.totalorder %s34, %s50
      %p52 = scmp.eq.s32.totalorder %s26, 0
      %p53 = por %p51, %p52
      %s55 = sadd.s32 %s54, 1
      %p58 = scmp.eq.s32.totalorder %s20, 1
      %p59 = scmp.ne.s32.totalorder %s54, %s56
      %p60 = scmp.eq.s32.totalorder %s20, 0
      %p61 = por %p59, %p60
      %p62 = scmp.ne.s32.totalorder %s54, %s56
      %p63 = scmp.eq.s32.totalorder %s25, 1
      %p64 = por %p62, %p63
      %p65 = scmp.ne.s32.totalorder %s56, %s57
      %p66 = scmp.eq.s32.totalorder %s25, 0
      %p67 = por %p65, %p66
      %p68 = scmp.ne.s32.totalorder %s56, %s57
      %p69 = scmp.eq.s32.totalorder %s26, 1
      %p70 = por %p68, %p69
      %p72 = scmp.ne.s32.totalorder %s57, %s71
      %p73 = scmp.eq.s32.totalorder %s26, 0
      %p74 = por %p72, %p73
      %s76 = sadd.s32 %s75, 1
      %p79 = scmp.eq.s32.totalorder %s20, 1
      %p80 = scmp.ne.s32.totalorder %s75, %s77
      %p81 = scmp.eq.s32.totalorder %s20, 0
      %p82 = por %p80, %p81
      %p83 = scmp.ne.s32.totalorder %s75, %s77
      %p84 = scmp.eq.s32.totalorder %s25, 1
      %p85 = por %p83, %p84
      %p86 = scmp.ne.s32.totalorder %s77, %s78
      %p87 = scmp.eq.s32.totalorder %s25, 0
      %p88 = por %p86, %p87
      %p89 = scmp.ne.s32.totalorder %s77, %s78
      %p90 = scmp.eq.s32.totalorder %s26, 1
      %p91 = por %p89, %p90
      %p93 = scmp.ne.s32.totalorder %s78, %s92
      %p94 = scmp.eq.s32.totalorder %s26, 0
      %p95 = por %p93, %p94
      %s97 = sadd.s32 %s96, 1
      %p100 = scmp.eq.s32.totalorder %s20, 1
      %p101 = scmp.ne.s32.totalorder %s96, %s98
      %p102 = scmp.eq.s32.totalorder %s20, 0
      %p103 = por %p101, %p102
      %p104 = scmp.ne.s32.totalorder %s96, %s98
      %p105 = scmp.eq.s32.totalorder %s25, 1
      %p106 = por %p104, %p105
      %p107 = scmp.ne.s32.totalorder %s98, %s99
      %p108 = scmp.eq.s32.totalorder %s25, 0
      %p109 = por %p107, %p108
      %p110 = scmp.ne.s32.totalorder %s98, %s99
      %p111 = scmp.eq.s32.totalorder %s26, 1
      %p112 = por %p110, %p111
      %p114 = scmp.ne.s32.totalorder %s99, %s113
      %p115 = scmp.eq.s32.totalorder %s26, 0
      %p116 = por %p114, %p115
      %s118 = sadd.s32 %s117, 1
      %p121 = scmp.eq.s32.totalorder %s20, 1
      %p122 = scmp.ne.s32.totalorder %s117, %s119
      %p123 = scmp.eq.s32.totalorder %s20, 0
      %p124 = por %p122, %p123
      %p125 = scmp.ne.s32.totalorder %s117, %s119
      %p126 = scmp.eq.s32.totalorder %s25, 1
      %p127 = por %p125, %p126
      %p128 = scmp.ne.s32.totalorder %s119, %s120
      %p129 = scmp.eq.s32.totalorder %s25, 0
      %p130 = por %p128, %p129
      %p131 = scmp.ne.s32.totalorder %s119, %s120
      %p132 = scmp.eq.s32.totalorder %s26, 1
      %p133 = por %p131, %p132
      %p135 = scmp.ne.s32.totalorder %s120, %s134
      %p136 = scmp.eq.s32.totalorder %s26, 0
      %p137 = por %p135, %p136
      %s138 = ssub.s32 %s20, %s27
      %p139 = scmp.eq.s32.totalorder %s138, 0
      %s141 = sadd.s32 %s140, 1
      %s142 = scalar_select %p139, %s140, %s141
      %p145 = pneg %p139
      %p146 = scmp.eq.s32.totalorder %s20, 1
      %p147 = por %p145, %p146
      %p148 = scmp.ne.s32.totalorder %s140, %s143
      %p149 = scmp.eq.s32.totalorder %s20, 0
      %p150 = por %p148, %p149
      %p151 = scmp.ne.s32.totalorder %s140, %s143
      %p152 = scmp.eq.s32.totalorder %s25, 1
      %p153 = por %p151, %p152
      %p154 = scmp.ne.s32.totalorder %s143, %s144
      %p155 = scmp.eq.s32.totalorder %s25, 0
      %p156 = por %p154, %p155
      %p157 = scmp.ne.s32.totalorder %s143, %s144
      %p158 = scmp.eq.s32.totalorder %s26, 1
      %p159 = por %p157, %p158
      %p161 = scmp.ne.s32.totalorder %s144, %s160
      %p162 = scmp.eq.s32.totalorder %s26, 0
      %p163 = por %p161, %p162
      %p164 = scmp.le.s32.totalorder 1, %s20
      %p165 = scmp.lt.s32.totalorder %s20, 3
      %p166 = pnand %p164, %p165
      %p167 = pneg %p166
      // Predicated region
      $region9: #{tpu_custom_call.1} parent=5 // pred_check
        _
      $region10: #{tpu_custom_call.1} parent=5 // pred_check_branch
        %169 = sbr.rel (%p166) target = $region12
      $region11: #{tpu_custom_call.1} parent=5 // pred_region
        %s170 = ssub.s32 %s20, 1
        // Predicated region
        $region13: #{tpu_custom_call.1} parent=11 // pred_check
          %p171 = pneg %p67
        $region14: #{tpu_custom_call.1} parent=11 // pred_check_branch
          %173 = sbr.rel (%p171) target = $region16
        $region15: #{tpu_custom_call.1} parent=11 // pred_region
          %s175 = ssub.s32 16, 16
          %176 = vsyncadd [#allocation6], %s175
          %s178 = sshll.u32 %s1, 4
          %s179 = int_to_ptr.vmem [resolvable:$true] %s178
          %181 = dma.vmem_to_smem %s179, 16, [#allocation7], [#allocation6]
        $region16: #{tpu_custom_call.1} parent=11 // pred_fallthru
          _
        // Predicated region
        $region17: #{tpu_custom_call.1} parent=11 // pred_check
          %p182 = pneg %p88
        $region18: #{tpu_custom_call.1} parent=11 // pred_check_branch
          %184 = sbr.rel (%p182) target = $region20
        $region19: #{tpu_custom_call.1} parent=11 // pred_region
          %s186 = ssub.s32 16, 16
          %187 = vsyncadd [#allocation9], %s186
          %s189 = sshll.u32 %s2, 4
          %s190 = int_to_ptr.vmem [resolvable:$true] %s189
          %192 = dma.vmem_to_smem %s190, 16, [#allocation8], [#allocation9]
        $region20: #{tpu_custom_call.1} parent=11 // pred_fallthru
          _
        // Predicated region
        $region21: #{tpu_custom_call.1} parent=11 // pred_check
          %p193 = pneg %p109
        $region22: #{tpu_custom_call.1} parent=11 // pred_check_branch
          %195 = sbr.rel (%p193) target = $region24
        $region23: #{tpu_custom_call.1} parent=11 // pred_region
          %s197 = ssub.s32 16, 16
          %198 = vsyncadd [#allocation9], %s197
          %s200 = sshll.u32 %s3, 4
          %s201 = int_to_ptr.vmem [resolvable:$true] %s200
          %203 = dma.vmem_to_smem %s201, 16, [#allocation10], [#allocation9]
        $region24: #{tpu_custom_call.1} parent=11 // pred_fallthru
          _
        // Predicated region
        $region25: #{tpu_custom_call.1} parent=11 // pred_check
          %p204 = pneg %p130
        $region26: #{tpu_custom_call.1} parent=11 // pred_check_branch
          %206 = sbr.rel (%p204) target = $region28
        $region27: #{tpu_custom_call.1} parent=11 // pred_region
          _
        $region28: #{tpu_custom_call.1} parent=11 // pred_fallthru
          _
      $region12: #{tpu_custom_call.1} parent=5 // pred_fallthru
        _
      %p207 = scmp.lt.s32.totalorder %s20, 2
      // Predicated region
      $region29: #{tpu_custom_call.1} parent=5 // pred_check
        %p208 = pneg %p207
      $region30: #{tpu_custom_call.1} parent=5 // pred_check_branch
        %210 = sbr.rel (%p208) target = $region32
      $region31: #{tpu_custom_call.1} parent=5 // pred_region
        // Predicated region
        $region33: #{tpu_custom_call.1} parent=31 // pred_check
          %p211 = pneg %p40
        $region34: #{tpu_custom_call.1} parent=31 // pred_check_branch
          %213 = sbr.rel (%p211) target = $region36
        $region35: #{tpu_custom_call.1} parent=31 // pred_region
          %s214 = sand.u32 %s30, 1
          %s215 = scalar_lea.sflag [#allocation4], %s214
          %s216 = sand.u32 %s30, 1
          %s217 = smul.addr %s216, 8
          %s218 = scalar_lea.vmem [#allocation3], %s217
          %s220 = ssub.s32 128, 128
          %221 = vsyncadd %s215, %s220
          %s222 = smul.addr %s20, 128
          %s223 = scalar_lea.hbm %s0, %s222
          %s225 = sshll.u32 %s218, 4
          %s226 = int_to_ptr.vmem [resolvable:$true] %s225
          %228 = dma.hbm_to_vmem [thread:$0]  %s223, 128, %s226, %s215
        $region36: #{tpu_custom_call.1} parent=31 // pred_fallthru
          _
      $region32: #{tpu_custom_call.1} parent=5 // pred_fallthru
        _
      %p229 = scmp.le.s32.totalorder 1, %s20
      %p230 = scmp.lt.s32.totalorder %s20, 3
      %p231 = pnand %p229, %p230
      %p232 = pneg %p231
      // Predicated region
      $region37: #{tpu_custom_call.1} parent=5 // pred_check
        _
      $region38: #{tpu_custom_call.1} parent=5 // pred_check_branch
        %234 = sbr.rel (%p231) target = $region40
      $region39: #{tpu_custom_call.1} parent=5 // pred_region
        %s235 = ssub.s32 %s20, 1
        %s236 = sand.u32 %s33, 1
        %s237 = scalar_lea.sflag [#allocation4], %s236
        %s238 = sand.u32 %s33, 1
        %s239 = smul.addr %s238, 8
        %s240 = scalar_lea.vmem [#allocation3], %s239
        // Predicated region
        $region41: #{tpu_custom_call.1} parent=39 // pred_check
          %p241 = pneg %p46
        $region42: #{tpu_custom_call.1} parent=39 // pred_check_branch
          %243 = sbr.rel (%p241) target = $region44
        $region43: #{tpu_custom_call.1} parent=39 // pred_region
          %244 = dma.done %s237, 128
        $region44: #{tpu_custom_call.1} parent=39 // pred_fallthru
          _
        // Predicated region
        $region45: #{tpu_custom_call.1} parent=39 // pred_check
          %p245 = pneg %p67
        $region46: #{tpu_custom_call.1} parent=39 // pred_check_branch
          %247 = sbr.rel (%p245) target = $region48
        $region47: #{tpu_custom_call.1} parent=39 // pred_region
          %248 = dma.done [#allocation6], 16
        $region48: #{tpu_custom_call.1} parent=39 // pred_fallthru
          _
        // Predicated region
        $region49: #{tpu_custom_call.1} parent=39 // pred_check
          %p249 = pneg %p88
        $region50: #{tpu_custom_call.1} parent=39 // pred_check_branch
          %251 = sbr.rel (%p249) target = $region52
        $region51: #{tpu_custom_call.1} parent=39 // pred_region
          %252 = dma.done [#allocation9], 16
        $region52: #{tpu_custom_call.1} parent=39 // pred_fallthru
          _
        // Predicated region
        $region53: #{tpu_custom_call.1} parent=39 // pred_check
          %p253 = pneg %p109
        $region54: #{tpu_custom_call.1} parent=39 // pred_check_branch
          %255 = sbr.rel (%p253) target = $region56
        $region55: #{tpu_custom_call.1} parent=39 // pred_region
          %256 = dma.done [#allocation9], 16
        $region56: #{tpu_custom_call.1} parent=39 // pred_fallthru
          _
        %257 = sfence
        %s258 = sand.u32 %s33, 1
        %s259 = scalar_lea.sflag [#allocation4], %s258
        %s260 = sand.u32 %s33, 1
        %s261 = smul.addr %s260, 8
        %s262 = scalar_lea.vmem [#allocation3], %s261
        %p263 = pneg %p46
        %p264 = pneg %p43
        %p265 = pneg %p67
        %p266 = pneg %p64
        %p267 = pneg %p88
        %p268 = pneg %p85
        %p269 = pneg %p109
        %p270 = pneg %p106
        %p271 = pneg %p130
        %p272 = pneg %p127
        %p273 = pneg %p156
        %p274 = pneg %p153
        %s275 = sand.u32 %s143, 1
        %s276 = scalar_lea.sflag [#allocation5], %s275
        %s277 = sand.u32 %s143, 1
        %s278 = smul.addr %s277, 8
        %s279 = scalar_lea.vmem [#allocation11], %s278
        %v280 = vld [vmem:[%s240] sm:$0xff]
        %s281 = sld [smem:[#allocation2]]
        %v282 = vstv %s281
        %v283 = vadd.f32 %v282, 0.0
        %s284 = sld [smem:[#allocation7]]
        %v285 = vstv %s284
        %v286 = vmul.f32 %v280, %v285
        %s287 = sld [smem:[#allocation8]]
        %v288 = vstv %s287
        %v289 = vadd.f32 %v286, %v288
        %v290 = vmin.f32 %v289, 0.0
        %v291 = vmul.f32 %v290, 1.442695
        %v292 = vpow.pop %v291
        %v293 = vsub.f32 %v292, 1.0
        %vm294 = vcmp.gt.f32.partialorder %v289, 0.0
        %v295 = vsel %vm294, %v289, %v293
        %s296 = sld [smem:[#allocation10]]
        %v297 = vstv %s296
        %v298 = vmul.f32 %v297, %v295
        %v299 = vadd.f32 %v283, %v298
        %s300 = sld [smem:[#allocation7 + $0x1]]
        %v301 = vstv %s300
        %v302 = vmul.f32 %v280, %v301
        %s303 = sld [smem:[#allocation8 + $0x1]]
        %v304 = vstv %s303
        %v305 = vadd.f32 %v302, %v304
        %v306 = vmin.f32 %v305, 0.0
        %v307 = vmul.f32 %v306, 1.442695
        %v308 = vpow.pop %v307
        %v309 = vsub.f32 %v308, 1.0
        %vm310 = vcmp.gt.f32.partialorder %v305, 0.0
        %v311 = vsel %vm310, %v305, %v309
        %s312 = sld [smem:[#allocation10 + $0x1]]
        %v313 = vstv %s312
        %v314 = vmul.f32 %v313, %v311
        %v315 = vadd.f32 %v299, %v314
        %s316 = sld [smem:[#allocation7 + $0x2]]
        %v317 = vstv %s316
        %v318 = vmul.f32 %v280, %v317
        %s319 = sld [smem:[#allocation8 + $0x2]]
        %v320 = vstv %s319
        %v321 = vadd.f32 %v318, %v320
        %v322 = vmin.f32 %v321, 0.0
        %v323 = vmul.f32 %v322, 1.442695
        %v324 = vpow.pop %v323
        %v325 = vsub.f32 %v324, 1.0
        %vm326 = vcmp.gt.f32.partialorder %v321, 0.0
        %v327 = vsel %vm326, %v321, %v325
        %s328 = sld [smem:[#allocation10 + $0x2]]
        %v329 = vstv %s328
        %v330 = vmul.f32 %v329, %v327
        %v331 = vadd.f32 %v315, %v330
        %s332 = sld [smem:[#allocation7 + $0x3]]
        %v333 = vstv %s332
        %v334 = vmul.f32 %v280, %v333
        %s335 = sld [smem:[#allocation8 + $0x3]]
        %v336 = vstv %s335
        %v337 = vadd.f32 %v334, %v336
        %v338 = vmin.f32 %v337, 0.0
        %v339 = vmul.f32 %v338, 1.442695
        %v340 = vpow.pop %v339
        %v341 = vsub.f32 %v340, 1.0
        %vm342 = vcmp.gt.f32.partialorder %v337, 0.0
        %v343 = vsel %vm342, %v337, %v341
        %s344 = sld [smem:[#allocation10 + $0x3]]
        %v345 = vstv %s344
        %v346 = vmul.f32 %v345, %v343
        %v347 = vadd.f32 %v331, %v346
        %s348 = sld [smem:[#allocation7 + $0x4]]
        %v349 = vstv %s348
        %v350 = vmul.f32 %v280, %v349
        %s351 = sld [smem:[#allocation8 + $0x4]]
        %v352 = vstv %s351
        %v353 = vadd.f32 %v350, %v352
        %v354 = vmin.f32 %v353, 0.0
        %v355 = vmul.f32 %v354, 1.442695
        %v356 = vpow.pop %v355
        %v357 = vsub.f32 %v356, 1.0
        %vm358 = vcmp.gt.f32.partialorder %v353, 0.0
        %v359 = vsel %vm358, %v353, %v357
        %s360 = sld [smem:[#allocation10 + $0x4]]
        %v361 = vstv %s360
        %v362 = vmul.f32 %v361, %v359
        %v363 = vadd.f32 %v347, %v362
        %s364 = sld [smem:[#allocation7 + $0x5]]
        %v365 = vstv %s364
        %v366 = vmul.f32 %v280, %v365
        %s367 = sld [smem:[#allocation8 + $0x5]]
        %v368 = vstv %s367
        %v369 = vadd.f32 %v366, %v368
        %v370 = vmin.f32 %v369, 0.0
        %v371 = vmul.f32 %v370, 1.442695
        %v372 = vpow.pop %v371
        %v373 = vsub.f32 %v372, 1.0
        %vm374 = vcmp.gt.f32.partialorder %v369, 0.0
        %v375 = vsel %vm374, %v369, %v373
        %s376 = sld [smem:[#allocation10 + $0x5]]
        %v377 = vstv %s376
        %v378 = vmul.f32 %v377, %v375
        %v379 = vadd.f32 %v363, %v378
        %s380 = sld [smem:[#allocation7 + $0x6]]
        %v381 = vstv %s380
        %v382 = vmul.f32 %v280, %v381
        %s383 = sld [smem:[#allocation8 + $0x6]]
        %v384 = vstv %s383
        %v385 = vadd.f32 %v382, %v384
        %v386 = vmin.f32 %v385, 0.0
        %v387 = vmul.f32 %v386, 1.442695
        %v388 = vpow.pop %v387
        %v389 = vsub.f32 %v388, 1.0
        %vm390 = vcmp.gt.f32.partialorder %v385, 0.0
        %v391 = vsel %vm390, %v385, %v389
        %s392 = sld [smem:[#allocation10 + $0x6]]
        %v393 = vstv %s392
        %v394 = vmul.f32 %v393, %v391
        %v395 = vadd.f32 %v379, %v394
        %s396 = sld [smem:[#allocation7 + $0x7]]
        %v397 = vstv %s396
        %v398 = vmul.f32 %v280, %v397
        %s399 = sld [smem:[#allocation8 + $0x7]]
        %v400 = vstv %s399
        %v401 = vadd.f32 %v398, %v400
        %v402 = vmin.f32 %v401, 0.0
        %v403 = vmul.f32 %v402, 1.442695
        %v404 = vpow.pop %v403
        %v405 = vsub.f32 %v404, 1.0
        %vm406 = vcmp.gt.f32.partialorder %v401, 0.0
        %v407 = vsel %vm406, %v401, %v405
        %s408 = sld [smem:[#allocation10 + $0x7]]
        %v409 = vstv %s408
        %v410 = vmul.f32 %v409, %v407
        %v411 = vadd.f32 %v395, %v410
        %s412 = sld [smem:[#allocation7 + $0x8]]
        %v413 = vstv %s412
        %v414 = vmul.f32 %v280, %v413
        %s415 = sld [smem:[#allocation8 + $0x8]]
        %v416 = vstv %s415
        %v417 = vadd.f32 %v414, %v416
        %v418 = vmin.f32 %v417, 0.0
        %v419 = vmul.f32 %v418, 1.442695
        %v420 = vpow.pop %v419
        %v421 = vsub.f32 %v420, 1.0
        %vm422 = vcmp.gt.f32.partialorder %v417, 0.0
        %v423 = vsel %vm422, %v417, %v421
        %s424 = sld [smem:[#allocation10 + $0x8]]
        %v425 = vstv %s424
        %v426 = vmul.f32 %v425, %v423
        %v427 = vadd.f32 %v411, %v426
        %s428 = sld [smem:[#allocation7 + $0x9]]
        %v429 = vstv %s428
        %v430 = vmul.f32 %v280, %v429
        %s431 = sld [smem:[#allocation8 + $0x9]]
        %v432 = vstv %s431
        %v433 = vadd.f32 %v430, %v432
        %v434 = vmin.f32 %v433, 0.0
        %v435 = vmul.f32 %v434, 1.442695
        %v436 = vpow.pop %v435
        %v437 = vsub.f32 %v436, 1.0
        %vm438 = vcmp.gt.f32.partialorder %v433, 0.0
        %v439 = vsel %vm438, %v433, %v437
        %s440 = sld [smem:[#allocation10 + $0x9]]
        %v441 = vstv %s440
        %v442 = vmul.f32 %v441, %v439
        %v443 = vadd.f32 %v427, %v442
        %s444 = sld [smem:[#allocation7 + $0xa]]
        %v445 = vstv %s444
        %v446 = vmul.f32 %v280, %v445
        %s447 = sld [smem:[#allocation8 + $0xa]]
        %v448 = vstv %s447
        %v449 = vadd.f32 %v446, %v448
        %v450 = vmin.f32 %v449, 0.0
        %v451 = vmul.f32 %v450, 1.442695
        %v452 = vpow.pop %v451
        %v453 = vsub.f32 %v452, 1.0
        %vm454 = vcmp.gt.f32.partialorder %v449, 0.0
        %v455 = vsel %vm454, %v449, %v453
        %s456 = sld [smem:[#allocation10 + $0xa]]
        %v457 = vstv %s456
        %v458 = vmul.f32 %v457, %v455
        %v459 = vadd.f32 %v443, %v458
        %s460 = sld [smem:[#allocation7 + $0xb]]
        %v461 = vstv %s460
        %v462 = vmul.f32 %v280, %v461
        %s463 = sld [smem:[#allocation8 + $0xb]]
        %v464 = vstv %s463
        %v465 = vadd.f32 %v462, %v464
        %v466 = vmin.f32 %v465, 0.0
        %v467 = vmul.f32 %v466, 1.442695
        %v468 = vpow.pop %v467
        %v469 = vsub.f32 %v468, 1.0
        %vm470 = vcmp.gt.f32.partialorder %v465, 0.0
        %v471 = vsel %vm470, %v465, %v469
        %s472 = sld [smem:[#allocation10 + $0xb]]
        %v473 = vstv %s472
        %v474 = vmul.f32 %v473, %v471
        %v475 = vadd.f32 %v459, %v474
        %s476 = sld [smem:[#allocation7 + $0xc]]
        %v477 = vstv %s476
        %v478 = vmul.f32 %v280, %v477
        %s479 = sld [smem:[#allocation8 + $0xc]]
        %v480 = vstv %s479
        %v481 = vadd.f32 %v478, %v480
        %v482 = vmin.f32 %v481, 0.0
        %v483 = vmul.f32 %v482, 1.442695
        %v484 = vpow.pop %v483
        %v485 = vsub.f32 %v484, 1.0
        %vm486 = vcmp.gt.f32.partialorder %v481, 0.0
        %v487 = vsel %vm486, %v481, %v485
        %s488 = sld [smem:[#allocation10 + $0xc]]
        %v489 = vstv %s488
        %v490 = vmul.f32 %v489, %v487
        %v491 = vadd.f32 %v475, %v490
        %s492 = sld [smem:[#allocation7 + $0xd]]
        %v493 = vstv %s492
        %v494 = vmul.f32 %v280, %v493
        %s495 = sld [smem:[#allocation8 + $0xd]]
        %v496 = vstv %s495
        %v497 = vadd.f32 %v494, %v496
        %v498 = vmin.f32 %v497, 0.0
        %v499 = vmul.f32 %v498, 1.442695
        %v500 = vpow.pop %v499
        %v501 = vsub.f32 %v500, 1.0
        %vm502 = vcmp.gt.f32.partialorder %v497, 0.0
        %v503 = vsel %vm502, %v497, %v501
        %s504 = sld [smem:[#allocation10 + $0xd]]
        %v505 = vstv %s504
        %v506 = vmul.f32 %v505, %v503
        %v507 = vadd.f32 %v491, %v506
        %s508 = sld [smem:[#allocation7 + $0xe]]
        %v509 = vstv %s508
        %v510 = vmul.f32 %v280, %v509
        %s511 = sld [smem:[#allocation8 + $0xe]]
        %v512 = vstv %s511
        %v513 = vadd.f32 %v510, %v512
        %v514 = vmin.f32 %v513, 0.0
        %v515 = vmul.f32 %v514, 1.442695
        %v516 = vpow.pop %v515
        %v517 = vsub.f32 %v516, 1.0
        %vm518 = vcmp.gt.f32.partialorder %v513, 0.0
        %v519 = vsel %vm518, %v513, %v517
        %s520 = sld [smem:[#allocation10 + $0xe]]
        %v521 = vstv %s520
        %v522 = vmul.f32 %v521, %v519
        %v523 = vadd.f32 %v507, %v522
        %s524 = sld [smem:[#allocation7 + $0xf]]
        %v525 = vstv %s524
        %v526 = vmul.f32 %v280, %v525
        %s527 = sld [smem:[#allocation8 + $0xf]]
        %v528 = vstv %s527
        %v529 = vadd.f32 %v526, %v528
        %v530 = vmin.f32 %v529, 0.0
        %v531 = vmul.f32 %v530, 1.442695
        %v532 = vpow.pop %v531
        %v533 = vsub.f32 %v532, 1.0
        %vm534 = vcmp.gt.f32.partialorder %v529, 0.0
        %v535 = vsel %vm534, %v529, %v533
        %s536 = sld [smem:[#allocation10 + $0xf]]
        %v537 = vstv %s536
        %v538 = vmul.f32 %v537, %v535
        %v539 = vadd.f32 %v523, %v538
        %s540 = sld [smem:[#allocation7 + $0x10]]
        %v541 = vstv %s540
        %v542 = vmul.f32 %v280, %v541
        %s543 = sld [smem:[#allocation8 + $0x10]]
        %v544 = vstv %s543
        %v545 = vadd.f32 %v542, %v544
        %v546 = vmin.f32 %v545, 0.0
        %v547 = vmul.f32 %v546, 1.442695
        %v548 = vpow.pop %v547
        %v549 = vsub.f32 %v548, 1.0
        %vm550 = vcmp.gt.f32.partialorder %v545, 0.0
        %v551 = vsel %vm550, %v545, %v549
        %s552 = sld [smem:[#allocation10 + $0x10]]
        %v553 = vstv %s552
        %v554 = vmul.f32 %v553, %v551
        %v555 = vadd.f32 %v539, %v554
        %s556 = sld [smem:[#allocation7 + $0x11]]
        %v557 = vstv %s556
        %v558 = vmul.f32 %v280, %v557
        %s559 = sld [smem:[#allocation8 + $0x11]]
        %v560 = vstv %s559
        %v561 = vadd.f32 %v558, %v560
        %v562 = vmin.f32 %v561, 0.0
        %v563 = vmul.f32 %v562, 1.442695
        %v564 = vpow.pop %v563
        %v565 = vsub.f32 %v564, 1.0
        %vm566 = vcmp.gt.f32.partialorder %v561, 0.0
        %v567 = vsel %vm566, %v561, %v565
        %s568 = sld [smem:[#allocation10 + $0x11]]
        %v569 = vstv %s568
        %v570 = vmul.f32 %v569, %v567
        %v571 = vadd.f32 %v555, %v570
        %s572 = sld [smem:[#allocation7 + $0x12]]
        %v573 = vstv %s572
        %v574 = vmul.f32 %v280, %v573
        %s575 = sld [smem:[#allocation8 + $0x12]]
        %v576 = vstv %s575
        %v577 = vadd.f32 %v574, %v576
        %v578 = vmin.f32 %v577, 0.0
        %v579 = vmul.f32 %v578, 1.442695
        %v580 = vpow.pop %v579
        %v581 = vsub.f32 %v580, 1.0
        %vm582 = vcmp.gt.f32.partialorder %v577, 0.0
        %v583 = vsel %vm582, %v577, %v581
        %s584 = sld [smem:[#allocation10 + $0x12]]
        %v585 = vstv %s584
        %v586 = vmul.f32 %v585, %v583
        %v587 = vadd.f32 %v571, %v586
        %s588 = sld [smem:[#allocation7 + $0x13]]
        %v589 = vstv %s588
        %v590 = vmul.f32 %v280, %v589
        %s591 = sld [smem:[#allocation8 + $0x13]]
        %v592 = vstv %s591
        %v593 = vadd.f32 %v590, %v592
        %v594 = vmin.f32 %v593, 0.0
        %v595 = vmul.f32 %v594, 1.442695
        %v596 = vpow.pop %v595
        %v597 = vsub.f32 %v596, 1.0
        %vm598 = vcmp.gt.f32.partialorder %v593, 0.0
        %v599 = vsel %vm598, %v593, %v597
        %s600 = sld [smem:[#allocation10 + $0x13]]
        %v601 = vstv %s600
        %v602 = vmul.f32 %v601, %v599
        %v603 = vadd.f32 %v587, %v602
        %s604 = sld [smem:[#allocation7 + $0x14]]
        %v605 = vstv %s604
        %v606 = vmul.f32 %v280, %v605
        %s607 = sld [smem:[#allocation8 + $0x14]]
        %v608 = vstv %s607
        %v609 = vadd.f32 %v606, %v608
        %v610 = vmin.f32 %v609, 0.0
        %v611 = vmul.f32 %v610, 1.442695
        %v612 = vpow.pop %v611
        %v613 = vsub.f32 %v612, 1.0
        %vm614 = vcmp.gt.f32.partialorder %v609, 0.0
        %v615 = vsel %vm614, %v609, %v613
        %s616 = sld [smem:[#allocation10 + $0x14]]
        %v617 = vstv %s616
        %v618 = vmul.f32 %v617, %v615
        %v619 = vadd.f32 %v603, %v618
        %s620 = sld [smem:[#allocation7 + $0x15]]
        %v621 = vstv %s620
        %v622 = vmul.f32 %v280, %v621
        %s623 = sld [smem:[#allocation8 + $0x15]]
        %v624 = vstv %s623
        %v625 = vadd.f32 %v622, %v624
        %v626 = vmin.f32 %v625, 0.0
        %v627 = vmul.f32 %v626, 1.442695
        %v628 = vpow.pop %v627
        %v629 = vsub.f32 %v628, 1.0
        %vm630 = vcmp.gt.f32.partialorder %v625, 0.0
        %v631 = vsel %vm630, %v625, %v629
        %s632 = sld [smem:[#allocation10 + $0x15]]
        %v633 = vstv %s632
        %v634 = vmul.f32 %v633, %v631
        %v635 = vadd.f32 %v619, %v634
        %s636 = sld [smem:[#allocation7 + $0x16]]
        %v637 = vstv %s636
        %v638 = vmul.f32 %v280, %v637
        %s639 = sld [smem:[#allocation8 + $0x16]]
        %v640 = vstv %s639
        %v641 = vadd.f32 %v638, %v640
        %v642 = vmin.f32 %v641, 0.0
        %v643 = vmul.f32 %v642, 1.442695
        %v644 = vpow.pop %v643
        %v645 = vsub.f32 %v644, 1.0
        %vm646 = vcmp.gt.f32.partialorder %v641, 0.0
        %v647 = vsel %vm646, %v641, %v645
        %s648 = sld [smem:[#allocation10 + $0x16]]
        %v649 = vstv %s648
        %v650 = vmul.f32 %v649, %v647
        %v651 = vadd.f32 %v635, %v650
        %s652 = sld [smem:[#allocation7 + $0x17]]
        %v653 = vstv %s652
        %v654 = vmul.f32 %v280, %v653
        %s655 = sld [smem:[#allocation8 + $0x17]]
        %v656 = vstv %s655
        %v657 = vadd.f32 %v654, %v656
        %v658 = vmin.f32 %v657, 0.0
        %v659 = vmul.f32 %v658, 1.442695
        %v660 = vpow.pop %v659
        %v661 = vsub.f32 %v660, 1.0
        %vm662 = vcmp.gt.f32.partialorder %v657, 0.0
        %v663 = vsel %vm662, %v657, %v661
        %s664 = sld [smem:[#allocation10 + $0x17]]
        %v665 = vstv %s664
        %v666 = vmul.f32 %v665, %v663
        %v667 = vadd.f32 %v651, %v666
        %s668 = sld [smem:[#allocation7 + $0x18]]
        %v669 = vstv %s668
        %v670 = vmul.f32 %v280, %v669
        %s671 = sld [smem:[#allocation8 + $0x18]]
        %v672 = vstv %s671
        %v673 = vadd.f32 %v670, %v672
        %v674 = vmin.f32 %v673, 0.0
        %v675 = vmul.f32 %v674, 1.442695
        %v676 = vpow.pop %v675
        %v677 = vsub.f32 %v676, 1.0
        %vm678 = vcmp.gt.f32.partialorder %v673, 0.0
        %v679 = vsel %vm678, %v673, %v677
        %s680 = sld [smem:[#allocation10 + $0x18]]
        %v681 = vstv %s680
        %v682 = vmul.f32 %v681, %v679
        %v683 = vadd.f32 %v667, %v682
        %s684 = sld [smem:[#allocation7 + $0x19]]
        %v685 = vstv %s684
        %v686 = vmul.f32 %v280, %v685
        %s687 = sld [smem:[#allocation8 + $0x19]]
        %v688 = vstv %s687
        %v689 = vadd.f32 %v686, %v688
        %v690 = vmin.f32 %v689, 0.0
        %v691 = vmul.f32 %v690, 1.442695
        %v692 = vpow.pop %v691
        %v693 = vsub.f32 %v692, 1.0
        %vm694 = vcmp.gt.f32.partialorder %v689, 0.0
        %v695 = vsel %vm694, %v689, %v693
        %s696 = sld [smem:[#allocation10 + $0x19]]
        %v697 = vstv %s696
        %v698 = vmul.f32 %v697, %v695
        %v699 = vadd.f32 %v683, %v698
        %s700 = sld [smem:[#allocation7 + $0x1a]]
        %v701 = vstv %s700
        %v702 = vmul.f32 %v280, %v701
        %s703 = sld [smem:[#allocation8 + $0x1a]]
        %v704 = vstv %s703
        %v705 = vadd.f32 %v702, %v704
        %v706 = vmin.f32 %v705, 0.0
        %v707 = vmul.f32 %v706, 1.442695
        %v708 = vpow.pop %v707
        %v709 = vsub.f32 %v708, 1.0
        %vm710 = vcmp.gt.f32.partialorder %v705, 0.0
        %v711 = vsel %vm710, %v705, %v709
        %s712 = sld [smem:[#allocation10 + $0x1a]]
        %v713 = vstv %s712
        %v714 = vmul.f32 %v713, %v711
        %v715 = vadd.f32 %v699, %v714
        %s716 = sld [smem:[#allocation7 + $0x1b]]
        %v717 = vstv %s716
        %v718 = vmul.f32 %v280, %v717
        %s719 = sld [smem:[#allocation8 + $0x1b]]
        %v720 = vstv %s719
        %v721 = vadd.f32 %v718, %v720
        %v722 = vmin.f32 %v721, 0.0
        %v723 = vmul.f32 %v722, 1.442695
        %v724 = vpow.pop %v723
        %v725 = vsub.f32 %v724, 1.0
        %vm726 = vcmp.gt.f32.partialorder %v721, 0.0
        %v727 = vsel %vm726, %v721, %v725
        %s728 = sld [smem:[#allocation10 + $0x1b]]
        %v729 = vstv %s728
        %v730 = vmul.f32 %v729, %v727
        %v731 = vadd.f32 %v715, %v730
        %s732 = sld [smem:[#allocation7 + $0x1c]]
        %v733 = vstv %s732
        %v734 = vmul.f32 %v280, %v733
        %s735 = sld [smem:[#allocation8 + $0x1c]]
        %v736 = vstv %s735
        %v737 = vadd.f32 %v734, %v736
        %v738 = vmin.f32 %v737, 0.0
        %v739 = vmul.f32 %v738, 1.442695
        %v740 = vpow.pop %v739
        %v741 = vsub.f32 %v740, 1.0
        %vm742 = vcmp.gt.f32.partialorder %v737, 0.0
        %v743 = vsel %vm742, %v737, %v741
        %s744 = sld [smem:[#allocation10 + $0x1c]]
        %v745 = vstv %s744
        %v746 = vmul.f32 %v745, %v743
        %v747 = vadd.f32 %v731, %v746
        %s748 = sld [smem:[#allocation7 + $0x1d]]
        %v749 = vstv %s748
        %v750 = vmul.f32 %v280, %v749
        %s751 = sld [smem:[#allocation8 + $0x1d]]
        %v752 = vstv %s751
        %v753 = vadd.f32 %v750, %v752
        %v754 = vmin.f32 %v753, 0.0
        %v755 = vmul.f32 %v754, 1.442695
        %v756 = vpow.pop %v755
        %v757 = vsub.f32 %v756, 1.0
        %vm758 = vcmp.gt.f32.partialorder %v753, 0.0
        %v759 = vsel %vm758, %v753, %v757
        %s760 = sld [smem:[#allocation10 + $0x1d]]
        %v761 = vstv %s760
        %v762 = vmul.f32 %v761, %v759
        %v763 = vadd.f32 %v747, %v762
        %s764 = sld [smem:[#allocation7 + $0x1e]]
        %v765 = vstv %s764
        %v766 = vmul.f32 %v280, %v765
        %s767 = sld [smem:[#allocation8 + $0x1e]]
        %v768 = vstv %s767
        %v769 = vadd.f32 %v766, %v768
        %v770 = vmin.f32 %v769, 0.0
        %v771 = vmul.f32 %v770, 1.442695
        %v772 = vpow.pop %v771
        %v773 = vsub.f32 %v772, 1.0
        %vm774 = vcmp.gt.f32.partialorder %v769, 0.0
        %v775 = vsel %vm774, %v769, %v773
        %s776 = sld [smem:[#allocation10 + $0x1e]]
        %v777 = vstv %s776
        %v778 = vmul.f32 %v777, %v775
        %v779 = vadd.f32 %v763, %v778
        %s780 = sld [smem:[#allocation7 + $0x1f]]
        %v781 = vstv %s780
        %v782 = vmul.f32 %v280, %v781
        %s783 = sld [smem:[#allocation8 + $0x1f]]
        %v784 = vstv %s783
        %v785 = vadd.f32 %v782, %v784
        %v786 = vmin.f32 %v785, 0.0
        %v787 = vmul.f32 %v786, 1.442695
        %v788 = vpow.pop %v787
        %v789 = vsub.f32 %v788, 1.0
        %vm790 = vcmp.gt.f32.partialorder %v785, 0.0
        %v791 = vsel %vm790, %v785, %v789
        %s792 = sld [smem:[#allocation10 + $0x1f]]
        %v793 = vstv %s792
        %v794 = vmul.f32 %v793, %v791
        %v795 = vadd.f32 %v779, %v794
        %s796 = sld [smem:[#allocation7 + $0x20]]
        %v797 = vstv %s796
        %v798 = vmul.f32 %v280, %v797
        %s799 = sld [smem:[#allocation8 + $0x20]]
        %v800 = vstv %s799
        %v801 = vadd.f32 %v798, %v800
        %v802 = vmin.f32 %v801, 0.0
        %v803 = vmul.f32 %v802, 1.442695
        %v804 = vpow.pop %v803
        %v805 = vsub.f32 %v804, 1.0
        %vm806 = vcmp.gt.f32.partialorder %v801, 0.0
        %v807 = vsel %vm806, %v801, %v805
        %s808 = sld [smem:[#allocation10 + $0x20]]
        %v809 = vstv %s808
        %v810 = vmul.f32 %v809, %v807
        %v811 = vadd.f32 %v795, %v810
        %s812 = sld [smem:[#allocation7 + $0x21]]
        %v813 = vstv %s812
        %v814 = vmul.f32 %v280, %v813
        %s815 = sld [smem:[#allocation8 + $0x21]]
        %v816 = vstv %s815
        %v817 = vadd.f32 %v814, %v816
        %v818 = vmin.f32 %v817, 0.0
        %v819 = vmul.f32 %v818, 1.442695
        %v820 = vpow.pop %v819
        %v821 = vsub.f32 %v820, 1.0
        %vm822 = vcmp.gt.f32.partialorder %v817, 0.0
        %v823 = vsel %vm822, %v817, %v821
        %s824 = sld [smem:[#allocation10 + $0x21]]
        %v825 = vstv %s824
        %v826 = vmul.f32 %v825, %v823
        %v827 = vadd.f32 %v811, %v826
        %s828 = sld [smem:[#allocation7 + $0x22]]
        %v829 = vstv %s828
        %v830 = vmul.f32 %v280, %v829
        %s831 = sld [smem:[#allocation8 + $0x22]]
        %v832 = vstv %s831
        %v833 = vadd.f32 %v830, %v832
        %v834 = vmin.f32 %v833, 0.0
        %v835 = vmul.f32 %v834, 1.442695
        %v836 = vpow.pop %v835
        %v837 = vsub.f32 %v836, 1.0
        %vm838 = vcmp.gt.f32.partialorder %v833, 0.0
        %v839 = vsel %vm838, %v833, %v837
        %s840 = sld [smem:[#allocation10 + $0x22]]
        %v841 = vstv %s840
        %v842 = vmul.f32 %v841, %v839
        %v843 = vadd.f32 %v827, %v842
        %s844 = sld [smem:[#allocation7 + $0x23]]
        %v845 = vstv %s844
        %v846 = vmul.f32 %v280, %v845
        %s847 = sld [smem:[#allocation8 + $0x23]]
        %v848 = vstv %s847
        %v849 = vadd.f32 %v846, %v848
        %v850 = vmin.f32 %v849, 0.0
        %v851 = vmul.f32 %v850, 1.442695
        %v852 = vpow.pop %v851
        %v853 = vsub.f32 %v852, 1.0
        %vm854 = vcmp.gt.f32.partialorder %v849, 0.0
        %v855 = vsel %vm854, %v849, %v853
        %s856 = sld [smem:[#allocation10 + $0x23]]
        %v857 = vstv %s856
        %v858 = vmul.f32 %v857, %v855
        %v859 = vadd.f32 %v843, %v858
        %s860 = sld [smem:[#allocation7 + $0x24]]
        %v861 = vstv %s860
        %v862 = vmul.f32 %v280, %v861
        %s863 = sld [smem:[#allocation8 + $0x24]]
        %v864 = vstv %s863
        %v865 = vadd.f32 %v862, %v864
        %v866 = vmin.f32 %v865, 0.0
        %v867 = vmul.f32 %v866, 1.442695
        %v868 = vpow.pop %v867
        %v869 = vsub.f32 %v868, 1.0
        %vm870 = vcmp.gt.f32.partialorder %v865, 0.0
        %v871 = vsel %vm870, %v865, %v869
        %s872 = sld [smem:[#allocation10 + $0x24]]
        %v873 = vstv %s872
        %v874 = vmul.f32 %v873, %v871
        %v875 = vadd.f32 %v859, %v874
        %s876 = sld [smem:[#allocation7 + $0x25]]
        %v877 = vstv %s876
        %v878 = vmul.f32 %v280, %v877
        %s879 = sld [smem:[#allocation8 + $0x25]]
        %v880 = vstv %s879
        %v881 = vadd.f32 %v878, %v880
        %v882 = vmin.f32 %v881, 0.0
        %v883 = vmul.f32 %v882, 1.442695
        %v884 = vpow.pop %v883
        %v885 = vsub.f32 %v884, 1.0
        %vm886 = vcmp.gt.f32.partialorder %v881, 0.0
        %v887 = vsel %vm886, %v881, %v885
        %s888 = sld [smem:[#allocation10 + $0x25]]
        %v889 = vstv %s888
        %v890 = vmul.f32 %v889, %v887
        %v891 = vadd.f32 %v875, %v890
        %s892 = sld [smem:[#allocation7 + $0x26]]
        %v893 = vstv %s892
        %v894 = vmul.f32 %v280, %v893
        %s895 = sld [smem:[#allocation8 + $0x26]]
        %v896 = vstv %s895
        %v897 = vadd.f32 %v894, %v896
        %v898 = vmin.f32 %v897, 0.0
        %v899 = vmul.f32 %v898, 1.442695
        %v900 = vpow.pop %v899
        %v901 = vsub.f32 %v900, 1.0
        %vm902 = vcmp.gt.f32.partialorder %v897, 0.0
        %v903 = vsel %vm902, %v897, %v901
        %s904 = sld [smem:[#allocation10 + $0x26]]
        %v905 = vstv %s904
        %v906 = vmul.f32 %v905, %v903
        %v907 = vadd.f32 %v891, %v906
        %s908 = sld [smem:[#allocation7 + $0x27]]
        %v909 = vstv %s908
        %v910 = vmul.f32 %v280, %v909
        %s911 = sld [smem:[#allocation8 + $0x27]]
        %v912 = vstv %s911
        %v913 = vadd.f32 %v910, %v912
        %v914 = vmin.f32 %v913, 0.0
        %v915 = vmul.f32 %v914, 1.442695
        %v916 = vpow.pop %v915
        %v917 = vsub.f32 %v916, 1.0
        %vm918 = vcmp.gt.f32.partialorder %v913, 0.0
        %v919 = vsel %vm918, %v913, %v917
        %s920 = sld [smem:[#allocation10 + $0x27]]
        %v921 = vstv %s920
        %v922 = vmul.f32 %v921, %v919
        %v923 = vadd.f32 %v907, %v922
        %s924 = sld [smem:[#allocation7 + $0x28]]
        %v925 = vstv %s924
        %v926 = vmul.f32 %v280, %v925
        %s927 = sld [smem:[#allocation8 + $0x28]]
        %v928 = vstv %s927
        %v929 = vadd.f32 %v926, %v928
        %v930 = vmin.f32 %v929, 0.0
        %v931 = vmul.f32 %v930, 1.442695
        %v932 = vpow.pop %v931
        %v933 = vsub.f32 %v932, 1.0
        %vm934 = vcmp.gt.f32.partialorder %v929, 0.0
        %v935 = vsel %vm934, %v929, %v933
        %s936 = sld [smem:[#allocation10 + $0x28]]
        %v937 = vstv %s936
        %v938 = vmul.f32 %v937, %v935
        %v939 = vadd.f32 %v923, %v938
        %s940 = sld [smem:[#allocation7 + $0x29]]
        %v941 = vstv %s940
        %v942 = vmul.f32 %v280, %v941
        %s943 = sld [smem:[#allocation8 + $0x29]]
        %v944 = vstv %s943
        %v945 = vadd.f32 %v942, %v944
        %v946 = vmin.f32 %v945, 0.0
        %v947 = vmul.f32 %v946, 1.442695
        %v948 = vpow.pop %v947
        %v949 = vsub.f32 %v948, 1.0
        %vm950 = vcmp.gt.f32.partialorder %v945, 0.0
        %v951 = vsel %vm950, %v945, %v949
        %s952 = sld [smem:[#allocation10 + $0x29]]
        %v953 = vstv %s952
        %v954 = vmul.f32 %v953, %v951
        %v955 = vadd.f32 %v939, %v954
        %s956 = sld [smem:[#allocation7 + $0x2a]]
        %v957 = vstv %s956
        %v958 = vmul.f32 %v280, %v957
        %s959 = sld [smem:[#allocation8 + $0x2a]]
        %v960 = vstv %s959
        %v961 = vadd.f32 %v958, %v960
        %v962 = vmin.f32 %v961, 0.0
        %v963 = vmul.f32 %v962, 1.442695
        %v964 = vpow.pop %v963
        %v965 = vsub.f32 %v964, 1.0
        %vm966 = vcmp.gt.f32.partialorder %v961, 0.0
        %v967 = vsel %vm966, %v961, %v965
        %s968 = sld [smem:[#allocation10 + $0x2a]]
        %v969 = vstv %s968
        %v970 = vmul.f32 %v969, %v967
        %v971 = vadd.f32 %v955, %v970
        %s972 = sld [smem:[#allocation7 + $0x2b]]
        %v973 = vstv %s972
        %v974 = vmul.f32 %v280, %v973
        %s975 = sld [smem:[#allocation8 + $0x2b]]
        %v976 = vstv %s975
        %v977 = vadd.f32 %v974, %v976
        %v978 = vmin.f32 %v977, 0.0
        %v979 = vmul.f32 %v978, 1.442695
        %v980 = vpow.pop %v979
        %v981 = vsub.f32 %v980, 1.0
        %vm982 = vcmp.gt.f32.partialorder %v977, 0.0
        %v983 = vsel %vm982, %v977, %v981
        %s984 = sld [smem:[#allocation10 + $0x2b]]
        %v985 = vstv %s984
        %v986 = vmul.f32 %v985, %v983
        %v987 = vadd.f32 %v971, %v986
        %s988 = sld [smem:[#allocation7 + $0x2c]]
        %v989 = vstv %s988
        %v990 = vmul.f32 %v280, %v989
        %s991 = sld [smem:[#allocation8 + $0x2c]]
        %v992 = vstv %s991
        %v993 = vadd.f32 %v990, %v992
        %v994 = vmin.f32 %v993, 0.0
        %v995 = vmul.f32 %v994, 1.442695
        %v996 = vpow.pop %v995
        %v997 = vsub.f32 %v996, 1.0
        %vm998 = vcmp.gt.f32.partialorder %v993, 0.0
        %v999 = vsel %vm998, %v993, %v997
        %s1000 = sld [smem:[#allocation10 + $0x2c]]
        %v1001 = vstv %s1000
        %v1002 = vmul.f32 %v1001, %v999
        %v1003 = vadd.f32 %v987, %v1002
        %s1004 = sld [smem:[#allocation7 + $0x2d]]
        %v1005 = vstv %s1004
        %v1006 = vmul.f32 %v280, %v1005
        %s1007 = sld [smem:[#allocation8 + $0x2d]]
        %v1008 = vstv %s1007
        %v1009 = vadd.f32 %v1006, %v1008
        %v1010 = vmin.f32 %v1009, 0.0
        %v1011 = vmul.f32 %v1010, 1.442695
        %v1012 = vpow.pop %v1011
        %v1013 = vsub.f32 %v1012, 1.0
        %vm1014 = vcmp.gt.f32.partialorder %v1009, 0.0
        %v1015 = vsel %vm1014, %v1009, %v1013
        %s1016 = sld [smem:[#allocation10 + $0x2d]]
        %v1017 = vstv %s1016
        %v1018 = vmul.f32 %v1017, %v1015
        %v1019 = vadd.f32 %v1003, %v1018
        %s1020 = sld [smem:[#allocation7 + $0x2e]]
        %v1021 = vstv %s1020
        %v1022 = vmul.f32 %v280, %v1021
        %s1023 = sld [smem:[#allocation8 + $0x2e]]
        %v1024 = vstv %s1023
        %v1025 = vadd.f32 %v1022, %v1024
        %v1026 = vmin.f32 %v1025, 0.0
        %v1027 = vmul.f32 %v1026, 1.442695
        %v1028 = vpow.pop %v1027
        %v1029 = vsub.f32 %v1028, 1.0
        %vm1030 = vcmp.gt.f32.partialorder %v1025, 0.0
        %v1031 = vsel %vm1030, %v1025, %v1029
        %s1032 = sld [smem:[#allocation10 + $0x2e]]
        %v1033 = vstv %s1032
        %v1034 = vmul.f32 %v1033, %v1031
        %v1035 = vadd.f32 %v1019, %v1034
        %s1036 = sld [smem:[#allocation7 + $0x2f]]
        %v1037 = vstv %s1036
        %v1038 = vmul.f32 %v280, %v1037
        %s1039 = sld [smem:[#allocation8 + $0x2f]]
        %v1040 = vstv %s1039
        %v1041 = vadd.f32 %v1038, %v1040
        %v1042 = vmin.f32 %v1041, 0.0
        %v1043 = vmul.f32 %v1042, 1.442695
        %v1044 = vpow.pop %v1043
        %v1045 = vsub.f32 %v1044, 1.0
        %vm1046 = vcmp.gt.f32.partialorder %v1041, 0.0
        %v1047 = vsel %vm1046, %v1041, %v1045
        %s1048 = sld [smem:[#allocation10 + $0x2f]]
        %v1049 = vstv %s1048
        %v1050 = vmul.f32 %v1049, %v1047
        %v1051 = vadd.f32 %v1035, %v1050
        %s1052 = sld [smem:[#allocation7 + $0x30]]
        %v1053 = vstv %s1052
        %v1054 = vmul.f32 %v280, %v1053
        %s1055 = sld [smem:[#allocation8 + $0x30]]
        %v1056 = vstv %s1055
        %v1057 = vadd.f32 %v1054, %v1056
        %v1058 = vmin.f32 %v1057, 0.0
        %v1059 = vmul.f32 %v1058, 1.442695
        %v1060 = vpow.pop %v1059
        %v1061 = vsub.f32 %v1060, 1.0
        %vm1062 = vcmp.gt.f32.partialorder %v1057, 0.0
        %v1063 = vsel %vm1062, %v1057, %v1061
        %s1064 = sld [smem:[#allocation10 + $0x30]]
        %v1065 = vstv %s1064
        %v1066 = vmul.f32 %v1065, %v1063
        %v1067 = vadd.f32 %v1051, %v1066
        %s1068 = sld [smem:[#allocation7 + $0x31]]
        %v1069 = vstv %s1068
        %v1070 = vmul.f32 %v280, %v1069
        %s1071 = sld [smem:[#allocation8 + $0x31]]
        %v1072 = vstv %s1071
        %v1073 = vadd.f32 %v1070, %v1072
        %v1074 = vmin.f32 %v1073, 0.0
        %v1075 = vmul.f32 %v1074, 1.442695
        %v1076 = vpow.pop %v1075
        %v1077 = vsub.f32 %v1076, 1.0
        %vm1078 = vcmp.gt.f32.partialorder %v1073, 0.0
        %v1079 = vsel %vm1078, %v1073, %v1077
        %s1080 = sld [smem:[#allocation10 + $0x31]]
        %v1081 = vstv %s1080
        %v1082 = vmul.f32 %v1081, %v1079
        %v1083 = vadd.f32 %v1067, %v1082
        %s1084 = sld [smem:[#allocation7 + $0x32]]
        %v1085 = vstv %s1084
        %v1086 = vmul.f32 %v280, %v1085
        %s1087 = sld [smem:[#allocation8 + $0x32]]
        %v1088 = vstv %s1087
        %v1089 = vadd.f32 %v1086, %v1088
        %v1090 = vmin.f32 %v1089, 0.0
        %v1091 = vmul.f32 %v1090, 1.442695
        %v1092 = vpow.pop %v1091
        %v1093 = vsub.f32 %v1092, 1.0
        %vm1094 = vcmp.gt.f32.partialorder %v1089, 0.0
        %v1095 = vsel %vm1094, %v1089, %v1093
        %s1096 = sld [smem:[#allocation10 + $0x32]]
        %v1097 = vstv %s1096
        %v1098 = vmul.f32 %v1097, %v1095
        %v1099 = vadd.f32 %v1083, %v1098
        %s1100 = sld [smem:[#allocation7 + $0x33]]
        %v1101 = vstv %s1100
        %v1102 = vmul.f32 %v280, %v1101
        %s1103 = sld [smem:[#allocation8 + $0x33]]
        %v1104 = vstv %s1103
        %v1105 = vadd.f32 %v1102, %v1104
        %v1106 = vmin.f32 %v1105, 0.0
        %v1107 = vmul.f32 %v1106, 1.442695
        %v1108 = vpow.pop %v1107
        %v1109 = vsub.f32 %v1108, 1.0
        %vm1110 = vcmp.gt.f32.partialorder %v1105, 0.0
        %v1111 = vsel %vm1110, %v1105, %v1109
        %s1112 = sld [smem:[#allocation10 + $0x33]]
        %v1113 = vstv %s1112
        %v1114 = vmul.f32 %v1113, %v1111
        %v1115 = vadd.f32 %v1099, %v1114
        %s1116 = sld [smem:[#allocation7 + $0x34]]
        %v1117 = vstv %s1116
        %v1118 = vmul.f32 %v280, %v1117
        %s1119 = sld [smem:[#allocation8 + $0x34]]
        %v1120 = vstv %s1119
        %v1121 = vadd.f32 %v1118, %v1120
        %v1122 = vmin.f32 %v1121, 0.0
        %v1123 = vmul.f32 %v1122, 1.442695
        %v1124 = vpow.pop %v1123
        %v1125 = vsub.f32 %v1124, 1.0
        %vm1126 = vcmp.gt.f32.partialorder %v1121, 0.0
        %v1127 = vsel %vm1126, %v1121, %v1125
        %s1128 = sld [smem:[#allocation10 + $0x34]]
        %v1129 = vstv %s1128
        %v1130 = vmul.f32 %v1129, %v1127
        %v1131 = vadd.f32 %v1115, %v1130
        %s1132 = sld [smem:[#allocation7 + $0x35]]
        %v1133 = vstv %s1132
        %v1134 = vmul.f32 %v280, %v1133
        %s1135 = sld [smem:[#allocation8 + $0x35]]
        %v1136 = vstv %s1135
        %v1137 = vadd.f32 %v1134, %v1136
        %v1138 = vmin.f32 %v1137, 0.0
        %v1139 = vmul.f32 %v1138, 1.442695
        %v1140 = vpow.pop %v1139
        %v1141 = vsub.f32 %v1140, 1.0
        %vm1142 = vcmp.gt.f32.partialorder %v1137, 0.0
        %v1143 = vsel %vm1142, %v1137, %v1141
        %s1144 = sld [smem:[#allocation10 + $0x35]]
        %v1145 = vstv %s1144
        %v1146 = vmul.f32 %v1145, %v1143
        %v1147 = vadd.f32 %v1131, %v1146
        %s1148 = sld [smem:[#allocation7 + $0x36]]
        %v1149 = vstv %s1148
        %v1150 = vmul.f32 %v280, %v1149
        %s1151 = sld [smem:[#allocation8 + $0x36]]
        %v1152 = vstv %s1151
        %v1153 = vadd.f32 %v1150, %v1152
        %v1154 = vmin.f32 %v1153, 0.0
        %v1155 = vmul.f32 %v1154, 1.442695
        %v1156 = vpow.pop %v1155
        %v1157 = vsub.f32 %v1156, 1.0
        %vm1158 = vcmp.gt.f32.partialorder %v1153, 0.0
        %v1159 = vsel %vm1158, %v1153, %v1157
        %s1160 = sld [smem:[#allocation10 + $0x36]]
        %v1161 = vstv %s1160
        %v1162 = vmul.f32 %v1161, %v1159
        %v1163 = vadd.f32 %v1147, %v1162
        %s1164 = sld [smem:[#allocation7 + $0x37]]
        %v1165 = vstv %s1164
        %v1166 = vmul.f32 %v280, %v1165
        %s1167 = sld [smem:[#allocation8 + $0x37]]
        %v1168 = vstv %s1167
        %v1169 = vadd.f32 %v1166, %v1168
        %v1170 = vmin.f32 %v1169, 0.0
        %v1171 = vmul.f32 %v1170, 1.442695
        %v1172 = vpow.pop %v1171
        %v1173 = vsub.f32 %v1172, 1.0
        %vm1174 = vcmp.gt.f32.partialorder %v1169, 0.0
        %v1175 = vsel %vm1174, %v1169, %v1173
        %s1176 = sld [smem:[#allocation10 + $0x37]]
        %v1177 = vstv %s1176
        %v1178 = vmul.f32 %v1177, %v1175
        %v1179 = vadd.f32 %v1163, %v1178
        %s1180 = sld [smem:[#allocation7 + $0x38]]
        %v1181 = vstv %s1180
        %v1182 = vmul.f32 %v280, %v1181
        %s1183 = sld [smem:[#allocation8 + $0x38]]
        %v1184 = vstv %s1183
        %v1185 = vadd.f32 %v1182, %v1184
        %v1186 = vmin.f32 %v1185, 0.0
        %v1187 = vmul.f32 %v1186, 1.442695
        %v1188 = vpow.pop %v1187
        %v1189 = vsub.f32 %v1188, 1.0
        %vm1190 = vcmp.gt.f32.partialorder %v1185, 0.0
        %v1191 = vsel %vm1190, %v1185, %v1189
        %s1192 = sld [smem:[#allocation10 + $0x38]]
        %v1193 = vstv %s1192
        %v1194 = vmul.f32 %v1193, %v1191
        %v1195 = vadd.f32 %v1179, %v1194
        %s1196 = sld [smem:[#allocation7 + $0x39]]
        %v1197 = vstv %s1196
        %v1198 = vmul.f32 %v280, %v1197
        %s1199 = sld [smem:[#allocation8 + $0x39]]
        %v1200 = vstv %s1199
        %v1201 = vadd.f32 %v1198, %v1200
        %v1202 = vmin.f32 %v1201, 0.0
        %v1203 = vmul.f32 %v1202, 1.442695
        %v1204 = vpow.pop %v1203
        %v1205 = vsub.f32 %v1204, 1.0
        %vm1206 = vcmp.gt.f32.partialorder %v1201, 0.0
        %v1207 = vsel %vm1206, %v1201, %v1205
        %s1208 = sld [smem:[#allocation10 + $0x39]]
        %v1209 = vstv %s1208
        %v1210 = vmul.f32 %v1209, %v1207
        %v1211 = vadd.f32 %v1195, %v1210
        %s1212 = sld [smem:[#allocation7 + $0x3a]]
        %v1213 = vstv %s1212
        %v1214 = vmul.f32 %v280, %v1213
        %s1215 = sld [smem:[#allocation8 + $0x3a]]
        %v1216 = vstv %s1215
        %v1217 = vadd.f32 %v1214, %v1216
        %v1218 = vmin.f32 %v1217, 0.0
        %v1219 = vmul.f32 %v1218, 1.442695
        %v1220 = vpow.pop %v1219
        %v1221 = vsub.f32 %v1220, 1.0
        %vm1222 = vcmp.gt.f32.partialorder %v1217, 0.0
        %v1223 = vsel %vm1222, %v1217, %v1221
        %s1224 = sld [smem:[#allocation10 + $0x3a]]
        %v1225 = vstv %s1224
        %v1226 = vmul.f32 %v1225, %v1223
        %v1227 = vadd.f32 %v1211, %v1226
        %s1228 = sld [smem:[#allocation7 + $0x3b]]
        %v1229 = vstv %s1228
        %v1230 = vmul.f32 %v280, %v1229
        %s1231 = sld [smem:[#allocation8 + $0x3b]]
        %v1232 = vstv %s1231
        %v1233 = vadd.f32 %v1230, %v1232
        %v1234 = vmin.f32 %v1233, 0.0
        %v1235 = vmul.f32 %v1234, 1.442695
        %v1236 = vpow.pop %v1235
        %v1237 = vsub.f32 %v1236, 1.0
        %vm1238 = vcmp.gt.f32.partialorder %v1233, 0.0
        %v1239 = vsel %vm1238, %v1233, %v1237
        %s1240 = sld [smem:[#allocation10 + $0x3b]]
        %v1241 = vstv %s1240
        %v1242 = vmul.f32 %v1241, %v1239
        %v1243 = vadd.f32 %v1227, %v1242
        %s1244 = sld [smem:[#allocation7 + $0x3c]]
        %v1245 = vstv %s1244
        %v1246 = vmul.f32 %v280, %v1245
        %s1247 = sld [smem:[#allocation8 + $0x3c]]
        %v1248 = vstv %s1247
        %v1249 = vadd.f32 %v1246, %v1248
        %v1250 = vmin.f32 %v1249, 0.0
        %v1251 = vmul.f32 %v1250, 1.442695
        %v1252 = vpow.pop %v1251
        %v1253 = vsub.f32 %v1252, 1.0
        %vm1254 = vcmp.gt.f32.partialorder %v1249, 0.0
        %v1255 = vsel %vm1254, %v1249, %v1253
        %s1256 = sld [smem:[#allocation10 + $0x3c]]
        %v1257 = vstv %s1256
        %v1258 = vmul.f32 %v1257, %v1255
        %v1259 = vadd.f32 %v1243, %v1258
        %s1260 = sld [smem:[#allocation7 + $0x3d]]
        %v1261 = vstv %s1260
        %v1262 = vmul.f32 %v280, %v1261
        %s1263 = sld [smem:[#allocation8 + $0x3d]]
        %v1264 = vstv %s1263
        %v1265 = vadd.f32 %v1262, %v1264
        %v1266 = vmin.f32 %v1265, 0.0
        %v1267 = vmul.f32 %v1266, 1.442695
        %v1268 = vpow.pop %v1267
        %v1269 = vsub.f32 %v1268, 1.0
        %vm1270 = vcmp.gt.f32.partialorder %v1265, 0.0
        %v1271 = vsel %vm1270, %v1265, %v1269
        %s1272 = sld [smem:[#allocation10 + $0x3d]]
        %v1273 = vstv %s1272
        %v1274 = vmul.f32 %v1273, %v1271
        %v1275 = vadd.f32 %v1259, %v1274
        %s1276 = sld [smem:[#allocation7 + $0x3e]]
        %v1277 = vstv %s1276
        %v1278 = vmul.f32 %v280, %v1277
        %s1279 = sld [smem:[#allocation8 + $0x3e]]
        %v1280 = vstv %s1279
        %v1281 = vadd.f32 %v1278, %v1280
        %v1282 = vmin.f32 %v1281, 0.0
        %v1283 = vmul.f32 %v1282, 1.442695
        %v1284 = vpow.pop %v1283
        %v1285 = vsub.f32 %v1284, 1.0
        %vm1286 = vcmp.gt.f32.partialorder %v1281, 0.0
        %v1287 = vsel %vm1286, %v1281, %v1285
        %s1288 = sld [smem:[#allocation10 + $0x3e]]
        %v1289 = vstv %s1288
        %v1290 = vmul.f32 %v1289, %v1287
        %v1291 = vadd.f32 %v1275, %v1290
        %s1292 = sld [smem:[#allocation7 + $0x3f]]
        %v1293 = vstv %s1292
        %v1294 = vmul.f32 %v280, %v1293
        %s1295 = sld [smem:[#allocation8 + $0x3f]]
        %v1296 = vstv %s1295
        %v1297 = vadd.f32 %v1294, %v1296
        %v1298 = vmin.f32 %v1297, 0.0
        %v1299 = vmul.f32 %v1298, 1.442695
        %v1300 = vpow.pop %v1299
        %v1301 = vsub.f32 %v1300, 1.0
        %vm1302 = vcmp.gt.f32.partialorder %v1297, 0.0
        %v1303 = vsel %vm1302, %v1297, %v1301
        %s1304 = sld [smem:[#allocation10 + $0x3f]]
        %v1305 = vstv %s1304
        %v1306 = vmul.f32 %v1305, %v1303
        %v1307 = vadd.f32 %v1291, %v1306
        %1308 = vst [vmem:[%s279] sm:$0xff] %v1307
        %s1309 = sand.u32 %s143, 1
        %s1310 = scalar_lea.sflag [#allocation5], %s1309
        %s1311 = sand.u32 %s143, 1
        %s1312 = smul.addr %s1311, 8
        %s1313 = scalar_lea.vmem [#allocation11], %s1312
        // Predicated region
        $region57: #{tpu_custom_call.1} parent=39 // pred_check
          %p1314 = pneg %p153
        $region58: #{tpu_custom_call.1} parent=39 // pred_check_branch
          %1316 = sbr.rel (%p1314) target = $region60
        $region59: #{tpu_custom_call.1} parent=39 // pred_region
          %s1318 = ssub.s32 128, 128
          %1319 = vsyncadd %s1310, %s1318
          %s1320 = smul.addr %s25, 128
          %s1321 = scalar_lea.hbm %s5, %s1320
          %s1323 = sshll.u32 %s1313, 4
          %s1324 = int_to_ptr.vmem [resolvable:$true] %s1323
          %1326 = dma.vmem_to_hbm [thread:$0]  %s1324, 128, %s1321, %s1310
        $region60: #{tpu_custom_call.1} parent=39 // pred_fallthru
          _
      $region40: #{tpu_custom_call.1} parent=5 // pred_fallthru
        _
      %p1327 = scmp.le.s32.totalorder 2, %s20
      // Predicated region
      $region61: #{tpu_custom_call.1} parent=5 // pred_check
        %p1328 = pneg %p1327
      $region62: #{tpu_custom_call.1} parent=5 // pred_check_branch
        %1330 = sbr.rel (%p1328) target = $region64
      $region63: #{tpu_custom_call.1} parent=5 // pred_region
        %s1331 = ssub.s32 %s20, 2
        // Predicated region
        $region65: #{tpu_custom_call.1} parent=63 // pred_check
          %p1332 = pneg %p159
        $region66: #{tpu_custom_call.1} parent=63 // pred_check_branch
          %1334 = sbr.rel (%p1332) target = $region68
        $region67: #{tpu_custom_call.1} parent=63 // pred_region
          %s1335 = sand.u32 %s144, 1
          %s1336 = scalar_lea.sflag [#allocation5], %s1335
          %s1337 = sand.u32 %s144, 1
          %s1338 = smul.addr %s1337, 8
          %s1339 = scalar_lea.vmem [#allocation11], %s1338
          %1340 = dma.done %s1336, 128
        $region68: #{tpu_custom_call.1} parent=63 // pred_fallthru
          _
      $region64: #{tpu_custom_call.1} parent=5 // pred_fallthru
        _
    $region6: #{tpu_custom_call.1} parent=1 // loop_footer
      %s24 = sadd.s32 1, %s20
    $region7: #{tpu_custom_call.1} parent=1 // loop_footer_branch
      %19 = sbr.rel target = $region3
    $region8: #{tpu_custom_call.1} parent=1 // loop_exit
      _
    %1341 = vsyncpa [#allocation4], 1
    %s1342 = scalar_lea.sflag [#allocation4], 1
    %1343 = vsyncpa %s1342, 1
    %1344 = vsyncpa [#allocation5], 1
    %s1345 = scalar_lea.sflag [#allocation5], 1
    %1346 = vsyncpa %s1345, 1
    %1347 = vsyncpa [#allocation6], 1
    %s1348 = scalar_lea.sflag [#allocation6], 1
    %1349 = vsyncpa %s1348, 1
    %1350 = vsyncpa [#allocation9], 1

</llo_original>
